<compile_context>
chip_gen: v7x
topology: tpu7x:2x2x1
jax: 0.10.0
libtpu: 0.0.40
codegen_flags: <defaults>
</compile_context>

<pallas_src>
import jax
import jax.numpy as jnp
from jax import lax
from jax.experimental import pallas as pl
from jax.experimental.pallas import tpu as pltpu


_VMEM_SPEC = pl.BlockSpec(memory_space=pltpu.MemorySpace.VMEM)


# ---------------------------------------------------------------------------
# Fused forward kernel
# ---------------------------------------------------------------------------

def _make_net_kernel(heads, c1, c2):
    """Builds the fused Net forward kernel; heads/c1/c2 are static Python ints."""

    def mx_layer(inp, w_ext_ref, alt_ref, adj_bias, c, out_ref):
        # inp:       [N, in_dim]    layer input (value)
        # w_ext_ref: [in_dim, H*c + H]   W with att_r folded in as the last H columns
        # alt_ref:   [H, in_dim]    A_l^T (att_l folded through W, row-oriented)
        # adj_bias:  [N, N]         0 where edge j->i exists, -1e30 otherwise
        # out_ref:   [N, H*c]       lane-dense per-head aggregation scratch
        hc = heads * c
        xw = jnp.dot(inp, w_ext_ref[...], preferred_element_type=jnp.float32)   # [N, H*c+H]
        # a_src_t[h, j] = <x_j W_h, att_l[h]>  -- all heads, already row-oriented
        a_src_t = lax.dot_general(alt_ref[...], inp, (((1,), (1,)), ((), ())),
                                  preferred_element_type=jnp.float32)           # [H, N]
        for h in range(heads):
            xh = xw[:, h * c:(h + 1) * c]                                        # [N, c]
            # MX logits[i, j] = <x_i W_h, x_j W_h>
            logits = lax.dot_general(xh, xh, (((1,), (1,)), ((), ())),
                                     preferred_element_type=jnp.float32)         # [N, N]
            sig = 0.5 * jnp.tanh(0.5 * logits) + 0.5                             # sigmoid (EUP tanh)
            a_dst = xw[:, hc + h:hc + h + 1]                                     # [N, 1]
            alpha = (a_dst + a_src_t[h:h + 1, :]) * sig                          # [N, N]
            alpha = jnp.where(alpha >= 0.0, alpha, 0.2 * alpha)                  # leaky_relu(0.2)
            # masked softmax over incoming edges: additive 0/-1e30 bias, no row-max needed
            # (|alpha| is O(1) here and every row has a self-loop -> finite entry).
            ex = jnp.exp(alpha + adj_bias)
            attn = ex / jnp.sum(ex, axis=-1, keepdims=True)                      # [N, N]
            # lane-dense write of this head's aggregation into the layer scratch
            out_ref[:, h * c:(h + 1) * c] = jnp.dot(
                attn, xh, preferred_element_type=jnp.float32)

    def kernel(x_ref, adjb_ref,
               w1_ref, al1t_ref, b1_ref,
               w2_ref, al2t_ref, b2_ref, avg_ref,
               o_ref, h1_ref, h2_ref):
        adj_bias = adjb_ref[...]                                                 # [N, N]

        # ---- conv1: SuperGAT(heads, concat=True) + bias + ELU ------------------
        mx_layer(x_ref[...], w1_ref, al1t_ref, adj_bias, c1, h1_ref)
        h1 = h1_ref[...] + b1_ref[...]                                           # [N, H*c1]
        # ELU(alpha=1); clamp exp argument so the unselected branch cannot overflow
        h1 = jnp.where(h1 > 0.0, h1, jnp.exp(jnp.minimum(h1, 0.0)) - 1.0)

        # ---- conv2: SuperGAT(heads, concat=False -> head mean) + bias + log_softmax
        mx_layer(h1, w2_ref, al2t_ref, adj_bias, c2, h2_ref)
        logits = jnp.dot(h2_ref[...], avg_ref[...],
                         preferred_element_type=jnp.float32) + b2_ref[...]       # [N, c2]
        s = logits - jnp.max(logits, axis=-1, keepdims=True)
        o_ref[...] = s - jnp.log(jnp.sum(jnp.exp(s), axis=-1, keepdims=True))

    return kernel


# ---------------------------------------------------------------------------
# Wrapper: parameter folding + single fused pallas_call (eval mode)
# ---------------------------------------------------------------------------

def _pack_layer(params, heads, out_ch):
    """Fold att_l / att_r through W (wrapper-side, mathematically exact)."""
    W, att_l, att_r = params["W"], params["att_l"], params["att_r"]
    in_ch = W.shape[0]
    Wh = W.reshape(in_ch, heads, out_ch)
    a_l = jnp.einsum("khc,hc->kh", Wh, att_l)            # [in, H]  (source term)
    a_r = jnp.einsum("khc,hc->kh", Wh, att_r)            # [in, H]  (target term)
    w_ext = jnp.concatenate([W, a_r], axis=1)            # a_dst falls out of the projection
    al_t = jnp.transpose(a_l)                            # [H, in]  row-oriented a_src weights
    bias = params["bias"].reshape(1, -1)
    return w_ext, al_t, bias


def net_forward(x, adj, p1, p2, *, heads, hidden, num_classes):
    n = x.shape[0]
    # additive attention-mask bias, built once in the wrapper
    adj_bias = jnp.where(adj > 0.0, 0.0, -1e30).astype(jnp.float32)
    w1_ext, al1_t, b1 = _pack_layer(p1, heads, hidden)
    w2_ext, al2_t, b2 = _pack_layer(p2, heads, num_classes)
    # constant block-averaging matrix for the conv2 head-mean (1/H folded in)
    avg = jnp.tile(jnp.eye(num_classes, dtype=jnp.float32), (heads, 1)) / float(heads)

    kernel = _make_net_kernel(heads, hidden, num_classes)
    logp = pl.pallas_call(
        kernel,
        out_shape=jax.ShapeDtypeStruct((n, num_classes), jnp.float32),
        in_specs=[_VMEM_SPEC] * 9,
        out_specs=_VMEM_SPEC,
        scratch_shapes=[
            pltpu.VMEM((n, heads * hidden), jnp.float32),        # conv1 lane-dense output
            pltpu.VMEM((n, heads * num_classes), jnp.float32),   # conv2 lane-dense output
        ],
    )(x, adj_bias, w1_ext, al1_t, b1, w2_ext, al2_t, b2, avg)
    # TODO(synk): get_attention_loss / negative-edge sampling is training-only -> 0 in eval.
    att_loss = jnp.float32(0.0)
    return logp, att_loss


# ---------------------------------------------------------------------------
# Deterministic synthetic parameters / graph (shapes follow SuperGATConv.__init__)
# ---------------------------------------------------------------------------

def init_supergat_params(key, in_ch, out_ch, heads, concat):
    k_w, k_l, k_r = jax.random.split(key, 3)
    fan_sum = in_ch + heads * out_ch
    limit = (6.0 / fan_sum) ** 0.5
    W = jax.random.uniform(k_w, (in_ch, heads * out_ch), jnp.float32, -limit, limit)
    att_l = 0.1 * jax.random.normal(k_l, (heads, out_ch), jnp.float32)
    att_r = 0.1 * jax.random.normal(k_r, (heads, out_ch), jnp.float32)
    bias_dim = heads * out_ch if concat else out_ch
    bias = jnp.zeros((bias_dim,), jnp.float32)
    return {"W": W, "att_l": att_l, "att_r": att_r, "bias": bias}


def build_adjacency(edge_index, n):
    adj = jnp.zeros((n, n), jnp.float32)
    # adj[i, j] = 1 iff edge j -> i  (edge_index[0] = source, edge_index[1] = target)
    adj = adj.at[edge_index[1], edge_index[0]].set(1.0)
    # add_self_loops=True in SuperGATConv
    idx = jnp.arange(n)
    adj = adj.at[idx, idx].set(1.0)
    return adj


# ---------------------------------------------------------------------------
# Main
# ---------------------------------------------------------------------------

if __name__ == "__main__":
    N = 16            # number of nodes
    F_IN = 16         # dataset.num_features
    NUM_CLASSES = 4   # dataset.num_classes
    HEADS = 8
    HIDDEN = 8

    key = jax.random.PRNGKey(0)
    k_x, k_p1, k_p2 = jax.random.split(key, 3)

    # Node features
    x = jax.random.normal(k_x, (N, F_IN), jnp.float32)

    # Undirected ring graph + chords as edge_index [2, E]
    src = jnp.arange(N)
    ring_dst = (src + 1) % N
    chord_dst = (src + 5) % N
    s = jnp.concatenate([src, ring_dst, src, chord_dst])
    d = jnp.concatenate([ring_dst, src, chord_dst, src])
    edge_index = jnp.stack([s, d])                      # [2, 4N], symmetric (is_undirected)
    adj = build_adjacency(edge_index, N)

    # conv1: SuperGATConv(F_IN, 8, heads=8, concat=True)
    p1 = init_supergat_params(k_p1, F_IN, HIDDEN, HEADS, concat=True)
    # conv2: SuperGATConv(64, NUM_CLASSES, heads=8, concat=False)
    p2 = init_supergat_params(k_p2, HEADS * HIDDEN, NUM_CLASSES, HEADS, concat=False)

    logp, att_loss = net_forward(x, adj, p1, p2,
                                 heads=HEADS, hidden=HIDDEN, num_classes=NUM_CLASSES)
    logp = jax.block_until_ready(logp)
    att_loss = jax.block_until_ready(att_loss)

    assert logp.shape == (N, NUM_CLASSES)
    # rows of log_softmax must exp-sum to 1 (final log_softmax is exact)
    assert bool(jnp.allclose(jnp.sum(jnp.exp(logp), axis=-1), 1.0, atol=1e-4))
    print("KERNEL_OK")
</pallas_src>

<mosaic_0001>
module attributes {stable_mosaic.version = 11 : i64} {
  func.func @kernel(%arg0: memref<16x16xf32, #tpu.memory_space<vmem>>, %arg1: memref<16x16xf32, #tpu.memory_space<vmem>>, %arg2: memref<16x72xf32, #tpu.memory_space<vmem>>, %arg3: memref<8x16xf32, #tpu.memory_space<vmem>>, %arg4: memref<1x64xf32, #tpu.memory_space<vmem>>, %arg5: memref<64x40xf32, #tpu.memory_space<vmem>>, %arg6: memref<8x64xf32, #tpu.memory_space<vmem>>, %arg7: memref<1x4xf32, #tpu.memory_space<vmem>>, %arg8: memref<32x4xf32, #tpu.memory_space<vmem>>, %arg9: memref<16x4xf32, #tpu.memory_space<vmem>>, %arg10: memref<16x64xf32, #tpu.memory_space<vmem>>, %arg11: memref<16x32xf32, #tpu.memory_space<vmem>>) attributes {dimension_semantics = [], scalar_prefetch = 0 : i64, scratch_operands = 2 : i64, tpu.core_type = #tpu.core_type<tc>} {
    %c0 = arith.constant 0 : index
    %c0_0 = arith.constant 0 : index
    %0 = vector.load %arg1[%c0, %c0_0] : memref<16x16xf32, #tpu.memory_space<vmem>>, vector<16x16xf32>
    %c0_1 = arith.constant 0 : index
    %c0_2 = arith.constant 0 : index
    %1 = vector.load %arg0[%c0_1, %c0_2] : memref<16x16xf32, #tpu.memory_space<vmem>>, vector<16x16xf32>
    %c0_3 = arith.constant 0 : index
    %c0_4 = arith.constant 0 : index
    %2 = vector.load %arg2[%c0_3, %c0_4] : memref<16x72xf32, #tpu.memory_space<vmem>>, vector<16x72xf32>
    %cst = arith.constant dense<0.000000e+00> : vector<16x72xf32>
    %3 = tpu.matmul %1, %2, %cst {dimension_numbers = #tpu.dot_dimension_numbers<[1], [0], [0], [1], [0, 0, 1, 1], [], []>} : vector<16x16xf32>, vector<16x72xf32>, vector<16x72xf32> -> vector<16x72xf32>
    %c0_5 = arith.constant 0 : index
    %c0_6 = arith.constant 0 : index
    %4 = vector.load %arg3[%c0_5, %c0_6] : memref<8x16xf32, #tpu.memory_space<vmem>>, vector<8x16xf32>
    %cst_7 = arith.constant dense<0.000000e+00> : vector<8x16xf32>
    %5 = tpu.matmul %4, %1, %cst_7 {dimension_numbers = #tpu.dot_dimension_numbers<[1], [1], [0], [0], [0, 0, 1, 0], [], []>} : vector<8x16xf32>, vector<16x16xf32>, vector<8x16xf32> -> vector<8x16xf32>
    %6 = vector.extract_strided_slice %3 {offsets = [0, 0], sizes = [16, 8], strides = [1, 1]} : vector<16x72xf32> to vector<16x8xf32>
    %cst_8 = arith.constant dense<0.000000e+00> : vector<16x16xf32>
    %7 = tpu.matmul %6, %6, %cst_8 {dimension_numbers = #tpu.dot_dimension_numbers<[1], [1], [0], [0], [0, 0, 1, 0], [], []>} : vector<16x8xf32>, vector<16x8xf32>, vector<16x16xf32> -> vector<16x16xf32>
    %cst_9 = arith.constant 5.000000e-01 : f32
    %8 = vector.broadcast %cst_9 : f32 to vector<16x16xf32>
    %9 = arith.mulf %8, %7 : vector<16x16xf32>
    %10 = math.tanh %9 : vector<16x16xf32>
    %cst_10 = arith.constant 5.000000e-01 : f32
    %11 = vector.broadcast %cst_10 : f32 to vector<16x16xf32>
    %12 = arith.mulf %11, %10 : vector<16x16xf32>
    %cst_11 = arith.constant 5.000000e-01 : f32
    %13 = vector.broadcast %cst_11 : f32 to vector<16x16xf32>
    %14 = arith.addf %12, %13 : vector<16x16xf32>
    %15 = vector.extract_strided_slice %3 {offsets = [0, 64], sizes = [16, 1], strides = [1, 1]} : vector<16x72xf32> to vector<16x1xf32>
    %16 = vector.extract_strided_slice %5 {offsets = [0, 0], sizes = [1, 16], strides = [1, 1]} : vector<8x16xf32> to vector<1x16xf32>
    %17 = vector.broadcast %15 : vector<16x1xf32> to vector<16x16xf32>
    %18 = vector.broadcast %16 : vector<1x16xf32> to vector<16x16xf32>
    %19 = arith.addf %17, %18 : vector<16x16xf32>
    %20 = arith.mulf %19, %14 : vector<16x16xf32>
    %cst_12 = arith.constant 0.000000e+00 : f32
    %21 = vector.broadcast %cst_12 : f32 to vector<16x16xf32>
    %22 = arith.cmpf oge, %20, %21 : vector<16x16xf32>
    %cst_13 = arith.constant 2.000000e-01 : f32
    %23 = vector.broadcast %cst_13 : f32 to vector<16x16xf32>
    %24 = arith.mulf %23, %20 : vector<16x16xf32>
    %25 = arith.select %22, %20, %24 : vector<16x16xi1>, vector<16x16xf32>
    %26 = arith.addf %25, %0 : vector<16x16xf32>
    %27 = math.exp %26 : vector<16x16xf32>
    %cst_14 = arith.constant dense<0.000000e+00> : vector<16xf32>
    %28 = vector.multi_reduction <add>, %27, %cst_14 [1] : vector<16x16xf32> to vector<16xf32>
    %29 = vector.shape_cast %28 : vector<16xf32> to vector<16x1xf32>
    %30 = vector.broadcast %29 : vector<16x1xf32> to vector<16x16xf32>
    %31 = arith.divf %27, %30 : vector<16x16xf32>
    %cst_15 = arith.constant dense<0.000000e+00> : vector<16x8xf32>
    %32 = tpu.matmul %31, %6, %cst_15 {dimension_numbers = #tpu.dot_dimension_numbers<[1], [0], [0], [1], [0, 0, 1, 1], [], []>} : vector<16x16xf32>, vector<16x8xf32>, vector<16x8xf32> -> vector<16x8xf32>
    %c0_16 = arith.constant 0 : index
    %c0_17 = arith.constant 0 : index
    %33 = vector.load %arg10[%c0_16, %c0_17] : memref<16x64xf32, #tpu.memory_space<vmem>>, vector<16x8xf32>
    tpu.vector_store %arg10[%c0_16, %c0_17], %32 {strides = array<i32>} : memref<16x64xf32, #tpu.memory_space<vmem>>, vector<16x8xf32>,
    %34 = vector.extract_strided_slice %3 {offsets = [0, 8], sizes = [16, 8], strides = [1, 1]} : vector<16x72xf32> to vector<16x8xf32>
    %cst_18 = arith.constant dense<0.000000e+00> : vector<16x16xf32>
    %35 = tpu.matmul %34, %34, %cst_18 {dimension_numbers = #tpu.dot_dimension_numbers<[1], [1], [0], [0], [0, 0, 1, 0], [], []>} : vector<16x8xf32>, vector<16x8xf32>, vector<16x16xf32> -> vector<16x16xf32>
    %cst_19 = arith.constant 5.000000e-01 : f32
    %36 = vector.broadcast %cst_19 : f32 to vector<16x16xf32>
    %37 = arith.mulf %36, %35 : vector<16x16xf32>
    %38 = math.tanh %37 : vector<16x16xf32>
    %cst_20 = arith.constant 5.000000e-01 : f32
    %39 = vector.broadcast %cst_20 : f32 to vector<16x16xf32>
    %40 = arith.mulf %39, %38 : vector<16x16xf32>
    %cst_21 = arith.constant 5.000000e-01 : f32
    %41 = vector.broadcast %cst_21 : f32 to vector<16x16xf32>
    %42 = arith.addf %40, %41 : vector<16x16xf32>
    %43 = vector.extract_strided_slice %3 {offsets = [0, 65], sizes = [16, 1], strides = [1, 1]} : vector<16x72xf32> to vector<16x1xf32>
    %44 = vector.extract_strided_slice %5 {offsets = [1, 0], sizes = [1, 16], strides = [1, 1]} : vector<8x16xf32> to vector<1x16xf32>
    %45 = vector.broadcast %43 : vector<16x1xf32> to vector<16x16xf32>
    %46 = vector.broadcast %44 : vector<1x16xf32> to vector<16x16xf32>
    %47 = arith.addf %45, %46 : vector<16x16xf32>
    %48 = arith.mulf %47, %42 : vector<16x16xf32>
    %cst_22 = arith.constant 0.000000e+00 : f32
    %49 = vector.broadcast %cst_22 : f32 to vector<16x16xf32>
    %50 = arith.cmpf oge, %48, %49 : vector<16x16xf32>
    %cst_23 = arith.constant 2.000000e-01 : f32
    %51 = vector.broadcast %cst_23 : f32 to vector<16x16xf32>
    %52 = arith.mulf %51, %48 : vector<16x16xf32>
    %53 = arith.select %50, %48, %52 : vector<16x16xi1>, vector<16x16xf32>
    %54 = arith.addf %53, %0 : vector<16x16xf32>
    %55 = math.exp %54 : vector<16x16xf32>
    %cst_24 = arith.constant dense<0.000000e+00> : vector<16xf32>
    %56 = vector.multi_reduction <add>, %55, %cst_24 [1] : vector<16x16xf32> to vector<16xf32>
    %57 = vector.shape_cast %56 : vector<16xf32> to vector<16x1xf32>
    %58 = vector.broadcast %57 : vector<16x1xf32> to vector<16x16xf32>
    %59 = arith.divf %55, %58 : vector<16x16xf32>
    %cst_25 = arith.constant dense<0.000000e+00> : vector<16x8xf32>
    %60 = tpu.matmul %59, %34, %cst_25 {dimension_numbers = #tpu.dot_dimension_numbers<[1], [0], [0], [1], [0, 0, 1, 1], [], []>} : vector<16x16xf32>, vector<16x8xf32>, vector<16x8xf32> -> vector<16x8xf32>
    %c0_26 = arith.constant 0 : index
    %c8 = arith.constant 8 : index
    %61 = vector.load %arg10[%c0_26, %c8] : memref<16x64xf32, #tpu.memory_space<vmem>>, vector<16x8xf32>
    tpu.vector_store %arg10[%c0_26, %c8], %60 {strides = array<i32>} : memref<16x64xf32, #tpu.memory_space<vmem>>, vector<16x8xf32>,
    %62 = vector.extract_strided_slice %3 {offsets = [0, 16], sizes = [16, 8], strides = [1, 1]} : vector<16x72xf32> to vector<16x8xf32>
    %cst_27 = arith.constant dense<0.000000e+00> : vector<16x16xf32>
    %63 = tpu.matmul %62, %62, %cst_27 {dimension_numbers = #tpu.dot_dimension_numbers<[1], [1], [0], [0], [0, 0, 1, 0], [], []>} : vector<16x8xf32>, vector<16x8xf32>, vector<16x16xf32> -> vector<16x16xf32>
    %cst_28 = arith.constant 5.000000e-01 : f32
    %64 = vector.broadcast %cst_28 : f32 to vector<16x16xf32>
    %65 = arith.mulf %64, %63 : vector<16x16xf32>
    %66 = math.tanh %65 : vector<16x16xf32>
    %cst_29 = arith.constant 5.000000e-01 : f32
    %67 = vector.broadcast %cst_29 : f32 to vector<16x16xf32>
    %68 = arith.mulf %67, %66 : vector<16x16xf32>
    %cst_30 = arith.constant 5.000000e-01 : f32
    %69 = vector.broadcast %cst_30 : f32 to vector<16x16xf32>
    %70 = arith.addf %68, %69 : vector<16x16xf32>
    %71 = vector.extract_strided_slice %3 {offsets = [0, 66], sizes = [16, 1], strides = [1, 1]} : vector<16x72xf32> to vector<16x1xf32>
    %72 = vector.extract_strided_slice %5 {offsets = [2, 0], sizes = [1, 16], strides = [1, 1]} : vector<8x16xf32> to vector<1x16xf32>
    %73 = vector.broadcast %71 : vector<16x1xf32> to vector<16x16xf32>
    %74 = vector.broadcast %72 : vector<1x16xf32> to vector<16x16xf32>
    %75 = arith.addf %73, %74 : vector<16x16xf32>
    %76 = arith.mulf %75, %70 : vector<16x16xf32>
    %cst_31 = arith.constant 0.000000e+00 : f32
    %77 = vector.broadcast %cst_31 : f32 to vector<16x16xf32>
    %78 = arith.cmpf oge, %76, %77 : vector<16x16xf32>
    %cst_32 = arith.constant 2.000000e-01 : f32
    %79 = vector.broadcast %cst_32 : f32 to vector<16x16xf32>
    %80 = arith.mulf %79, %76 : vector<16x16xf32>
    %81 = arith.select %78, %76, %80 : vector<16x16xi1>, vector<16x16xf32>
    %82 = arith.addf %81, %0 : vector<16x16xf32>
    %83 = math.exp %82 : vector<16x16xf32>
    %cst_33 = arith.constant dense<0.000000e+00> : vector<16xf32>
    %84 = vector.multi_reduction <add>, %83, %cst_33 [1] : vector<16x16xf32> to vector<16xf32>
    %85 = vector.shape_cast %84 : vector<16xf32> to vector<16x1xf32>
    %86 = vector.broadcast %85 : vector<16x1xf32> to vector<16x16xf32>
    %87 = arith.divf %83, %86 : vector<16x16xf32>
    %cst_34 = arith.constant dense<0.000000e+00> : vector<16x8xf32>
    %88 = tpu.matmul %87, %62, %cst_34 {dimension_numbers = #tpu.dot_dimension_numbers<[1], [0], [0], [1], [0, 0, 1, 1], [], []>} : vector<16x16xf32>, vector<16x8xf32>, vector<16x8xf32> -> vector<16x8xf32>
    %c0_35 = arith.constant 0 : index
    %c16 = arith.constant 16 : index
    %89 = vector.load %arg10[%c0_35, %c16] : memref<16x64xf32, #tpu.memory_space<vmem>>, vector<16x8xf32>
    tpu.vector_store %arg10[%c0_35, %c16], %88 {strides = array<i32>} : memref<16x64xf32, #tpu.memory_space<vmem>>, vector<16x8xf32>,
    %90 = vector.extract_strided_slice %3 {offsets = [0, 24], sizes = [16, 8], strides = [1, 1]} : vector<16x72xf32> to vector<16x8xf32>
    %cst_36 = arith.constant dense<0.000000e+00> : vector<16x16xf32>
    %91 = tpu.matmul %90, %90, %cst_36 {dimension_numbers = #tpu.dot_dimension_numbers<[1], [1], [0], [0], [0, 0, 1, 0], [], []>} : vector<16x8xf32>, vector<16x8xf32>, vector<16x16xf32> -> vector<16x16xf32>
    %cst_37 = arith.constant 5.000000e-01 : f32
    %92 = vector.broadcast %cst_37 : f32 to vector<16x16xf32>
    %93 = arith.mulf %92, %91 : vector<16x16xf32>
    %94 = math.tanh %93 : vector<16x16xf32>
    %cst_38 = arith.constant 5.000000e-01 : f32
    %95 = vector.broadcast %cst_38 : f32 to vector<16x16xf32>
    %96 = arith.mulf %95, %94 : vector<16x16xf32>
    %cst_39 = arith.constant 5.000000e-01 : f32
    %97 = vector.broadcast %cst_39 : f32 to vector<16x16xf32>
    %98 = arith.addf %96, %97 : vector<16x16xf32>
    %99 = vector.extract_strided_slice %3 {offsets = [0, 67], sizes = [16, 1], strides = [1, 1]} : vector<16x72xf32> to vector<16x1xf32>
    %100 = vector.extract_strided_slice %5 {offsets = [3, 0], sizes = [1, 16], strides = [1, 1]} : vector<8x16xf32> to vector<1x16xf32>
    %101 = vector.broadcast %99 : vector<16x1xf32> to vector<16x16xf32>
    %102 = vector.broadcast %100 : vector<1x16xf32> to vector<16x16xf32>
    %103 = arith.addf %101, %102 : vector<16x16xf32>
    %104 = arith.mulf %103, %98 : vector<16x16xf32>
    %cst_40 = arith.constant 0.000000e+00 : f32
    %105 = vector.broadcast %cst_40 : f32 to vector<16x16xf32>
    %106 = arith.cmpf oge, %104, %105 : vector<16x16xf32>
    %cst_41 = arith.constant 2.000000e-01 : f32
    %107 = vector.broadcast %cst_41 : f32 to vector<16x16xf32>
    %108 = arith.mulf %107, %104 : vector<16x16xf32>
    %109 = arith.select %106, %104, %108 : vector<16x16xi1>, vector<16x16xf32>
    %110 = arith.addf %109, %0 : vector<16x16xf32>
    %111 = math.exp %110 : vector<16x16xf32>
    %cst_42 = arith.constant dense<0.000000e+00> : vector<16xf32>
    %112 = vector.multi_reduction <add>, %111, %cst_42 [1] : vector<16x16xf32> to vector<16xf32>
    %113 = vector.shape_cast %112 : vector<16xf32> to vector<16x1xf32>
    %114 = vector.broadcast %113 : vector<16x1xf32> to vector<16x16xf32>
    %115 = arith.divf %111, %114 : vector<16x16xf32>
    %cst_43 = arith.constant dense<0.000000e+00> : vector<16x8xf32>
    %116 = tpu.matmul %115, %90, %cst_43 {dimension_numbers = #tpu.dot_dimension_numbers<[1], [0], [0], [1], [0, 0, 1, 1], [], []>} : vector<16x16xf32>, vector<16x8xf32>, vector<16x8xf32> -> vector<16x8xf32>
    %c0_44 = arith.constant 0 : index
    %c24 = arith.constant 24 : index
    %117 = vector.load %arg10[%c0_44, %c24] : memref<16x64xf32, #tpu.memory_space<vmem>>, vector<16x8xf32>
    tpu.vector_store %arg10[%c0_44, %c24], %116 {strides = array<i32>} : memref<16x64xf32, #tpu.memory_space<vmem>>, vector<16x8xf32>,
    %118 = vector.extract_strided_slice %3 {offsets = [0, 32], sizes = [16, 8], strides = [1, 1]} : vector<16x72xf32> to vector<16x8xf32>
    %cst_45 = arith.constant dense<0.000000e+00> : vector<16x16xf32>
    %119 = tpu.matmul %118, %118, %cst_45 {dimension_numbers = #tpu.dot_dimension_numbers<[1], [1], [0], [0], [0, 0, 1, 0], [], []>} : vector<16x8xf32>, vector<16x8xf32>, vector<16x16xf32> -> vector<16x16xf32>
    %cst_46 = arith.constant 5.000000e-01 : f32
    %120 = vector.broadcast %cst_46 : f32 to vector<16x16xf32>
    %121 = arith.mulf %120, %119 : vector<16x16xf32>
    %122 = math.tanh %121 : vector<16x16xf32>
    %cst_47 = arith.constant 5.000000e-01 : f32
    %123 = vector.broadcast %cst_47 : f32 to vector<16x16xf32>
    %124 = arith.mulf %123, %122 : vector<16x16xf32>
    %cst_48 = arith.constant 5.000000e-01 : f32
    %125 = vector.broadcast %cst_48 : f32 to vector<16x16xf32>
    %126 = arith.addf %124, %125 : vector<16x16xf32>
    %127 = vector.extract_strided_slice %3 {offsets = [0, 68], sizes = [16, 1], strides = [1, 1]} : vector<16x72xf32> to vector<16x1xf32>
    %128 = vector.extract_strided_slice %5 {offsets = [4, 0], sizes = [1, 16], strides = [1, 1]} : vector<8x16xf32> to vector<1x16xf32>
    %129 = vector.broadcast %127 : vector<16x1xf32> to vector<16x16xf32>
    %130 = vector.broadcast %128 : vector<1x16xf32> to vector<16x16xf32>
    %131 = arith.addf %129, %130 : vector<16x16xf32>
    %132 = arith.mulf %131, %126 : vector<16x16xf32>
    %cst_49 = arith.constant 0.000000e+00 : f32
    %133 = vector.broadcast %cst_49 : f32 to vector<16x16xf32>
    %134 = arith.cmpf oge, %132, %133 : vector<16x16xf32>
    %cst_50 = arith.constant 2.000000e-01 : f32
    %135 = vector.broadcast %cst_50 : f32 to vector<16x16xf32>
    %136 = arith.mulf %135, %132 : vector<16x16xf32>
    %137 = arith.select %134, %132, %136 : vector<16x16xi1>, vector<16x16xf32>
    %138 = arith.addf %137, %0 : vector<16x16xf32>
    %139 = math.exp %138 : vector<16x16xf32>
    %cst_51 = arith.constant dense<0.000000e+00> : vector<16xf32>
    %140 = vector.multi_reduction <add>, %139, %cst_51 [1] : vector<16x16xf32> to vector<16xf32>
    %141 = vector.shape_cast %140 : vector<16xf32> to vector<16x1xf32>
    %142 = vector.broadcast %141 : vector<16x1xf32> to vector<16x16xf32>
    %143 = arith.divf %139, %142 : vector<16x16xf32>
    %cst_52 = arith.constant dense<0.000000e+00> : vector<16x8xf32>
    %144 = tpu.matmul %143, %118, %cst_52 {dimension_numbers = #tpu.dot_dimension_numbers<[1], [0], [0], [1], [0, 0, 1, 1], [], []>} : vector<16x16xf32>, vector<16x8xf32>, vector<16x8xf32> -> vector<16x8xf32>
    %c0_53 = arith.constant 0 : index
    %c32 = arith.constant 32 : index
    %145 = vector.load %arg10[%c0_53, %c32] : memref<16x64xf32, #tpu.memory_space<vmem>>, vector<16x8xf32>
    tpu.vector_store %arg10[%c0_53, %c32], %144 {strides = array<i32>} : memref<16x64xf32, #tpu.memory_space<vmem>>, vector<16x8xf32>,
    %146 = vector.extract_strided_slice %3 {offsets = [0, 40], sizes = [16, 8], strides = [1, 1]} : vector<16x72xf32> to vector<16x8xf32>
    %cst_54 = arith.constant dense<0.000000e+00> : vector<16x16xf32>
    %147 = tpu.matmul %146, %146, %cst_54 {dimension_numbers = #tpu.dot_dimension_numbers<[1], [1], [0], [0], [0, 0, 1, 0], [], []>} : vector<16x8xf32>, vector<16x8xf32>, vector<16x16xf32> -> vector<16x16xf32>
    %cst_55 = arith.constant 5.000000e-01 : f32
    %148 = vector.broadcast %cst_55 : f32 to vector<16x16xf32>
    %149 = arith.mulf %148, %147 : vector<16x16xf32>
    %150 = math.tanh %149 : vector<16x16xf32>
    %cst_56 = arith.constant 5.000000e-01 : f32
    %151 = vector.broadcast %cst_56 : f32 to vector<16x16xf32>
    %152 = arith.mulf %151, %150 : vector<16x16xf32>
    %cst_57 = arith.constant 5.000000e-01 : f32
    %153 = vector.broadcast %cst_57 : f32 to vector<16x16xf32>
    %154 = arith.addf %152, %153 : vector<16x16xf32>
    %155 = vector.extract_strided_slice %3 {offsets = [0, 69], sizes = [16, 1], strides = [1, 1]} : vector<16x72xf32> to vector<16x1xf32>
    %156 = vector.extract_strided_slice %5 {offsets = [5, 0], sizes = [1, 16], strides = [1, 1]} : vector<8x16xf32> to vector<1x16xf32>
    %157 = vector.broadcast %155 : vector<16x1xf32> to vector<16x16xf32>
    %158 = vector.broadcast %156 : vector<1x16xf32> to vector<16x16xf32>
    %159 = arith.addf %157, %158 : vector<16x16xf32>
    %160 = arith.mulf %159, %154 : vector<16x16xf32>
    %cst_58 = arith.constant 0.000000e+00 : f32
    %161 = vector.broadcast %cst_58 : f32 to vector<16x16xf32>
    %162 = arith.cmpf oge, %160, %161 : vector<16x16xf32>
    %cst_59 = arith.constant 2.000000e-01 : f32
    %163 = vector.broadcast %cst_59 : f32 to vector<16x16xf32>
    %164 = arith.mulf %163, %160 : vector<16x16xf32>
    %165 = arith.select %162, %160, %164 : vector<16x16xi1>, vector<16x16xf32>
    %166 = arith.addf %165, %0 : vector<16x16xf32>
    %167 = math.exp %166 : vector<16x16xf32>
    %cst_60 = arith.constant dense<0.000000e+00> : vector<16xf32>
    %168 = vector.multi_reduction <add>, %167, %cst_60 [1] : vector<16x16xf32> to vector<16xf32>
    %169 = vector.shape_cast %168 : vector<16xf32> to vector<16x1xf32>
    %170 = vector.broadcast %169 : vector<16x1xf32> to vector<16x16xf32>
    %171 = arith.divf %167, %170 : vector<16x16xf32>
    %cst_61 = arith.constant dense<0.000000e+00> : vector<16x8xf32>
    %172 = tpu.matmul %171, %146, %cst_61 {dimension_numbers = #tpu.dot_dimension_numbers<[1], [0], [0], [1], [0, 0, 1, 1], [], []>} : vector<16x16xf32>, vector<16x8xf32>, vector<16x8xf32> -> vector<16x8xf32>
    %c0_62 = arith.constant 0 : index
    %c40 = arith.constant 40 : index
    %173 = vector.load %arg10[%c0_62, %c40] : memref<16x64xf32, #tpu.memory_space<vmem>>, vector<16x8xf32>
    tpu.vector_store %arg10[%c0_62, %c40], %172 {strides = array<i32>} : memref<16x64xf32, #tpu.memory_space<vmem>>, vector<16x8xf32>,
    %174 = vector.extract_strided_slice %3 {offsets = [0, 48], sizes = [16, 8], strides = [1, 1]} : vector<16x72xf32> to vector<16x8xf32>
    %cst_63 = arith.constant dense<0.000000e+00> : vector<16x16xf32>
    %175 = tpu.matmul %174, %174, %cst_63 {dimension_numbers = #tpu.dot_dimension_numbers<[1], [1], [0], [0], [0, 0, 1, 0], [], []>} : vector<16x8xf32>, vector<16x8xf32>, vector<16x16xf32> -> vector<16x16xf32>
    %cst_64 = arith.constant 5.000000e-01 : f32
    %176 = vector.broadcast %cst_64 : f32 to vector<16x16xf32>
    %177 = arith.mulf %176, %175 : vector<16x16xf32>
    %178 = math.tanh %177 : vector<16x16xf32>
    %cst_65 = arith.constant 5.000000e-01 : f32
    %179 = vector.broadcast %cst_65 : f32 to vector<16x16xf32>
    %180 = arith.mulf %179, %178 : vector<16x16xf32>
    %cst_66 = arith.constant 5.000000e-01 : f32
    %181 = vector.broadcast %cst_66 : f32 to vector<16x16xf32>
    %182 = arith.addf %180, %181 : vector<16x16xf32>
    %183 = vector.extract_strided_slice %3 {offsets = [0, 70], sizes = [16, 1], strides = [1, 1]} : vector<16x72xf32> to vector<16x1xf32>
    %184 = vector.extract_strided_slice %5 {offsets = [6, 0], sizes = [1, 16], strides = [1, 1]} : vector<8x16xf32> to vector<1x16xf32>
    %185 = vector.broadcast %183 : vector<16x1xf32> to vector<16x16xf32>
    %186 = vector.broadcast %184 : vector<1x16xf32> to vector<16x16xf32>
    %187 = arith.addf %185, %186 : vector<16x16xf32>
    %188 = arith.mulf %187, %182 : vector<16x16xf32>
    %cst_67 = arith.constant 0.000000e+00 : f32
    %189 = vector.broadcast %cst_67 : f32 to vector<16x16xf32>
    %190 = arith.cmpf oge, %188, %189 : vector<16x16xf32>
    %cst_68 = arith.constant 2.000000e-01 : f32
    %191 = vector.broadcast %cst_68 : f32 to vector<16x16xf32>
    %192 = arith.mulf %191, %188 : vector<16x16xf32>
    %193 = arith.select %190, %188, %192 : vector<16x16xi1>, vector<16x16xf32>
    %194 = arith.addf %193, %0 : vector<16x16xf32>
    %195 = math.exp %194 : vector<16x16xf32>
    %cst_69 = arith.constant dense<0.000000e+00> : vector<16xf32>
    %196 = vector.multi_reduction <add>, %195, %cst_69 [1] : vector<16x16xf32> to vector<16xf32>
    %197 = vector.shape_cast %196 : vector<16xf32> to vector<16x1xf32>
    %198 = vector.broadcast %197 : vector<16x1xf32> to vector<16x16xf32>
    %199 = arith.divf %195, %198 : vector<16x16xf32>
    %cst_70 = arith.constant dense<0.000000e+00> : vector<16x8xf32>
    %200 = tpu.matmul %199, %174, %cst_70 {dimension_numbers = #tpu.dot_dimension_numbers<[1], [0], [0], [1], [0, 0, 1, 1], [], []>} : vector<16x16xf32>, vector<16x8xf32>, vector<16x8xf32> -> vector<16x8xf32>
    %c0_71 = arith.constant 0 : index
    %c48 = arith.constant 48 : index
    %201 = vector.load %arg10[%c0_71, %c48] : memref<16x64xf32, #tpu.memory_space<vmem>>, vector<16x8xf32>
    tpu.vector_store %arg10[%c0_71, %c48], %200 {strides = array<i32>} : memref<16x64xf32, #tpu.memory_space<vmem>>, vector<16x8xf32>,
    %202 = vector.extract_strided_slice %3 {offsets = [0, 56], sizes = [16, 8], strides = [1, 1]} : vector<16x72xf32> to vector<16x8xf32>
    %cst_72 = arith.constant dense<0.000000e+00> : vector<16x16xf32>
    %203 = tpu.matmul %202, %202, %cst_72 {dimension_numbers = #tpu.dot_dimension_numbers<[1], [1], [0], [0], [0, 0, 1, 0], [], []>} : vector<16x8xf32>, vector<16x8xf32>, vector<16x16xf32> -> vector<16x16xf32>
    %cst_73 = arith.constant 5.000000e-01 : f32
    %204 = vector.broadcast %cst_73 : f32 to vector<16x16xf32>
    %205 = arith.mulf %204, %203 : vector<16x16xf32>
    %206 = math.tanh %205 : vector<16x16xf32>
    %cst_74 = arith.constant 5.000000e-01 : f32
    %207 = vector.broadcast %cst_74 : f32 to vector<16x16xf32>
    %208 = arith.mulf %207, %206 : vector<16x16xf32>
    %cst_75 = arith.constant 5.000000e-01 : f32
    %209 = vector.broadcast %cst_75 : f32 to vector<16x16xf32>
    %210 = arith.addf %208, %209 : vector<16x16xf32>
    %211 = vector.extract_strided_slice %3 {offsets = [0, 71], sizes = [16, 1], strides = [1, 1]} : vector<16x72xf32> to vector<16x1xf32>
    %212 = vector.extract_strided_slice %5 {offsets = [7, 0], sizes = [1, 16], strides = [1, 1]} : vector<8x16xf32> to vector<1x16xf32>
    %213 = vector.broadcast %211 : vector<16x1xf32> to vector<16x16xf32>
    %214 = vector.broadcast %212 : vector<1x16xf32> to vector<16x16xf32>
    %215 = arith.addf %213, %214 : vector<16x16xf32>
    %216 = arith.mulf %215, %210 : vector<16x16xf32>
    %cst_76 = arith.constant 0.000000e+00 : f32
    %217 = vector.broadcast %cst_76 : f32 to vector<16x16xf32>
    %218 = arith.cmpf oge, %216, %217 : vector<16x16xf32>
    %cst_77 = arith.constant 2.000000e-01 : f32
    %219 = vector.broadcast %cst_77 : f32 to vector<16x16xf32>
    %220 = arith.mulf %219, %216 : vector<16x16xf32>
    %221 = arith.select %218, %216, %220 : vector<16x16xi1>, vector<16x16xf32>
    %222 = arith.addf %221, %0 : vector<16x16xf32>
    %223 = math.exp %222 : vector<16x16xf32>
    %cst_78 = arith.constant dense<0.000000e+00> : vector<16xf32>
    %224 = vector.multi_reduction <add>, %223, %cst_78 [1] : vector<16x16xf32> to vector<16xf32>
    %225 = vector.shape_cast %224 : vector<16xf32> to vector<16x1xf32>
    %226 = vector.broadcast %225 : vector<16x1xf32> to vector<16x16xf32>
    %227 = arith.divf %223, %226 : vector<16x16xf32>
    %cst_79 = arith.constant dense<0.000000e+00> : vector<16x8xf32>
    %228 = tpu.matmul %227, %202, %cst_79 {dimension_numbers = #tpu.dot_dimension_numbers<[1], [0], [0], [1], [0, 0, 1, 1], [], []>} : vector<16x16xf32>, vector<16x8xf32>, vector<16x8xf32> -> vector<16x8xf32>
    %c0_80 = arith.constant 0 : index
    %c56 = arith.constant 56 : index
    %229 = vector.load %arg10[%c0_80, %c56] : memref<16x64xf32, #tpu.memory_space<vmem>>, vector<16x8xf32>
    tpu.vector_store %arg10[%c0_80, %c56], %228 {strides = array<i32>} : memref<16x64xf32, #tpu.memory_space<vmem>>, vector<16x8xf32>,
    %c0_81 = arith.constant 0 : index
    %c0_82 = arith.constant 0 : index
    %230 = vector.load %arg10[%c0_81, %c0_82] : memref<16x64xf32, #tpu.memory_space<vmem>>, vector<16x64xf32>
    %c0_83 = arith.constant 0 : index
    %c0_84 = arith.constant 0 : index
    %231 = vector.load %arg4[%c0_83, %c0_84] : memref<1x64xf32, #tpu.memory_space<vmem>>, vector<1x64xf32>
    %232 = vector.broadcast %231 : vector<1x64xf32> to vector<16x64xf32>
    %233 = arith.addf %230, %232 : vector<16x64xf32>
    %cst_85 = arith.constant 0.000000e+00 : f32
    %234 = vector.broadcast %cst_85 : f32 to vector<16x64xf32>
    %235 = arith.cmpf ogt, %233, %234 : vector<16x64xf32>
    %cst_86 = arith.constant 0.000000e+00 : f32
    %236 = vector.broadcast %cst_86 : f32 to vector<16x64xf32>
    %237 = arith.minimumf %233, %236 : vector<16x64xf32>
    %238 = math.exp %237 : vector<16x64xf32>
    %cst_87 = arith.constant 1.000000e+00 : f32
    %239 = vector.broadcast %cst_87 : f32 to vector<16x64xf32>
    %240 = arith.subf %238, %239 : vector<16x64xf32>
    %241 = arith.select %235, %233, %240 : vector<16x64xi1>, vector<16x64xf32>
    %c0_88 = arith.constant 0 : index
    %c0_89 = arith.constant 0 : index
    %242 = vector.load %arg5[%c0_88, %c0_89] : memref<64x40xf32, #tpu.memory_space<vmem>>, vector<64x40xf32>
    %cst_90 = arith.constant dense<0.000000e+00> : vector<16x40xf32>
    %243 = tpu.matmul %241, %242, %cst_90 {dimension_numbers = #tpu.dot_dimension_numbers<[1], [0], [0], [1], [0, 0, 1, 1], [], []>} : vector<16x64xf32>, vector<64x40xf32>, vector<16x40xf32> -> vector<16x40xf32>
    %c0_91 = arith.constant 0 : index
    %c0_92 = arith.constant 0 : index
    %244 = vector.load %arg6[%c0_91, %c0_92] : memref<8x64xf32, #tpu.memory_space<vmem>>, vector<8x64xf32>
    %cst_93 = arith.constant dense<0.000000e+00> : vector<8x16xf32>
    %245 = tpu.matmul %244, %241, %cst_93 {dimension_numbers = #tpu.dot_dimension_numbers<[1], [1], [0], [0], [0, 0, 1, 0], [], []>} : vector<8x64xf32>, vector<16x64xf32>, vector<8x16xf32> -> vector<8x16xf32>
    %246 = vector.extract_strided_slice %243 {offsets = [0, 0], sizes = [16, 4], strides = [1, 1]} : vector<16x40xf32> to vector<16x4xf32>
    %cst_94 = arith.constant dense<0.000000e+00> : vector<16x16xf32>
    %247 = tpu.matmul %246, %246, %cst_94 {dimension_numbers = #tpu.dot_dimension_numbers<[1], [1], [0], [0], [0, 0, 1, 0], [], []>} : vector<16x4xf32>, vector<16x4xf32>, vector<16x16xf32> -> vector<16x16xf32>
    %cst_95 = arith.constant 5.000000e-01 : f32
    %248 = vector.broadcast %cst_95 : f32 to vector<16x16xf32>
    %249 = arith.mulf %248, %247 : vector<16x16xf32>
    %250 = math.tanh %249 : vector<16x16xf32>
    %cst_96 = arith.constant 5.000000e-01 : f32
    %251 = vector.broadcast %cst_96 : f32 to vector<16x16xf32>
    %252 = arith.mulf %251, %250 : vector<16x16xf32>
    %cst_97 = arith.constant 5.000000e-01 : f32
    %253 = vector.broadcast %cst_97 : f32 to vector<16x16xf32>
    %254 = arith.addf %252, %253 : vector<16x16xf32>
    %255 = vector.extract_strided_slice %243 {offsets = [0, 32], sizes = [16, 1], strides = [1, 1]} : vector<16x40xf32> to vector<16x1xf32>
    %256 = vector.extract_strided_slice %245 {offsets = [0, 0], sizes = [1, 16], strides = [1, 1]} : vector<8x16xf32> to vector<1x16xf32>
    %257 = vector.broadcast %255 : vector<16x1xf32> to vector<16x16xf32>
    %258 = vector.broadcast %256 : vector<1x16xf32> to vector<16x16xf32>
    %259 = arith.addf %257, %258 : vector<16x16xf32>
    %260 = arith.mulf %259, %254 : vector<16x16xf32>
    %cst_98 = arith.constant 0.000000e+00 : f32
    %261 = vector.broadcast %cst_98 : f32 to vector<16x16xf32>
    %262 = arith.cmpf oge, %260, %261 : vector<16x16xf32>
    %cst_99 = arith.constant 2.000000e-01 : f32
    %263 = vector.broadcast %cst_99 : f32 to vector<16x16xf32>
    %264 = arith.mulf %263, %260 : vector<16x16xf32>
    %265 = arith.select %262, %260, %264 : vector<16x16xi1>, vector<16x16xf32>
    %266 = arith.addf %265, %0 : vector<16x16xf32>
    %267 = math.exp %266 : vector<16x16xf32>
    %cst_100 = arith.constant dense<0.000000e+00> : vector<16xf32>
    %268 = vector.multi_reduction <add>, %267, %cst_100 [1] : vector<16x16xf32> to vector<16xf32>
    %269 = vector.shape_cast %268 : vector<16xf32> to vector<16x1xf32>
    %270 = vector.broadcast %269 : vector<16x1xf32> to vector<16x16xf32>
    %271 = arith.divf %267, %270 : vector<16x16xf32>
    %cst_101 = arith.constant dense<0.000000e+00> : vector<16x4xf32>
    %272 = tpu.matmul %271, %246, %cst_101 {dimension_numbers = #tpu.dot_dimension_numbers<[1], [0], [0], [1], [0, 0, 1, 1], [], []>} : vector<16x16xf32>, vector<16x4xf32>, vector<16x4xf32> -> vector<16x4xf32>
    %c0_102 = arith.constant 0 : index
    %c0_103 = arith.constant 0 : index
    %273 = vector.load %arg11[%c0_102, %c0_103] : memref<16x32xf32, #tpu.memory_space<vmem>>, vector<16x4xf32>
    tpu.vector_store %arg11[%c0_102, %c0_103], %272 {strides = array<i32>} : memref<16x32xf32, #tpu.memory_space<vmem>>, vector<16x4xf32>,
    %274 = vector.extract_strided_slice %243 {offsets = [0, 4], sizes = [16, 4], strides = [1, 1]} : vector<16x40xf32> to vector<16x4xf32>
    %cst_104 = arith.constant dense<0.000000e+00> : vector<16x16xf32>
    %275 = tpu.matmul %274, %274, %cst_104 {dimension_numbers = #tpu.dot_dimension_numbers<[1], [1], [0], [0], [0, 0, 1, 0], [], []>} : vector<16x4xf32>, vector<16x4xf32>, vector<16x16xf32> -> vector<16x16xf32>
    %cst_105 = arith.constant 5.000000e-01 : f32
    %276 = vector.broadcast %cst_105 : f32 to vector<16x16xf32>
    %277 = arith.mulf %276, %275 : vector<16x16xf32>
    %278 = math.tanh %277 : vector<16x16xf32>
    %cst_106 = arith.constant 5.000000e-01 : f32
    %279 = vector.broadcast %cst_106 : f32 to vector<16x16xf32>
    %280 = arith.mulf %279, %278 : vector<16x16xf32>
    %cst_107 = arith.constant 5.000000e-01 : f32
    %281 = vector.broadcast %cst_107 : f32 to vector<16x16xf32>
    %282 = arith.addf %280, %281 : vector<16x16xf32>
    %283 = vector.extract_strided_slice %243 {offsets = [0, 33], sizes = [16, 1], strides = [1, 1]} : vector<16x40xf32> to vector<16x1xf32>
    %284 = vector.extract_strided_slice %245 {offsets = [1, 0], sizes = [1, 16], strides = [1, 1]} : vector<8x16xf32> to vector<1x16xf32>
    %285 = vector.broadcast %283 : vector<16x1xf32> to vector<16x16xf32>
    %286 = vector.broadcast %284 : vector<1x16xf32> to vector<16x16xf32>
    %287 = arith.addf %285, %286 : vector<16x16xf32>
    %288 = arith.mulf %287, %282 : vector<16x16xf32>
    %cst_108 = arith.constant 0.000000e+00 : f32
    %289 = vector.broadcast %cst_108 : f32 to vector<16x16xf32>
    %290 = arith.cmpf oge, %288, %289 : vector<16x16xf32>
    %cst_109 = arith.constant 2.000000e-01 : f32
    %291 = vector.broadcast %cst_109 : f32 to vector<16x16xf32>
    %292 = arith.mulf %291, %288 : vector<16x16xf32>
    %293 = arith.select %290, %288, %292 : vector<16x16xi1>, vector<16x16xf32>
    %294 = arith.addf %293, %0 : vector<16x16xf32>
    %295 = math.exp %294 : vector<16x16xf32>
    %cst_110 = arith.constant dense<0.000000e+00> : vector<16xf32>
    %296 = vector.multi_reduction <add>, %295, %cst_110 [1] : vector<16x16xf32> to vector<16xf32>
    %297 = vector.shape_cast %296 : vector<16xf32> to vector<16x1xf32>
    %298 = vector.broadcast %297 : vector<16x1xf32> to vector<16x16xf32>
    %299 = arith.divf %295, %298 : vector<16x16xf32>
    %cst_111 = arith.constant dense<0.000000e+00> : vector<16x4xf32>
    %300 = tpu.matmul %299, %274, %cst_111 {dimension_numbers = #tpu.dot_dimension_numbers<[1], [0], [0], [1], [0, 0, 1, 1], [], []>} : vector<16x16xf32>, vector<16x4xf32>, vector<16x4xf32> -> vector<16x4xf32>
    %c0_112 = arith.constant 0 : index
    %c4 = arith.constant 4 : index
    %301 = vector.load %arg11[%c0_112, %c4] : memref<16x32xf32, #tpu.memory_space<vmem>>, vector<16x4xf32>
    tpu.vector_store %arg11[%c0_112, %c4], %300 {strides = array<i32>} : memref<16x32xf32, #tpu.memory_space<vmem>>, vector<16x4xf32>,
    %302 = vector.extract_strided_slice %243 {offsets = [0, 8], sizes = [16, 4], strides = [1, 1]} : vector<16x40xf32> to vector<16x4xf32>
    %cst_113 = arith.constant dense<0.000000e+00> : vector<16x16xf32>
    %303 = tpu.matmul %302, %302, %cst_113 {dimension_numbers = #tpu.dot_dimension_numbers<[1], [1], [0], [0], [0, 0, 1, 0], [], []>} : vector<16x4xf32>, vector<16x4xf32>, vector<16x16xf32> -> vector<16x16xf32>
    %cst_114 = arith.constant 5.000000e-01 : f32
    %304 = vector.broadcast %cst_114 : f32 to vector<16x16xf32>
    %305 = arith.mulf %304, %303 : vector<16x16xf32>
    %306 = math.tanh %305 : vector<16x16xf32>
    %cst_115 = arith.constant 5.000000e-01 : f32
    %307 = vector.broadcast %cst_115 : f32 to vector<16x16xf32>
    %308 = arith.mulf %307, %306 : vector<16x16xf32>
    %cst_116 = arith.constant 5.000000e-01 : f32
    %309 = vector.broadcast %cst_116 : f32 to vector<16x16xf32>
    %310 = arith.addf %308, %309 : vector<16x16xf32>
    %311 = vector.extract_strided_slice %243 {offsets = [0, 34], sizes = [16, 1], strides = [1, 1]} : vector<16x40xf32> to vector<16x1xf32>
    %312 = vector.extract_strided_slice %245 {offsets = [2, 0], sizes = [1, 16], strides = [1, 1]} : vector<8x16xf32> to vector<1x16xf32>
    %313 = vector.broadcast %311 : vector<16x1xf32> to vector<16x16xf32>
    %314 = vector.broadcast %312 : vector<1x16xf32> to vector<16x16xf32>
    %315 = arith.addf %313, %314 : vector<16x16xf32>
    %316 = arith.mulf %315, %310 : vector<16x16xf32>
    %cst_117 = arith.constant 0.000000e+00 : f32
    %317 = vector.broadcast %cst_117 : f32 to vector<16x16xf32>
    %318 = arith.cmpf oge, %316, %317 : vector<16x16xf32>
    %cst_118 = arith.constant 2.000000e-01 : f32
    %319 = vector.broadcast %cst_118 : f32 to vector<16x16xf32>
    %320 = arith.mulf %319, %316 : vector<16x16xf32>
    %321 = arith.select %318, %316, %320 : vector<16x16xi1>, vector<16x16xf32>
    %322 = arith.addf %321, %0 : vector<16x16xf32>
    %323 = math.exp %322 : vector<16x16xf32>
    %cst_119 = arith.constant dense<0.000000e+00> : vector<16xf32>
    %324 = vector.multi_reduction <add>, %323, %cst_119 [1] : vector<16x16xf32> to vector<16xf32>
    %325 = vector.shape_cast %324 : vector<16xf32> to vector<16x1xf32>
    %326 = vector.broadcast %325 : vector<16x1xf32> to vector<16x16xf32>
    %327 = arith.divf %323, %326 : vector<16x16xf32>
    %cst_120 = arith.constant dense<0.000000e+00> : vector<16x4xf32>
    %328 = tpu.matmul %327, %302, %cst_120 {dimension_numbers = #tpu.dot_dimension_numbers<[1], [0], [0], [1], [0, 0, 1, 1], [], []>} : vector<16x16xf32>, vector<16x4xf32>, vector<16x4xf32> -> vector<16x4xf32>
    %c0_121 = arith.constant 0 : index
    %c8_122 = arith.constant 8 : index
    %329 = vector.load %arg11[%c0_121, %c8_122] : memref<16x32xf32, #tpu.memory_space<vmem>>, vector<16x4xf32>
    tpu.vector_store %arg11[%c0_121, %c8_122], %328 {strides = array<i32>} : memref<16x32xf32, #tpu.memory_space<vmem>>, vector<16x4xf32>,
    %330 = vector.extract_strided_slice %243 {offsets = [0, 12], sizes = [16, 4], strides = [1, 1]} : vector<16x40xf32> to vector<16x4xf32>
    %cst_123 = arith.constant dense<0.000000e+00> : vector<16x16xf32>
    %331 = tpu.matmul %330, %330, %cst_123 {dimension_numbers = #tpu.dot_dimension_numbers<[1], [1], [0], [0], [0, 0, 1, 0], [], []>} : vector<16x4xf32>, vector<16x4xf32>, vector<16x16xf32> -> vector<16x16xf32>
    %cst_124 = arith.constant 5.000000e-01 : f32
    %332 = vector.broadcast %cst_124 : f32 to vector<16x16xf32>
    %333 = arith.mulf %332, %331 : vector<16x16xf32>
    %334 = math.tanh %333 : vector<16x16xf32>
    %cst_125 = arith.constant 5.000000e-01 : f32
    %335 = vector.broadcast %cst_125 : f32 to vector<16x16xf32>
    %336 = arith.mulf %335, %334 : vector<16x16xf32>
    %cst_126 = arith.constant 5.000000e-01 : f32
    %337 = vector.broadcast %cst_126 : f32 to vector<16x16xf32>
    %338 = arith.addf %336, %337 : vector<16x16xf32>
    %339 = vector.extract_strided_slice %243 {offsets = [0, 35], sizes = [16, 1], strides = [1, 1]} : vector<16x40xf32> to vector<16x1xf32>
    %340 = vector.extract_strided_slice %245 {offsets = [3, 0], sizes = [1, 16], strides = [1, 1]} : vector<8x16xf32> to vector<1x16xf32>
    %341 = vector.broadcast %339 : vector<16x1xf32> to vector<16x16xf32>
    %342 = vector.broadcast %340 : vector<1x16xf32> to vector<16x16xf32>
    %343 = arith.addf %341, %342 : vector<16x16xf32>
    %344 = arith.mulf %343, %338 : vector<16x16xf32>
    %cst_127 = arith.constant 0.000000e+00 : f32
    %345 = vector.broadcast %cst_127 : f32 to vector<16x16xf32>
    %346 = arith.cmpf oge, %344, %345 : vector<16x16xf32>
    %cst_128 = arith.constant 2.000000e-01 : f32
    %347 = vector.broadcast %cst_128 : f32 to vector<16x16xf32>
    %348 = arith.mulf %347, %344 : vector<16x16xf32>
    %349 = arith.select %346, %344, %348 : vector<16x16xi1>, vector<16x16xf32>
    %350 = arith.addf %349, %0 : vector<16x16xf32>
    %351 = math.exp %350 : vector<16x16xf32>
    %cst_129 = arith.constant dense<0.000000e+00> : vector<16xf32>
    %352 = vector.multi_reduction <add>, %351, %cst_129 [1] : vector<16x16xf32> to vector<16xf32>
    %353 = vector.shape_cast %352 : vector<16xf32> to vector<16x1xf32>
    %354 = vector.broadcast %353 : vector<16x1xf32> to vector<16x16xf32>
    %355 = arith.divf %351, %354 : vector<16x16xf32>
    %cst_130 = arith.constant dense<0.000000e+00> : vector<16x4xf32>
    %356 = tpu.matmul %355, %330, %cst_130 {dimension_numbers = #tpu.dot_dimension_numbers<[1], [0], [0], [1], [0, 0, 1, 1], [], []>} : vector<16x16xf32>, vector<16x4xf32>, vector<16x4xf32> -> vector<16x4xf32>
    %c0_131 = arith.constant 0 : index
    %c12 = arith.constant 12 : index
    %357 = vector.load %arg11[%c0_131, %c12] : memref<16x32xf32, #tpu.memory_space<vmem>>, vector<16x4xf32>
    tpu.vector_store %arg11[%c0_131, %c12], %356 {strides = array<i32>} : memref<16x32xf32, #tpu.memory_space<vmem>>, vector<16x4xf32>,
    %358 = vector.extract_strided_slice %243 {offsets = [0, 16], sizes = [16, 4], strides = [1, 1]} : vector<16x40xf32> to vector<16x4xf32>
    %cst_132 = arith.constant dense<0.000000e+00> : vector<16x16xf32>
    %359 = tpu.matmul %358, %358, %cst_132 {dimension_numbers = #tpu.dot_dimension_numbers<[1], [1], [0], [0], [0, 0, 1, 0], [], []>} : vector<16x4xf32>, vector<16x4xf32>, vector<16x16xf32> -> vector<16x16xf32>
    %cst_133 = arith.constant 5.000000e-01 : f32
    %360 = vector.broadcast %cst_133 : f32 to vector<16x16xf32>
    %361 = arith.mulf %360, %359 : vector<16x16xf32>
    %362 = math.tanh %361 : vector<16x16xf32>
    %cst_134 = arith.constant 5.000000e-01 : f32
    %363 = vector.broadcast %cst_134 : f32 to vector<16x16xf32>
    %364 = arith.mulf %363, %362 : vector<16x16xf32>
    %cst_135 = arith.constant 5.000000e-01 : f32
    %365 = vector.broadcast %cst_135 : f32 to vector<16x16xf32>
    %366 = arith.addf %364, %365 : vector<16x16xf32>
    %367 = vector.extract_strided_slice %243 {offsets = [0, 36], sizes = [16, 1], strides = [1, 1]} : vector<16x40xf32> to vector<16x1xf32>
    %368 = vector.extract_strided_slice %245 {offsets = [4, 0], sizes = [1, 16], strides = [1, 1]} : vector<8x16xf32> to vector<1x16xf32>
    %369 = vector.broadcast %367 : vector<16x1xf32> to vector<16x16xf32>
    %370 = vector.broadcast %368 : vector<1x16xf32> to vector<16x16xf32>
    %371 = arith.addf %369, %370 : vector<16x16xf32>
    %372 = arith.mulf %371, %366 : vector<16x16xf32>
    %cst_136 = arith.constant 0.000000e+00 : f32
    %373 = vector.broadcast %cst_136 : f32 to vector<16x16xf32>
    %374 = arith.cmpf oge, %372, %373 : vector<16x16xf32>
    %cst_137 = arith.constant 2.000000e-01 : f32
    %375 = vector.broadcast %cst_137 : f32 to vector<16x16xf32>
    %376 = arith.mulf %375, %372 : vector<16x16xf32>
    %377 = arith.select %374, %372, %376 : vector<16x16xi1>, vector<16x16xf32>
    %378 = arith.addf %377, %0 : vector<16x16xf32>
    %379 = math.exp %378 : vector<16x16xf32>
    %cst_138 = arith.constant dense<0.000000e+00> : vector<16xf32>
    %380 = vector.multi_reduction <add>, %379, %cst_138 [1] : vector<16x16xf32> to vector<16xf32>
    %381 = vector.shape_cast %380 : vector<16xf32> to vector<16x1xf32>
    %382 = vector.broadcast %381 : vector<16x1xf32> to vector<16x16xf32>
    %383 = arith.divf %379, %382 : vector<16x16xf32>
    %cst_139 = arith.constant dense<0.000000e+00> : vector<16x4xf32>
    %384 = tpu.matmul %383, %358, %cst_139 {dimension_numbers = #tpu.dot_dimension_numbers<[1], [0], [0], [1], [0, 0, 1, 1], [], []>} : vector<16x16xf32>, vector<16x4xf32>, vector<16x4xf32> -> vector<16x4xf32>
    %c0_140 = arith.constant 0 : index
    %c16_141 = arith.constant 16 : index
    %385 = vector.load %arg11[%c0_140, %c16_141] : memref<16x32xf32, #tpu.memory_space<vmem>>, vector<16x4xf32>
    tpu.vector_store %arg11[%c0_140, %c16_141], %384 {strides = array<i32>} : memref<16x32xf32, #tpu.memory_space<vmem>>, vector<16x4xf32>,
    %386 = vector.extract_strided_slice %243 {offsets = [0, 20], sizes = [16, 4], strides = [1, 1]} : vector<16x40xf32> to vector<16x4xf32>
    %cst_142 = arith.constant dense<0.000000e+00> : vector<16x16xf32>
    %387 = tpu.matmul %386, %386, %cst_142 {dimension_numbers = #tpu.dot_dimension_numbers<[1], [1], [0], [0], [0, 0, 1, 0], [], []>} : vector<16x4xf32>, vector<16x4xf32>, vector<16x16xf32> -> vector<16x16xf32>
    %cst_143 = arith.constant 5.000000e-01 : f32
    %388 = vector.broadcast %cst_143 : f32 to vector<16x16xf32>
    %389 = arith.mulf %388, %387 : vector<16x16xf32>
    %390 = math.tanh %389 : vector<16x16xf32>
    %cst_144 = arith.constant 5.000000e-01 : f32
    %391 = vector.broadcast %cst_144 : f32 to vector<16x16xf32>
    %392 = arith.mulf %391, %390 : vector<16x16xf32>
    %cst_145 = arith.constant 5.000000e-01 : f32
    %393 = vector.broadcast %cst_145 : f32 to vector<16x16xf32>
    %394 = arith.addf %392, %393 : vector<16x16xf32>
    %395 = vector.extract_strided_slice %243 {offsets = [0, 37], sizes = [16, 1], strides = [1, 1]} : vector<16x40xf32> to vector<16x1xf32>
    %396 = vector.extract_strided_slice %245 {offsets = [5, 0], sizes = [1, 16], strides = [1, 1]} : vector<8x16xf32> to vector<1x16xf32>
    %397 = vector.broadcast %395 : vector<16x1xf32> to vector<16x16xf32>
    %398 = vector.broadcast %396 : vector<1x16xf32> to vector<16x16xf32>
    %399 = arith.addf %397, %398 : vector<16x16xf32>
    %400 = arith.mulf %399, %394 : vector<16x16xf32>
    %cst_146 = arith.constant 0.000000e+00 : f32
    %401 = vector.broadcast %cst_146 : f32 to vector<16x16xf32>
    %402 = arith.cmpf oge, %400, %401 : vector<16x16xf32>
    %cst_147 = arith.constant 2.000000e-01 : f32
    %403 = vector.broadcast %cst_147 : f32 to vector<16x16xf32>
    %404 = arith.mulf %403, %400 : vector<16x16xf32>
    %405 = arith.select %402, %400, %404 : vector<16x16xi1>, vector<16x16xf32>
    %406 = arith.addf %405, %0 : vector<16x16xf32>
    %407 = math.exp %406 : vector<16x16xf32>
    %cst_148 = arith.constant dense<0.000000e+00> : vector<16xf32>
    %408 = vector.multi_reduction <add>, %407, %cst_148 [1] : vector<16x16xf32> to vector<16xf32>
    %409 = vector.shape_cast %408 : vector<16xf32> to vector<16x1xf32>
    %410 = vector.broadcast %409 : vector<16x1xf32> to vector<16x16xf32>
    %411 = arith.divf %407, %410 : vector<16x16xf32>
    %cst_149 = arith.constant dense<0.000000e+00> : vector<16x4xf32>
    %412 = tpu.matmul %411, %386, %cst_149 {dimension_numbers = #tpu.dot_dimension_numbers<[1], [0], [0], [1], [0, 0, 1, 1], [], []>} : vector<16x16xf32>, vector<16x4xf32>, vector<16x4xf32> -> vector<16x4xf32>
    %c0_150 = arith.constant 0 : index
    %c20 = arith.constant 20 : index
    %413 = vector.load %arg11[%c0_150, %c20] : memref<16x32xf32, #tpu.memory_space<vmem>>, vector<16x4xf32>
    tpu.vector_store %arg11[%c0_150, %c20], %412 {strides = array<i32>} : memref<16x32xf32, #tpu.memory_space<vmem>>, vector<16x4xf32>,
    %414 = vector.extract_strided_slice %243 {offsets = [0, 24], sizes = [16, 4], strides = [1, 1]} : vector<16x40xf32> to vector<16x4xf32>
    %cst_151 = arith.constant dense<0.000000e+00> : vector<16x16xf32>
    %415 = tpu.matmul %414, %414, %cst_151 {dimension_numbers = #tpu.dot_dimension_numbers<[1], [1], [0], [0], [0, 0, 1, 0], [], []>} : vector<16x4xf32>, vector<16x4xf32>, vector<16x16xf32> -> vector<16x16xf32>
    %cst_152 = arith.constant 5.000000e-01 : f32
    %416 = vector.broadcast %cst_152 : f32 to vector<16x16xf32>
    %417 = arith.mulf %416, %415 : vector<16x16xf32>
    %418 = math.tanh %417 : vector<16x16xf32>
    %cst_153 = arith.constant 5.000000e-01 : f32
    %419 = vector.broadcast %cst_153 : f32 to vector<16x16xf32>
    %420 = arith.mulf %419, %418 : vector<16x16xf32>
    %cst_154 = arith.constant 5.000000e-01 : f32
    %421 = vector.broadcast %cst_154 : f32 to vector<16x16xf32>
    %422 = arith.addf %420, %421 : vector<16x16xf32>
    %423 = vector.extract_strided_slice %243 {offsets = [0, 38], sizes = [16, 1], strides = [1, 1]} : vector<16x40xf32> to vector<16x1xf32>
    %424 = vector.extract_strided_slice %245 {offsets = [6, 0], sizes = [1, 16], strides = [1, 1]} : vector<8x16xf32> to vector<1x16xf32>
    %425 = vector.broadcast %423 : vector<16x1xf32> to vector<16x16xf32>
    %426 = vector.broadcast %424 : vector<1x16xf32> to vector<16x16xf32>
    %427 = arith.addf %425, %426 : vector<16x16xf32>
    %428 = arith.mulf %427, %422 : vector<16x16xf32>
    %cst_155 = arith.constant 0.000000e+00 : f32
    %429 = vector.broadcast %cst_155 : f32 to vector<16x16xf32>
    %430 = arith.cmpf oge, %428, %429 : vector<16x16xf32>
    %cst_156 = arith.constant 2.000000e-01 : f32
    %431 = vector.broadcast %cst_156 : f32 to vector<16x16xf32>
    %432 = arith.mulf %431, %428 : vector<16x16xf32>
    %433 = arith.select %430, %428, %432 : vector<16x16xi1>, vector<16x16xf32>
    %434 = arith.addf %433, %0 : vector<16x16xf32>
    %435 = math.exp %434 : vector<16x16xf32>
    %cst_157 = arith.constant dense<0.000000e+00> : vector<16xf32>
    %436 = vector.multi_reduction <add>, %435, %cst_157 [1] : vector<16x16xf32> to vector<16xf32>
    %437 = vector.shape_cast %436 : vector<16xf32> to vector<16x1xf32>
    %438 = vector.broadcast %437 : vector<16x1xf32> to vector<16x16xf32>
    %439 = arith.divf %435, %438 : vector<16x16xf32>
    %cst_158 = arith.constant dense<0.000000e+00> : vector<16x4xf32>
    %440 = tpu.matmul %439, %414, %cst_158 {dimension_numbers = #tpu.dot_dimension_numbers<[1], [0], [0], [1], [0, 0, 1, 1], [], []>} : vector<16x16xf32>, vector<16x4xf32>, vector<16x4xf32> -> vector<16x4xf32>
    %c0_159 = arith.constant 0 : index
    %c24_160 = arith.constant 24 : index
    %441 = vector.load %arg11[%c0_159, %c24_160] : memref<16x32xf32, #tpu.memory_space<vmem>>, vector<16x4xf32>
    tpu.vector_store %arg11[%c0_159, %c24_160], %440 {strides = array<i32>} : memref<16x32xf32, #tpu.memory_space<vmem>>, vector<16x4xf32>,
    %442 = vector.extract_strided_slice %243 {offsets = [0, 28], sizes = [16, 4], strides = [1, 1]} : vector<16x40xf32> to vector<16x4xf32>
    %cst_161 = arith.constant dense<0.000000e+00> : vector<16x16xf32>
    %443 = tpu.matmul %442, %442, %cst_161 {dimension_numbers = #tpu.dot_dimension_numbers<[1], [1], [0], [0], [0, 0, 1, 0], [], []>} : vector<16x4xf32>, vector<16x4xf32>, vector<16x16xf32> -> vector<16x16xf32>
    %cst_162 = arith.constant 5.000000e-01 : f32
    %444 = vector.broadcast %cst_162 : f32 to vector<16x16xf32>
    %445 = arith.mulf %444, %443 : vector<16x16xf32>
    %446 = math.tanh %445 : vector<16x16xf32>
    %cst_163 = arith.constant 5.000000e-01 : f32
    %447 = vector.broadcast %cst_163 : f32 to vector<16x16xf32>
    %448 = arith.mulf %447, %446 : vector<16x16xf32>
    %cst_164 = arith.constant 5.000000e-01 : f32
    %449 = vector.broadcast %cst_164 : f32 to vector<16x16xf32>
    %450 = arith.addf %448, %449 : vector<16x16xf32>
    %451 = vector.extract_strided_slice %243 {offsets = [0, 39], sizes = [16, 1], strides = [1, 1]} : vector<16x40xf32> to vector<16x1xf32>
    %452 = vector.extract_strided_slice %245 {offsets = [7, 0], sizes = [1, 16], strides = [1, 1]} : vector<8x16xf32> to vector<1x16xf32>
    %453 = vector.broadcast %451 : vector<16x1xf32> to vector<16x16xf32>
    %454 = vector.broadcast %452 : vector<1x16xf32> to vector<16x16xf32>
    %455 = arith.addf %453, %454 : vector<16x16xf32>
    %456 = arith.mulf %455, %450 : vector<16x16xf32>
    %cst_165 = arith.constant 0.000000e+00 : f32
    %457 = vector.broadcast %cst_165 : f32 to vector<16x16xf32>
    %458 = arith.cmpf oge, %456, %457 : vector<16x16xf32>
    %cst_166 = arith.constant 2.000000e-01 : f32
    %459 = vector.broadcast %cst_166 : f32 to vector<16x16xf32>
    %460 = arith.mulf %459, %456 : vector<16x16xf32>
    %461 = arith.select %458, %456, %460 : vector<16x16xi1>, vector<16x16xf32>
    %462 = arith.addf %461, %0 : vector<16x16xf32>
    %463 = math.exp %462 : vector<16x16xf32>
    %cst_167 = arith.constant dense<0.000000e+00> : vector<16xf32>
    %464 = vector.multi_reduction <add>, %463, %cst_167 [1] : vector<16x16xf32> to vector<16xf32>
    %465 = vector.shape_cast %464 : vector<16xf32> to vector<16x1xf32>
    %466 = vector.broadcast %465 : vector<16x1xf32> to vector<16x16xf32>
    %467 = arith.divf %463, %466 : vector<16x16xf32>
    %cst_168 = arith.constant dense<0.000000e+00> : vector<16x4xf32>
    %468 = tpu.matmul %467, %442, %cst_168 {dimension_numbers = #tpu.dot_dimension_numbers<[1], [0], [0], [1], [0, 0, 1, 1], [], []>} : vector<16x16xf32>, vector<16x4xf32>, vector<16x4xf32> -> vector<16x4xf32>
    %c0_169 = arith.constant 0 : index
    %c28 = arith.constant 28 : index
    %469 = vector.load %arg11[%c0_169, %c28] : memref<16x32xf32, #tpu.memory_space<vmem>>, vector<16x4xf32>
    tpu.vector_store %arg11[%c0_169, %c28], %468 {strides = array<i32>} : memref<16x32xf32, #tpu.memory_space<vmem>>, vector<16x4xf32>,
    %c0_170 = arith.constant 0 : index
    %c0_171 = arith.constant 0 : index
    %470 = vector.load %arg11[%c0_170, %c0_171] : memref<16x32xf32, #tpu.memory_space<vmem>>, vector<16x32xf32>
    %c0_172 = arith.constant 0 : index
    %c0_173 = arith.constant 0 : index
    %471 = vector.load %arg8[%c0_172, %c0_173] : memref<32x4xf32, #tpu.memory_space<vmem>>, vector<32x4xf32>
    %cst_174 = arith.constant dense<0.000000e+00> : vector<16x4xf32>
    %472 = tpu.matmul %470, %471, %cst_174 {dimension_numbers = #tpu.dot_dimension_numbers<[1], [0], [0], [1], [0, 0, 1, 1], [], []>} : vector<16x32xf32>, vector<32x4xf32>, vector<16x4xf32> -> vector<16x4xf32>
    %c0_175 = arith.constant 0 : index
    %c0_176 = arith.constant 0 : index
    %473 = vector.load %arg7[%c0_175, %c0_176] : memref<1x4xf32, #tpu.memory_space<vmem>>, vector<1x4xf32>
    %474 = vector.broadcast %473 : vector<1x4xf32> to vector<16x4xf32>
    %475 = arith.addf %472, %474 : vector<16x4xf32>
    %cst_177 = arith.constant dense<0xFF800000> : vector<16xf32>
    %476 = vector.multi_reduction <maximumf>, %475, %cst_177 [1] : vector<16x4xf32> to vector<16xf32>
    %477 = vector.shape_cast %476 : vector<16xf32> to vector<16x1xf32>
    %478 = vector.broadcast %477 : vector<16x1xf32> to vector<16x4xf32>
    %479 = arith.subf %475, %478 : vector<16x4xf32>
    %480 = math.exp %479 : vector<16x4xf32>
    %cst_178 = arith.constant dense<0.000000e+00> : vector<16xf32>
    %481 = vector.multi_reduction <add>, %480, %cst_178 [1] : vector<16x4xf32> to vector<16xf32>
    %482 = vector.shape_cast %481 : vector<16xf32> to vector<16x1xf32>
    %483 = math.log %482 : vector<16x1xf32>
    %484 = vector.broadcast %483 : vector<16x1xf32> to vector<16x4xf32>
    %485 = arith.subf %479, %484 : vector<16x4xf32>
    %c0_179 = arith.constant 0 : index
    %c0_180 = arith.constant 0 : index
    %486 = vector.load %arg9[%c0_179, %c0_180] : memref<16x4xf32, #tpu.memory_space<vmem>>, vector<16x4xf32>
    tpu.vector_store %arg9[%c0_179, %c0_180], %485 {strides = array<i32>} : memref<16x4xf32, #tpu.memory_space<vmem>>, vector<16x4xf32>,
    return
  }
}

</mosaic_0001>

<llo_original>
// kernel: tpu_custom_call.1
$region0: #{tpu_custom_call.1}
  #allocation0 [shape = 'u32[]', space=smem, size = 0x4, offset = 0x4, fixed_abs, tag = 'smem constant byte address 0x4 - core index']
  #allocation1 [shape = 'u32[144,128]{1,0:T(1,128)}', space=vmem, size = 0x12000, scoped, tag = 'internal scratch']
  #allocation2 [shape = 'f32[16,64]{1,0:T(8,128)}', space=vmem, size = 0x2000, scoped, tag = 'scratch operand']
  #allocation3 [shape = 'f32[16,32]{1,0:T(8,128)}', space=vmem, size = 0x2000, scoped, tag = 'scratch operand']
  %s0 = inlined_call_operand.vmem [shape: f32[16,16], index: 0, kind: input, shape index: {}]
  %s1 = inlined_call_operand.vmem [shape: f32[16,16], index: 1, kind: input, shape index: {}]
  %s2 = inlined_call_operand.vmem [shape: f32[16,72], index: 2, kind: input, shape index: {}]
  %s3 = inlined_call_operand.vmem [shape: f32[8,16], index: 3, kind: input, shape index: {}]
  %s4 = inlined_call_operand.vmem [shape: f32[1,64], index: 4, kind: input, shape index: {}]
  %s5 = inlined_call_operand.vmem [shape: f32[64,40], index: 5, kind: input, shape index: {}]
  %s6 = inlined_call_operand.vmem [shape: f32[8,64], index: 6, kind: input, shape index: {}]
  %s7 = inlined_call_operand.vmem [shape: f32[1,4], index: 7, kind: input, shape index: {}]
  %s8 = inlined_call_operand.vmem [shape: f32[32,4], index: 8, kind: input, shape index: {}]
  %s9 = inlined_call_operand.vmem [shape: f32[16,4], index: 9, kind: output, shape index: {}]
  %s10 = sld [smem:[#allocation0]]
  $region46: #{tpu_custom_call.1} parent=0
    _
  %s12 = ssub.s32 1, %s10
  %s13 = scalar_select 0, %s12, %s10
  // Predicated region
  $region2: #{tpu_custom_call.1} parent=0 // pred_check
    _
  $region3: #{tpu_custom_call.1} parent=0 // pred_check_branch
    %15 = sbr.rel (0) target = $region5
  $region4: #{tpu_custom_call.1} parent=0 // pred_region
    _
  $region5: #{tpu_custom_call.1} parent=0 // pred_fallthru
    _
  // Predicated region
  $region6: #{tpu_custom_call.1} parent=0 // pred_check
    _
  $region7: #{tpu_custom_call.1} parent=0 // pred_check_branch
    %17 = sbr.rel (0) target = $region9
  $region8: #{tpu_custom_call.1} parent=0 // pred_region
    _
  $region9: #{tpu_custom_call.1} parent=0 // pred_fallthru
    _
  // Predicated region
  $region10: #{tpu_custom_call.1} parent=0 // pred_check
    _
  $region11: #{tpu_custom_call.1} parent=0 // pred_check_branch
    %19 = sbr.rel (0) target = $region13
  $region12: #{tpu_custom_call.1} parent=0 // pred_region
    _
  $region13: #{tpu_custom_call.1} parent=0 // pred_fallthru
    _
  // Predicated region
  $region14: #{tpu_custom_call.1} parent=0 // pred_check
    _
  $region15: #{tpu_custom_call.1} parent=0 // pred_check_branch
    %21 = sbr.rel (0) target = $region17
  $region16: #{tpu_custom_call.1} parent=0 // pred_region
    _
  $region17: #{tpu_custom_call.1} parent=0 // pred_fallthru
    _
  // Predicated region
  $region18: #{tpu_custom_call.1} parent=0 // pred_check
    _
  $region19: #{tpu_custom_call.1} parent=0 // pred_check_branch
    %23 = sbr.rel (0) target = $region21
  $region20: #{tpu_custom_call.1} parent=0 // pred_region
    _
  $region21: #{tpu_custom_call.1} parent=0 // pred_fallthru
    _
  // Predicated region
  $region22: #{tpu_custom_call.1} parent=0 // pred_check
    _
  $region23: #{tpu_custom_call.1} parent=0 // pred_check_branch
    %25 = sbr.rel (0) target = $region25
  $region24: #{tpu_custom_call.1} parent=0 // pred_region
    _
  $region25: #{tpu_custom_call.1} parent=0 // pred_fallthru
    _
  // Predicated region
  $region26: #{tpu_custom_call.1} parent=0 // pred_check
    _
  $region27: #{tpu_custom_call.1} parent=0 // pred_check_branch
    %27 = sbr.rel (0) target = $region29
  $region28: #{tpu_custom_call.1} parent=0 // pred_region
    _
  $region29: #{tpu_custom_call.1} parent=0 // pred_fallthru
    _
  // Predicated region
  $region30: #{tpu_custom_call.1} parent=0 // pred_check
    _
  $region31: #{tpu_custom_call.1} parent=0 // pred_check_branch
    %29 = sbr.rel (0) target = $region33
  $region32: #{tpu_custom_call.1} parent=0 // pred_region
    _
  $region33: #{tpu_custom_call.1} parent=0 // pred_fallthru
    _
  // Predicated region
  $region34: #{tpu_custom_call.1} parent=0 // pred_check
    _
  $region35: #{tpu_custom_call.1} parent=0 // pred_check_branch
    %31 = sbr.rel (0) target = $region37
  $region36: #{tpu_custom_call.1} parent=0 // pred_region
    _
  $region37: #{tpu_custom_call.1} parent=0 // pred_fallthru
    _
  %v32 = vld [vmem:[%s1] sm:$0xff]
  %v33 = vld [vmem:[%s1 + $0x8] sm:$0xff]
  %v34 = vld [vmem:[%s0] sm:$0xff]
  %v35 = vld [vmem:[%s0 + $0x8] sm:$0xff]
  %v36 = vld [vmem:[%s2] sm:$0xff]
  %v37 = vld [vmem:[%s2 + $0x8] sm:$0xff]
  %vm38 = vcmask 130048
  %v40 = vsel %vm38, %v34, 0
  %v43 = vsel %vm38, %v35, 0
  %45 = vmatprep.subr.mxu0 0.0
  %46 = vmatpush1.msra.mxu0 %v36
  %47 = vmatprep.subr.mxu0 0.0
  %48 = vmatpush1.msra.mxu0 %v37
  %49 = vmatprep.subr.mxu0 0.0
  %50 = vmatpush1.msra.mxu0 0.0
  %51 = vmatprep.subr.mxu0 0.0
  %52 = vmatpush1.msra.mxu0 0.0
  %53 = vmatprep.subr.mxu0 0.0
  %54 = vmatpush1.msra.mxu0 0.0
  %55 = vmatprep.subr.mxu0 0.0
  %56 = vmatpush1.msra.mxu0 0.0
  %57 = vmatprep.subr.mxu0 0.0
  %58 = vmatpush1.msra.mxu0 0.0
  %59 = vmatprep.subr.mxu0 0.0
  %60 = vmatpush1.msra.mxu0 0.0
  %61 = vmatprep.subr.mxu0 0.0
  %62 = vmatpush1.msra.mxu0 0.0
  %63 = vmatprep.subr.mxu0 0.0
  %64 = vmatpush1.msra.mxu0 0.0
  %65 = vmatprep.subr.mxu0 0.0
  %66 = vmatpush1.msra.mxu0 0.0
  %67 = vmatprep.subr.mxu0 0.0
  %68 = vmatpush1.msra.mxu0 0.0
  %69 = vmatprep.subr.mxu0 0.0
  %70 = vmatpush1.msra.mxu0 0.0
  %71 = vmatprep.subr.mxu0 0.0
  %72 = vmatpush1.msra.mxu0 0.0
  %73 = vmatprep.subr.mxu0 0.0
  %74 = vmatpush1.msra.mxu0 0.0
  %75 = vmatprep.subr.mxu0 0.0
  %76 = vmatpush1.msra.mxu0 0.0
  %77 = vmatprep.subr.mxu0 0.0
  %78 = vmatpush1.msra.mxu0 0.0
  %79 = vmatprep.subr.mxu0 0.0
  %80 = vmatpush1.msra.mxu0 0.0
  %81 = vmatprep.subr.mxu0 0.0
  %82 = vmatpush1.msra.mxu0 0.0
  %83 = vmatprep.subr.mxu0 0.0
  %84 = vmatpush1.msra.mxu0 0.0
  %85 = vmatprep.subr.mxu0 0.0
  %86 = vmatpush1.msra.mxu0 0.0
  %87 = vmatprep.subr.mxu0 0.0
  %88 = vmatpush1.msra.mxu0 0.0
  %89 = vmatprep.subr.mxu0 0.0
  %90 = vmatpush1.msra.mxu0 0.0
  %91 = vmatprep.subr.mxu0 0.0
  %92 = vmatpush1.msra.mxu0 0.0
  %93 = vmatprep.subr.mxu0 0.0
  %94 = vmatpush1.msra.mxu0 0.0
  %95 = vmatprep.subr.mxu0 0.0
  %96 = vmatpush1.msra.mxu0 0.0
  %97 = vmatprep.subr.mxu0 0.0
  %98 = vmatpush1.msra.mxu0 0.0
  %99 = vmatprep.subr.mxu0 0.0
  %100 = vmatpush1.msra.mxu0 0.0
  %101 = vmatprep.subr.mxu0 0.0
  %102 = vmatpush1.msra.mxu0 0.0
  %103 = vmatprep.subr.mxu0 0.0
  %104 = vmatpush1.msra.mxu0 0.0
  %105 = vmatprep.subr.mxu0 0.0
  %106 = vmatpush1.msra.mxu0 0.0
  %107 = vmatprep.subr.mxu0 0.0
  %108 = vmatpush1.msra.mxu0 0.0
  %109 = vmatprep.mubr.f32.mxu0 0.0
  %110 = vmatmul.mubr.f32.gmra.mrb[0].mxu0 %v40
  %v111 = vpop.f32.mrb[0].mxu0
  %v112 = vadd.f32 0.0, %v111
  %v113 = vpop.f32.mrb[0].mxu0
  %114 = vmatprep.mubr.f32.mxu0 0.0
  %115 = vmatmul.mubr.f32.gmra.mrb[0].mxu0 %v43
  %v116 = vpop.f32.mrb[0].mxu0
  %v117 = vadd.f32 0.0, %v116
  %v118 = vpop.f32.mrb[0].mxu0
  %119 = vdwg.mxu0
  %v120 = vld [vmem:[%s3] sm:$0xff]
  %v122 = vsel %vm38, %v120, 0
  %124 = vmatprep.subr.mxu0 0.0
  %125 = vmatpush1.xpose.msra.mxu0 %v40
  %126 = vmatprep.subr.mxu0 0.0
  %127 = vmatpush1.xpose.msra.mxu0 %v43
  %128 = vmatprep.subr.mxu0 0.0
  %129 = vmatpush1.xpose.msra.mxu0 0.0
  %130 = vmatprep.subr.mxu0 0.0
  %131 = vmatpush1.xpose.msra.mxu0 0.0
  %132 = vmatprep.subr.mxu0 0.0
  %133 = vmatpush1.xpose.msra.mxu0 0.0
  %134 = vmatprep.subr.mxu0 0.0
  %135 = vmatpush1.xpose.msra.mxu0 0.0
  %136 = vmatprep.subr.mxu0 0.0
  %137 = vmatpush1.xpose.msra.mxu0 0.0
  %138 = vmatprep.subr.mxu0 0.0
  %139 = vmatpush1.xpose.msra.mxu0 0.0
  %140 = vmatprep.subr.mxu0 0.0
  %141 = vmatpush1.xpose.msra.mxu0 0.0
  %142 = vmatprep.subr.mxu0 0.0
  %143 = vmatpush1.xpose.msra.mxu0 0.0
  %144 = vmatprep.subr.mxu0 0.0
  %145 = vmatpush1.xpose.msra.mxu0 0.0
  %146 = vmatprep.subr.mxu0 0.0
  %147 = vmatpush1.xpose.msra.mxu0 0.0
  %148 = vmatprep.subr.mxu0 0.0
  %149 = vmatpush1.xpose.msra.mxu0 0.0
  %150 = vmatprep.subr.mxu0 0.0
  %151 = vmatpush1.xpose.msra.mxu0 0.0
  %152 = vmatprep.subr.mxu0 0.0
  %153 = vmatpush1.xpose.msra.mxu0 0.0
  %154 = vmatprep.subr.mxu0 0.0
  %155 = vmatpush1.xpose.msra.mxu0 0.0
  %156 = vmatprep.subr.mxu0 0.0
  %157 = vmatpush1.xpose.msra.mxu0 0.0
  %158 = vmatprep.subr.mxu0 0.0
  %159 = vmatpush1.xpose.msra.mxu0 0.0
  %160 = vmatprep.subr.mxu0 0.0
  %161 = vmatpush1.xpose.msra.mxu0 0.0
  %162 = vmatprep.subr.mxu0 0.0
  %163 = vmatpush1.xpose.msra.mxu0 0.0
  %164 = vmatprep.subr.mxu0 0.0
  %165 = vmatpush1.xpose.msra.mxu0 0.0
  %166 = vmatprep.subr.mxu0 0.0
  %167 = vmatpush1.xpose.msra.mxu0 0.0
  %168 = vmatprep.subr.mxu0 0.0
  %169 = vmatpush1.xpose.msra.mxu0 0.0
  %170 = vmatprep.subr.mxu0 0.0
  %171 = vmatpush1.xpose.msra.mxu0 0.0
  %172 = vmatprep.subr.mxu0 0.0
  %173 = vmatpush1.xpose.msra.mxu0 0.0
  %174 = vmatprep.subr.mxu0 0.0
  %175 = vmatpush1.xpose.msra.mxu0 0.0
  %176 = vmatprep.subr.mxu0 0.0
  %177 = vmatpush1.xpose.msra.mxu0 0.0
  %178 = vmatprep.subr.mxu0 0.0
  %179 = vmatpush1.xpose.msra.mxu0 0.0
  %180 = vmatprep.subr.mxu0 0.0
  %181 = vmatpush1.xpose.msra.mxu0 0.0
  %182 = vmatprep.subr.mxu0 0.0
  %183 = vmatpush1.xpose.msra.mxu0 0.0
  %184 = vmatprep.subr.mxu0 0.0
  %185 = vmatpush1.xpose.msra.mxu0 0.0
  %186 = vmatprep.subr.mxu0 0.0
  %187 = vmatpush1.xpose.msra.mxu0 0.0
  %188 = vmatprep.mubr.f32.mxu0 0.0
  %189 = vmatmul.mubr.f32.gmra.mrb[0].mxu0 %v122
  %v190 = vpop.f32.mrb[0].mxu0
  %v191 = vadd.f32 0.0, %v190
  %v192 = vpop.f32.mrb[0].mxu0
  %193 = vdwg.mxu0
  %vm194 = vcmask 64512
  %v196 = vsel %vm194, %v112, 0
  %v199 = vsel %vm194, %v117, 0
  %201 = vmatprep.subr.mxu0 0.0
  %202 = vmatpush1.xpose.msra.mxu0 %v196
  %203 = vmatprep.subr.mxu0 0.0
  %204 = vmatpush1.xpose.msra.mxu0 %v199
  %205 = vmatprep.subr.mxu0 0.0
  %206 = vmatpush1.xpose.msra.mxu0 0.0
  %207 = vmatprep.subr.mxu0 0.0
  %208 = vmatpush1.xpose.msra.mxu0 0.0
  %209 = vmatprep.subr.mxu0 0.0
  %210 = vmatpush1.xpose.msra.mxu0 0.0
  %211 = vmatprep.subr.mxu0 0.0
  %212 = vmatpush1.xpose.msra.mxu0 0.0
  %213 = vmatprep.subr.mxu0 0.0
  %214 = vmatpush1.xpose.msra.mxu0 0.0
  %215 = vmatprep.subr.mxu0 0.0
  %216 = vmatpush1.xpose.msra.mxu0 0.0
  %217 = vmatprep.subr.mxu0 0.0
  %218 = vmatpush1.xpose.msra.mxu0 0.0
  %219 = vmatprep.subr.mxu0 0.0
  %220 = vmatpush1.xpose.msra.mxu0 0.0
  %221 = vmatprep.subr.mxu0 0.0
  %222 = vmatpush1.xpose.msra.mxu0 0.0
  %223 = vmatprep.subr.mxu0 0.0
  %224 = vmatpush1.xpose.msra.mxu0 0.0
  %225 = vmatprep.subr.mxu0 0.0
  %226 = vmatpush1.xpose.msra.mxu0 0.0
  %227 = vmatprep.subr.mxu0 0.0
  %228 = vmatpush1.xpose.msra.mxu0 0.0
  %229 = vmatprep.subr.mxu0 0.0
  %230 = vmatpush1.xpose.msra.mxu0 0.0
  %231 = vmatprep.subr.mxu0 0.0
  %232 = vmatpush1.xpose.msra.mxu0 0.0
  %233 = vmatprep.subr.mxu0 0.0
  %234 = vmatpush1.xpose.msra.mxu0 0.0
  %235 = vmatprep.subr.mxu0 0.0
  %236 = vmatpush1.xpose.msra.mxu0 0.0
  %237 = vmatprep.subr.mxu0 0.0
  %238 = vmatpush1.xpose.msra.mxu0 0.0
  %239 = vmatprep.subr.mxu0 0.0
  %240 = vmatpush1.xpose.msra.mxu0 0.0
  %241 = vmatprep.subr.mxu0 0.0
  %242 = vmatpush1.xpose.msra.mxu0 0.0
  %243 = vmatprep.subr.mxu0 0.0
  %244 = vmatpush1.xpose.msra.mxu0 0.0
  %245 = vmatprep.subr.mxu0 0.0
  %246 = vmatpush1.xpose.msra.mxu0 0.0
  %247 = vmatprep.subr.mxu0 0.0
  %248 = vmatpush1.xpose.msra.mxu0 0.0
  %249 = vmatprep.subr.mxu0 0.0
  %250 = vmatpush1.xpose.msra.mxu0 0.0
  %251 = vmatprep.subr.mxu0 0.0
  %252 = vmatpush1.xpose.msra.mxu0 0.0
  %253 = vmatprep.subr.mxu0 0.0
  %254 = vmatpush1.xpose.msra.mxu0 0.0
  %255 = vmatprep.subr.mxu0 0.0
  %256 = vmatpush1.xpose.msra.mxu0 0.0
  %257 = vmatprep.subr.mxu0 0.0
  %258 = vmatpush1.xpose.msra.mxu0 0.0
  %259 = vmatprep.subr.mxu0 0.0
  %260 = vmatpush1.xpose.msra.mxu0 0.0
  %261 = vmatprep.subr.mxu0 0.0
  %262 = vmatpush1.xpose.msra.mxu0 0.0
  %263 = vmatprep.subr.mxu0 0.0
  %264 = vmatpush1.xpose.msra.mxu0 0.0
  %265 = vmatprep.mubr.f32.mxu0 0.0
  %266 = vmatmul.mubr.f32.gmra.mrb[0].mxu0 %v196
  %v267 = vpop.f32.mrb[0].mxu0
  %v268 = vadd.f32 0.0, %v267
  %v269 = vpop.f32.mrb[0].mxu0
  %270 = vmatprep.mubr.f32.mxu0 0.0
  %271 = vmatmul.mubr.f32.gmra.mrb[0].mxu0 %v199
  %v272 = vpop.f32.mrb[0].mxu0
  %v273 = vadd.f32 0.0, %v272
  %v274 = vpop.f32.mrb[0].mxu0
  %275 = vdwg.mxu0
  %v276 = vmul.f32 %v268, 0.5
  %v277 = vmul.f32 %v273, 0.5
  %v278 = vtanh.pop %v276
  %v279 = vtanh.pop %v277
  %v280 = vmul.f32 %v278, 0.5
  %v281 = vmul.f32 %v279, 0.5
  %v282 = vadd.f32 %v280, 0.5
  %v283 = vadd.f32 %v281, 0.5
  %284 = vset.pattern.permute.xlu0 64
  %285 = vperm.xlu0 %284, %v112
  %v286 = vpop.permute.xlu0 %285
  %288 = vset.pattern.permute.xlu0 64
  %289 = vperm.xlu0 %288, %v117
  %v290 = vpop.permute.xlu0 %289
  %v292 = vlaneseq
  %v293 = vshrl.u32 %v292, 7
  %v294 = vsub.s32 0, %v293
  %v295 = vrot.slane %v191, %v294
  %v296 = vadd.f32 %v286, %v295
  %v297 = vadd.f32 %v290, %v295
  %v298 = vmul.f32 %v296, %v282
  %v299 = vmul.f32 %v297, %v283
  %vm300 = vcmp.ge.f32.partialorder %v298, 0.0
  %vm301 = vcmp.ge.f32.partialorder %v299, 0.0
  %v302 = vmul.f32 %v298, 0.2
  %v303 = vmul.f32 %v299, 0.2
  %v304 = vsel %vm300, %v298, %v302
  %v305 = vsel %vm301, %v299, %v303
  %v306 = vadd.f32 %v304, %v32
  %v307 = vadd.f32 %v305, %v33
  %v308 = vmul.f32 %v306, 1.442695
  %v309 = vpow.pop %v308
  %v310 = vmul.f32 %v307, 1.442695
  %v311 = vpow.pop %v310
  %v312 = vsel %vm38, %v309, 0.0
  %313 = vadd.xlane.f32.xlu0 %v312
  %v314 = vpop.xlane.xlu0 %313
  %v315 = vsel %vm38, %v311, 0.0
  %316 = vadd.xlane.f32.xlu0 %v315
  %v317 = vpop.xlane.xlu0 %316
  %v318 = vrcp.pop %v314
  %v319 = vmul.f32 %v309, %v318
  %v320 = vrcp.pop %v317
  %v321 = vmul.f32 %v311, %v320
  %v323 = vsel %vm38, %v319, 0
  %v326 = vsel %vm38, %v321, 0
  %328 = vmatprep.subr.mxu0 0.0
  %329 = vmatpush1.msra.mxu0 %v112
  %330 = vmatprep.subr.mxu0 0.0
  %331 = vmatpush1.msra.mxu0 %v117
  %332 = vmatprep.subr.mxu0 0.0
  %333 = vmatpush1.msra.mxu0 0.0
  %334 = vmatprep.subr.mxu0 0.0
  %335 = vmatpush1.msra.mxu0 0.0
  %336 = vmatprep.subr.mxu0 0.0
  %337 = vmatpush1.msra.mxu0 0.0
  %338 = vmatprep.subr.mxu0 0.0
  %339 = vmatpush1.msra.mxu0 0.0
  %340 = vmatprep.subr.mxu0 0.0
  %341 = vmatpush1.msra.mxu0 0.0
  %342 = vmatprep.subr.mxu0 0.0
  %343 = vmatpush1.msra.mxu0 0.0
  %344 = vmatprep.subr.mxu0 0.0
  %345 = vmatpush1.msra.mxu0 0.0
  %346 = vmatprep.subr.mxu0 0.0
  %347 = vmatpush1.msra.mxu0 0.0
  %348 = vmatprep.subr.mxu0 0.0
  %349 = vmatpush1.msra.mxu0 0.0
  %350 = vmatprep.subr.mxu0 0.0
  %351 = vmatpush1.msra.mxu0 0.0
  %352 = vmatprep.subr.mxu0 0.0
  %353 = vmatpush1.msra.mxu0 0.0
  %354 = vmatprep.subr.mxu0 0.0
  %355 = vmatpush1.msra.mxu0 0.0
  %356 = vmatprep.subr.mxu0 0.0
  %357 = vmatpush1.msra.mxu0 0.0
  %358 = vmatprep.subr.mxu0 0.0
  %359 = vmatpush1.msra.mxu0 0.0
  %360 = vmatprep.subr.mxu0 0.0
  %361 = vmatpush1.msra.mxu0 0.0
  %362 = vmatprep.subr.mxu0 0.0
  %363 = vmatpush1.msra.mxu0 0.0
  %364 = vmatprep.subr.mxu0 0.0
  %365 = vmatpush1.msra.mxu0 0.0
  %366 = vmatprep.subr.mxu0 0.0
  %367 = vmatpush1.msra.mxu0 0.0
  %368 = vmatprep.subr.mxu0 0.0
  %369 = vmatpush1.msra.mxu0 0.0
  %370 = vmatprep.subr.mxu0 0.0
  %371 = vmatpush1.msra.mxu0 0.0
  %372 = vmatprep.subr.mxu0 0.0
  %373 = vmatpush1.msra.mxu0 0.0
  %374 = vmatprep.subr.mxu0 0.0
  %375 = vmatpush1.msra.mxu0 0.0
  %376 = vmatprep.subr.mxu0 0.0
  %377 = vmatpush1.msra.mxu0 0.0
  %378 = vmatprep.subr.mxu0 0.0
  %379 = vmatpush1.msra.mxu0 0.0
  %380 = vmatprep.subr.mxu0 0.0
  %381 = vmatpush1.msra.mxu0 0.0
  %382 = vmatprep.subr.mxu0 0.0
  %383 = vmatpush1.msra.mxu0 0.0
  %384 = vmatprep.subr.mxu0 0.0
  %385 = vmatpush1.msra.mxu0 0.0
  %386 = vmatprep.subr.mxu0 0.0
  %387 = vmatpush1.msra.mxu0 0.0
  %388 = vmatprep.subr.mxu0 0.0
  %389 = vmatpush1.msra.mxu0 0.0
  %390 = vmatprep.subr.mxu0 0.0
  %391 = vmatpush1.msra.mxu0 0.0
  %392 = vmatprep.mubr.f32.mxu0 0.0
  %393 = vmatmul.mubr.f32.gmra.mrb[0].mxu0 %v323
  %v394 = vpop.f32.mrb[0].mxu0
  %v395 = vadd.f32 0.0, %v394
  %v396 = vpop.f32.mrb[0].mxu0
  %397 = vmatprep.mubr.f32.mxu0 0.0
  %398 = vmatmul.mubr.f32.gmra.mrb[0].mxu0 %v326
  %v399 = vpop.f32.mrb[0].mxu0
  %v400 = vadd.f32 0.0, %v399
  %v401 = vpop.f32.mrb[0].mxu0
  %402 = vdwg.mxu0
  %403 = vst.msk [vmem:[#allocation2] sm:$0xff] %vm194, %v395
  %404 = vst.msk [vmem:[#allocation2 + $0x8] sm:$0xff] %vm194, %v400
  %405 = vrot.lane.b32.xlu0 %v112, 120
  %v406 = vpop.permute.xlu0 %405
  %407 = vrot.lane.b32.xlu0 %v117, 120
  %v408 = vpop.permute.xlu0 %407
  %v409 = vsel %vm194, %v406, 0
  %v411 = vsel %vm194, %v408, 0
  %413 = vmatprep.subr.mxu0 0.0
  %414 = vmatpush1.xpose.msra.mxu0 %v409
  %415 = vmatprep.subr.mxu0 0.0
  %416 = vmatpush1.xpose.msra.mxu0 %v411
  %417 = vmatprep.subr.mxu0 0.0
  %418 = vmatpush1.xpose.msra.mxu0 0.0
  %419 = vmatprep.subr.mxu0 0.0
  %420 = vmatpush1.xpose.msra.mxu0 0.0
  %421 = vmatprep.subr.mxu0 0.0
  %422 = vmatpush1.xpose.msra.mxu0 0.0
  %423 = vmatprep.subr.mxu0 0.0
  %424 = vmatpush1.xpose.msra.mxu0 0.0
  %425 = vmatprep.subr.mxu0 0.0
  %426 = vmatpush1.xpose.msra.mxu0 0.0
  %427 = vmatprep.subr.mxu0 0.0
  %428 = vmatpush1.xpose.msra.mxu0 0.0
  %429 = vmatprep.subr.mxu0 0.0
  %430 = vmatpush1.xpose.msra.mxu0 0.0
  %431 = vmatprep.subr.mxu0 0.0
  %432 = vmatpush1.xpose.msra.mxu0 0.0
  %433 = vmatprep.subr.mxu0 0.0
  %434 = vmatpush1.xpose.msra.mxu0 0.0
  %435 = vmatprep.subr.mxu0 0.0
  %436 = vmatpush1.xpose.msra.mxu0 0.0
  %437 = vmatprep.subr.mxu0 0.0
  %438 = vmatpush1.xpose.msra.mxu0 0.0
  %439 = vmatprep.subr.mxu0 0.0
  %440 = vmatpush1.xpose.msra.mxu0 0.0
  %441 = vmatprep.subr.mxu0 0.0
  %442 = vmatpush1.xpose.msra.mxu0 0.0
  %443 = vmatprep.subr.mxu0 0.0
  %444 = vmatpush1.xpose.msra.mxu0 0.0
  %445 = vmatprep.subr.mxu0 0.0
  %446 = vmatpush1.xpose.msra.mxu0 0.0
  %447 = vmatprep.subr.mxu0 0.0
  %448 = vmatpush1.xpose.msra.mxu0 0.0
  %449 = vmatprep.subr.mxu0 0.0
  %450 = vmatpush1.xpose.msra.mxu0 0.0
  %451 = vmatprep.subr.mxu0 0.0
  %452 = vmatpush1.xpose.msra.mxu0 0.0
  %453 = vmatprep.subr.mxu0 0.0
  %454 = vmatpush1.xpose.msra.mxu0 0.0
  %455 = vmatprep.subr.mxu0 0.0
  %456 = vmatpush1.xpose.msra.mxu0 0.0
  %457 = vmatprep.subr.mxu0 0.0
  %458 = vmatpush1.xpose.msra.mxu0 0.0
  %459 = vmatprep.subr.mxu0 0.0
  %460 = vmatpush1.xpose.msra.mxu0 0.0
  %461 = vmatprep.subr.mxu0 0.0
  %462 = vmatpush1.xpose.msra.mxu0 0.0
  %463 = vmatprep.subr.mxu0 0.0
  %464 = vmatpush1.xpose.msra.mxu0 0.0
  %465 = vmatprep.subr.mxu0 0.0
  %466 = vmatpush1.xpose.msra.mxu0 0.0
  %467 = vmatprep.subr.mxu0 0.0
  %468 = vmatpush1.xpose.msra.mxu0 0.0
  %469 = vmatprep.subr.mxu0 0.0
  %470 = vmatpush1.xpose.msra.mxu0 0.0
  %471 = vmatprep.subr.mxu0 0.0
  %472 = vmatpush1.xpose.msra.mxu0 0.0
  %473 = vmatprep.subr.mxu0 0.0
  %474 = vmatpush1.xpose.msra.mxu0 0.0
  %475 = vmatprep.subr.mxu0 0.0
  %476 = vmatpush1.xpose.msra.mxu0 0.0
  %477 = vmatprep.mubr.f32.mxu0 0.0
  %478 = vmatmul.mubr.f32.gmra.mrb[0].mxu0 %v409
  %v479 = vpop.f32.mrb[0].mxu0
  %v480 = vadd.f32 0.0, %v479
  %v481 = vpop.f32.mrb[0].mxu0
  %482 = vmatprep.mubr.f32.mxu0 0.0
  %483 = vmatmul.mubr.f32.gmra.mrb[0].mxu0 %v411
  %v484 = vpop.f32.mrb[0].mxu0
  %v485 = vadd.f32 0.0, %v484
  %v486 = vpop.f32.mrb[0].mxu0
  %487 = vdwg.mxu0
  %v488 = vmul.f32 %v480, 0.5
  %v489 = vmul.f32 %v485, 0.5
  %v490 = vtanh.pop %v488
  %v491 = vtanh.pop %v489
  %v492 = vmul.f32 %v490, 0.5
  %v493 = vmul.f32 %v491, 0.5
  %v494 = vadd.f32 %v492, 0.5
  %v495 = vadd.f32 %v493, 0.5
  %496 = vset.pattern.permute.xlu0 65
  %497 = vperm.xlu0 %496, %v112
  %v498 = vpop.permute.xlu0 %497
  %500 = vset.pattern.permute.xlu0 65
  %501 = vperm.xlu0 %500, %v117
  %v502 = vpop.permute.xlu0 %501
  %v504 = vlaneseq
  %v505 = vshrl.u32 %v504, 7
  %v506 = vsub.s32 1, %v505
  %v507 = vrot.slane %v191, %v506
  %v508 = vadd.f32 %v498, %v507
  %v509 = vadd.f32 %v502, %v507
  %v510 = vmul.f32 %v508, %v494
  %v511 = vmul.f32 %v509, %v495
  %vm512 = vcmp.ge.f32.partialorder %v510, 0.0
  %vm513 = vcmp.ge.f32.partialorder %v511, 0.0
  %v514 = vmul.f32 %v510, 0.2
  %v515 = vmul.f32 %v511, 0.2
  %v516 = vsel %vm512, %v510, %v514
  %v517 = vsel %vm513, %v511, %v515
  %v518 = vadd.f32 %v516, %v32
  %v519 = vadd.f32 %v517, %v33
  %v520 = vmul.f32 %v518, 1.442695
  %v521 = vpow.pop %v520
  %v522 = vmul.f32 %v519, 1.442695
  %v523 = vpow.pop %v522
  %v524 = vsel %vm38, %v521, 0.0
  %525 = vadd.xlane.f32.xlu0 %v524
  %v526 = vpop.xlane.xlu0 %525
  %v527 = vsel %vm38, %v523, 0.0
  %528 = vadd.xlane.f32.xlu0 %v527
  %v529 = vpop.xlane.xlu0 %528
  %v530 = vrcp.pop %v526
  %v531 = vmul.f32 %v521, %v530
  %v532 = vrcp.pop %v529
  %v533 = vmul.f32 %v523, %v532
  %v537 = vsel %vm38, %v531, 0
  %v540 = vsel %vm38, %v533, 0
  %542 = vmatprep.subr.mxu0 0.0
  %543 = vmatpush1.msra.mxu0 %v406
  %544 = vmatprep.subr.mxu0 0.0
  %545 = vmatpush1.msra.mxu0 %v408
  %546 = vmatprep.subr.mxu0 0.0
  %547 = vmatpush1.msra.mxu0 0.0
  %548 = vmatprep.subr.mxu0 0.0
  %549 = vmatpush1.msra.mxu0 0.0
  %550 = vmatprep.subr.mxu0 0.0
  %551 = vmatpush1.msra.mxu0 0.0
  %552 = vmatprep.subr.mxu0 0.0
  %553 = vmatpush1.msra.mxu0 0.0
  %554 = vmatprep.subr.mxu0 0.0
  %555 = vmatpush1.msra.mxu0 0.0
  %556 = vmatprep.subr.mxu0 0.0
  %557 = vmatpush1.msra.mxu0 0.0
  %558 = vmatprep.subr.mxu0 0.0
  %559 = vmatpush1.msra.mxu0 0.0
  %560 = vmatprep.subr.mxu0 0.0
  %561 = vmatpush1.msra.mxu0 0.0
  %562 = vmatprep.subr.mxu0 0.0
  %563 = vmatpush1.msra.mxu0 0.0
  %564 = vmatprep.subr.mxu0 0.0
  %565 = vmatpush1.msra.mxu0 0.0
  %566 = vmatprep.subr.mxu0 0.0
  %567 = vmatpush1.msra.mxu0 0.0
  %568 = vmatprep.subr.mxu0 0.0
  %569 = vmatpush1.msra.mxu0 0.0
  %570 = vmatprep.subr.mxu0 0.0
  %571 = vmatpush1.msra.mxu0 0.0
  %572 = vmatprep.subr.mxu0 0.0
  %573 = vmatpush1.msra.mxu0 0.0
  %574 = vmatprep.subr.mxu0 0.0
  %575 = vmatpush1.msra.mxu0 0.0
  %576 = vmatprep.subr.mxu0 0.0
  %577 = vmatpush1.msra.mxu0 0.0
  %578 = vmatprep.subr.mxu0 0.0
  %579 = vmatpush1.msra.mxu0 0.0
  %580 = vmatprep.subr.mxu0 0.0
  %581 = vmatpush1.msra.mxu0 0.0
  %582 = vmatprep.subr.mxu0 0.0
  %583 = vmatpush1.msra.mxu0 0.0
  %584 = vmatprep.subr.mxu0 0.0
  %585 = vmatpush1.msra.mxu0 0.0
  %586 = vmatprep.subr.mxu0 0.0
  %587 = vmatpush1.msra.mxu0 0.0
  %588 = vmatprep.subr.mxu0 0.0
  %589 = vmatpush1.msra.mxu0 0.0
  %590 = vmatprep.subr.mxu0 0.0
  %591 = vmatpush1.msra.mxu0 0.0
  %592 = vmatprep.subr.mxu0 0.0
  %593 = vmatpush1.msra.mxu0 0.0
  %594 = vmatprep.subr.mxu0 0.0
  %595 = vmatpush1.msra.mxu0 0.0
  %596 = vmatprep.subr.mxu0 0.0
  %597 = vmatpush1.msra.mxu0 0.0
  %598 = vmatprep.subr.mxu0 0.0
  %599 = vmatpush1.msra.mxu0 0.0
  %600 = vmatprep.subr.mxu0 0.0
  %601 = vmatpush1.msra.mxu0 0.0
  %602 = vmatprep.subr.mxu0 0.0
  %603 = vmatpush1.msra.mxu0 0.0
  %604 = vmatprep.subr.mxu0 0.0
  %605 = vmatpush1.msra.mxu0 0.0
  %606 = vmatprep.mubr.f32.mxu0 0.0
  %607 = vmatmul.mubr.f32.gmra.mrb[0].mxu0 %v537
  %v608 = vpop.f32.mrb[0].mxu0
  %v609 = vadd.f32 0.0, %v608
  %v610 = vpop.f32.mrb[0].mxu0
  %611 = vmatprep.mubr.f32.mxu0 0.0
  %612 = vmatmul.mubr.f32.gmra.mrb[0].mxu0 %v540
  %v613 = vpop.f32.mrb[0].mxu0
  %v614 = vadd.f32 0.0, %v613
  %v615 = vpop.f32.mrb[0].mxu0
  %616 = vdwg.mxu0
  %619 = vrot.lane.b32.xlu0 %v609, 8
  %v620 = vpop.permute.xlu0 %619
  %621 = vrot.lane.b32.xlu0 %v614, 8
  %v622 = vpop.permute.xlu0 %621
  %vm625 = vcmask 130112
  %626 = vst.msk [vmem:[#allocation2] sm:$0xff] %vm625, %v620
  %627 = vst.msk [vmem:[#allocation2 + $0x8] sm:$0xff] %vm625, %v622
  %628 = vrot.lane.b32.xlu0 %v112, 112
  %v629 = vpop.permute.xlu0 %628
  %630 = vrot.lane.b32.xlu0 %v117, 112
  %v631 = vpop.permute.xlu0 %630
  %v632 = vsel %vm194, %v629, 0
  %v634 = vsel %vm194, %v631, 0
  %636 = vmatprep.subr.mxu0 0.0
  %637 = vmatpush1.xpose.msra.mxu0 %v632
  %638 = vmatprep.subr.mxu0 0.0
  %639 = vmatpush1.xpose.msra.mxu0 %v634
  %640 = vmatprep.subr.mxu0 0.0
  %641 = vmatpush1.xpose.msra.mxu0 0.0
  %642 = vmatprep.subr.mxu0 0.0
  %643 = vmatpush1.xpose.msra.mxu0 0.0
  %644 = vmatprep.subr.mxu0 0.0
  %645 = vmatpush1.xpose.msra.mxu0 0.0
  %646 = vmatprep.subr.mxu0 0.0
  %647 = vmatpush1.xpose.msra.mxu0 0.0
  %648 = vmatprep.subr.mxu0 0.0
  %649 = vmatpush1.xpose.msra.mxu0 0.0
  %650 = vmatprep.subr.mxu0 0.0
  %651 = vmatpush1.xpose.msra.mxu0 0.0
  %652 = vmatprep.subr.mxu0 0.0
  %653 = vmatpush1.xpose.msra.mxu0 0.0
  %654 = vmatprep.subr.mxu0 0.0
  %655 = vmatpush1.xpose.msra.mxu0 0.0
  %656 = vmatprep.subr.mxu0 0.0
  %657 = vmatpush1.xpose.msra.mxu0 0.0
  %658 = vmatprep.subr.mxu0 0.0
  %659 = vmatpush1.xpose.msra.mxu0 0.0
  %660 = vmatprep.subr.mxu0 0.0
  %661 = vmatpush1.xpose.msra.mxu0 0.0
  %662 = vmatprep.subr.mxu0 0.0
  %663 = vmatpush1.xpose.msra.mxu0 0.0
  %664 = vmatprep.subr.mxu0 0.0
  %665 = vmatpush1.xpose.msra.mxu0 0.0
  %666 = vmatprep.subr.mxu0 0.0
  %667 = vmatpush1.xpose.msra.mxu0 0.0
  %668 = vmatprep.subr.mxu0 0.0
  %669 = vmatpush1.xpose.msra.mxu0 0.0
  %670 = vmatprep.subr.mxu0 0.0
  %671 = vmatpush1.xpose.msra.mxu0 0.0
  %672 = vmatprep.subr.mxu0 0.0
  %673 = vmatpush1.xpose.msra.mxu0 0.0
  %674 = vmatprep.subr.mxu0 0.0
  %675 = vmatpush1.xpose.msra.mxu0 0.0
  %676 = vmatprep.subr.mxu0 0.0
  %677 = vmatpush1.xpose.msra.mxu0 0.0
  %678 = vmatprep.subr.mxu0 0.0
  %679 = vmatpush1.xpose.msra.mxu0 0.0
  %680 = vmatprep.subr.mxu0 0.0
  %681 = vmatpush1.xpose.msra.mxu0 0.0
  %682 = vmatprep.subr.mxu0 0.0
  %683 = vmatpush1.xpose.msra.mxu0 0.0
  %684 = vmatprep.subr.mxu0 0.0
  %685 = vmatpush1.xpose.msra.mxu0 0.0
  %686 = vmatprep.subr.mxu0 0.0
  %687 = vmatpush1.xpose.msra.mxu0 0.0
  %688 = vmatprep.subr.mxu0 0.0
  %689 = vmatpush1.xpose.msra.mxu0 0.0
  %690 = vmatprep.subr.mxu0 0.0
  %691 = vmatpush1.xpose.msra.mxu0 0.0
  %692 = vmatprep.subr.mxu0 0.0
  %693 = vmatpush1.xpose.msra.mxu0 0.0
  %694 = vmatprep.subr.mxu0 0.0
  %695 = vmatpush1.xpose.msra.mxu0 0.0
  %696 = vmatprep.subr.mxu0 0.0
  %697 = vmatpush1.xpose.msra.mxu0 0.0
  %698 = vmatprep.subr.mxu0 0.0
  %699 = vmatpush1.xpose.msra.mxu0 0.0
  %700 = vmatprep.mubr.f32.mxu0 0.0
  %701 = vmatmul.mubr.f32.gmra.mrb[0].mxu0 %v632
  %v702 = vpop.f32.mrb[0].mxu0
  %v703 = vadd.f32 0.0, %v702
  %v704 = vpop.f32.mrb[0].mxu0
  %705 = vmatprep.mubr.f32.mxu0 0.0
  %706 = vmatmul.mubr.f32.gmra.mrb[0].mxu0 %v634
  %v707 = vpop.f32.mrb[0].mxu0
  %v708 = vadd.f32 0.0, %v707
  %v709 = vpop.f32.mrb[0].mxu0
  %710 = vdwg.mxu0
  %v711 = vmul.f32 %v703, 0.5
  %v712 = vmul.f32 %v708, 0.5
  %v713 = vtanh.pop %v711
  %v714 = vtanh.pop %v712
  %v715 = vmul.f32 %v713, 0.5
  %v716 = vmul.f32 %v714, 0.5
  %v717 = vadd.f32 %v715, 0.5
  %v718 = vadd.f32 %v716, 0.5
  %719 = vset.pattern.permute.xlu0 66
  %720 = vperm.xlu0 %719, %v112
  %v721 = vpop.permute.xlu0 %720
  %723 = vset.pattern.permute.xlu0 66
  %724 = vperm.xlu0 %723, %v117
  %v725 = vpop.permute.xlu0 %724
  %v727 = vlaneseq
  %v728 = vshrl.u32 %v727, 7
  %v729 = vsub.s32 2, %v728
  %v730 = vrot.slane %v191, %v729
  %v731 = vadd.f32 %v721, %v730
  %v732 = vadd.f32 %v725, %v730
  %v733 = vmul.f32 %v731, %v717
  %v734 = vmul.f32 %v732, %v718
  %vm735 = vcmp.ge.f32.partialorder %v733, 0.0
  %vm736 = vcmp.ge.f32.partialorder %v734, 0.0
  %v737 = vmul.f32 %v733, 0.2
  %v738 = vmul.f32 %v734, 0.2
  %v739 = vsel %vm735, %v733, %v737
  %v740 = vsel %vm736, %v734, %v738
  %v741 = vadd.f32 %v739, %v32
  %v742 = vadd.f32 %v740, %v33
  %v743 = vmul.f32 %v741, 1.442695
  %v744 = vpow.pop %v743
  %v745 = vmul.f32 %v742, 1.442695
  %v746 = vpow.pop %v745
  %v747 = vsel %vm38, %v744, 0.0
  %748 = vadd.xlane.f32.xlu0 %v747
  %v749 = vpop.xlane.xlu0 %748
  %v750 = vsel %vm38, %v746, 0.0
  %751 = vadd.xlane.f32.xlu0 %v750
  %v752 = vpop.xlane.xlu0 %751
  %v753 = vrcp.pop %v749
  %v754 = vmul.f32 %v744, %v753
  %v755 = vrcp.pop %v752
  %v756 = vmul.f32 %v746, %v755
  %v760 = vsel %vm38, %v754, 0
  %v763 = vsel %vm38, %v756, 0
  %765 = vmatprep.subr.mxu0 0.0
  %766 = vmatpush1.msra.mxu0 %v629
  %767 = vmatprep.subr.mxu0 0.0
  %768 = vmatpush1.msra.mxu0 %v631
  %769 = vmatprep.subr.mxu0 0.0
  %770 = vmatpush1.msra.mxu0 0.0
  %771 = vmatprep.subr.mxu0 0.0
  %772 = vmatpush1.msra.mxu0 0.0
  %773 = vmatprep.subr.mxu0 0.0
  %774 = vmatpush1.msra.mxu0 0.0
  %775 = vmatprep.subr.mxu0 0.0
  %776 = vmatpush1.msra.mxu0 0.0
  %777 = vmatprep.subr.mxu0 0.0
  %778 = vmatpush1.msra.mxu0 0.0
  %779 = vmatprep.subr.mxu0 0.0
  %780 = vmatpush1.msra.mxu0 0.0
  %781 = vmatprep.subr.mxu0 0.0
  %782 = vmatpush1.msra.mxu0 0.0
  %783 = vmatprep.subr.mxu0 0.0
  %784 = vmatpush1.msra.mxu0 0.0
  %785 = vmatprep.subr.mxu0 0.0
  %786 = vmatpush1.msra.mxu0 0.0
  %787 = vmatprep.subr.mxu0 0.0
  %788 = vmatpush1.msra.mxu0 0.0
  %789 = vmatprep.subr.mxu0 0.0
  %790 = vmatpush1.msra.mxu0 0.0
  %791 = vmatprep.subr.mxu0 0.0
  %792 = vmatpush1.msra.mxu0 0.0
  %793 = vmatprep.subr.mxu0 0.0
  %794 = vmatpush1.msra.mxu0 0.0
  %795 = vmatprep.subr.mxu0 0.0
  %796 = vmatpush1.msra.mxu0 0.0
  %797 = vmatprep.subr.mxu0 0.0
  %798 = vmatpush1.msra.mxu0 0.0
  %799 = vmatprep.subr.mxu0 0.0
  %800 = vmatpush1.msra.mxu0 0.0
  %801 = vmatprep.subr.mxu0 0.0
  %802 = vmatpush1.msra.mxu0 0.0
  %803 = vmatprep.subr.mxu0 0.0
  %804 = vmatpush1.msra.mxu0 0.0
  %805 = vmatprep.subr.mxu0 0.0
  %806 = vmatpush1.msra.mxu0 0.0
  %807 = vmatprep.subr.mxu0 0.0
  %808 = vmatpush1.msra.mxu0 0.0
  %809 = vmatprep.subr.mxu0 0.0
  %810 = vmatpush1.msra.mxu0 0.0
  %811 = vmatprep.subr.mxu0 0.0
  %812 = vmatpush1.msra.mxu0 0.0
  %813 = vmatprep.subr.mxu0 0.0
  %814 = vmatpush1.msra.mxu0 0.0
  %815 = vmatprep.subr.mxu0 0.0
  %816 = vmatpush1.msra.mxu0 0.0
  %817 = vmatprep.subr.mxu0 0.0
  %818 = vmatpush1.msra.mxu0 0.0
  %819 = vmatprep.subr.mxu0 0.0
  %820 = vmatpush1.msra.mxu0 0.0
  %821 = vmatprep.subr.mxu0 0.0
  %822 = vmatpush1.msra.mxu0 0.0
  %823 = vmatprep.subr.mxu0 0.0
  %824 = vmatpush1.msra.mxu0 0.0
  %825 = vmatprep.subr.mxu0 0.0
  %826 = vmatpush1.msra.mxu0 0.0
  %827 = vmatprep.subr.mxu0 0.0
  %828 = vmatpush1.msra.mxu0 0.0
  %829 = vmatprep.mubr.f32.mxu0 0.0
  %830 = vmatmul.mubr.f32.gmra.mrb[0].mxu0 %v760
  %v831 = vpop.f32.mrb[0].mxu0
  %v832 = vadd.f32 0.0, %v831
  %v833 = vpop.f32.mrb[0].mxu0
  %834 = vmatprep.mubr.f32.mxu0 0.0
  %835 = vmatmul.mubr.f32.gmra.mrb[0].mxu0 %v763
  %v836 = vpop.f32.mrb[0].mxu0
  %v837 = vadd.f32 0.0, %v836
  %v838 = vpop.f32.mrb[0].mxu0
  %839 = vdwg.mxu0
  %842 = vrot.lane.b32.xlu0 %v832, 16
  %v843 = vpop.permute.xlu0 %842
  %844 = vrot.lane.b32.xlu0 %v837, 16
  %v845 = vpop.permute.xlu0 %844
  %vm848 = vcmask 195712
  %849 = vst.msk [vmem:[#allocation2] sm:$0xff] %vm848, %v843
  %850 = vst.msk [vmem:[#allocation2 + $0x8] sm:$0xff] %vm848, %v845
  %851 = vrot.lane.b32.xlu0 %v112, 104
  %v852 = vpop.permute.xlu0 %851
  %853 = vrot.lane.b32.xlu0 %v117, 104
  %v854 = vpop.permute.xlu0 %853
  %v855 = vsel %vm194, %v852, 0
  %v857 = vsel %vm194, %v854, 0
  %859 = vmatprep.subr.mxu0 0.0
  %860 = vmatpush1.xpose.msra.mxu0 %v855
  %861 = vmatprep.subr.mxu0 0.0
  %862 = vmatpush1.xpose.msra.mxu0 %v857
  %863 = vmatprep.subr.mxu0 0.0
  %864 = vmatpush1.xpose.msra.mxu0 0.0
  %865 = vmatprep.subr.mxu0 0.0
  %866 = vmatpush1.xpose.msra.mxu0 0.0
  %867 = vmatprep.subr.mxu0 0.0
  %868 = vmatpush1.xpose.msra.mxu0 0.0
  %869 = vmatprep.subr.mxu0 0.0
  %870 = vmatpush1.xpose.msra.mxu0 0.0
  %871 = vmatprep.subr.mxu0 0.0
  %872 = vmatpush1.xpose.msra.mxu0 0.0
  %873 = vmatprep.subr.mxu0 0.0
  %874 = vmatpush1.xpose.msra.mxu0 0.0
  %875 = vmatprep.subr.mxu0 0.0
  %876 = vmatpush1.xpose.msra.mxu0 0.0
  %877 = vmatprep.subr.mxu0 0.0
  %878 = vmatpush1.xpose.msra.mxu0 0.0
  %879 = vmatprep.subr.mxu0 0.0
  %880 = vmatpush1.xpose.msra.mxu0 0.0
  %881 = vmatprep.subr.mxu0 0.0
  %882 = vmatpush1.xpose.msra.mxu0 0.0
  %883 = vmatprep.subr.mxu0 0.0
  %884 = vmatpush1.xpose.msra.mxu0 0.0
  %885 = vmatprep.subr.mxu0 0.0
  %886 = vmatpush1.xpose.msra.mxu0 0.0
  %887 = vmatprep.subr.mxu0 0.0
  %888 = vmatpush1.xpose.msra.mxu0 0.0
  %889 = vmatprep.subr.mxu0 0.0
  %890 = vmatpush1.xpose.msra.mxu0 0.0
  %891 = vmatprep.subr.mxu0 0.0
  %892 = vmatpush1.xpose.msra.mxu0 0.0
  %893 = vmatprep.subr.mxu0 0.0
  %894 = vmatpush1.xpose.msra.mxu0 0.0
  %895 = vmatprep.subr.mxu0 0.0
  %896 = vmatpush1.xpose.msra.mxu0 0.0
  %897 = vmatprep.subr.mxu0 0.0
  %898 = vmatpush1.xpose.msra.mxu0 0.0
  %899 = vmatprep.subr.mxu0 0.0
  %900 = vmatpush1.xpose.msra.mxu0 0.0
  %901 = vmatprep.subr.mxu0 0.0
  %902 = vmatpush1.xpose.msra.mxu0 0.0
  %903 = vmatprep.subr.mxu0 0.0
  %904 = vmatpush1.xpose.msra.mxu0 0.0
  %905 = vmatprep.subr.mxu0 0.0
  %906 = vmatpush1.xpose.msra.mxu0 0.0
  %907 = vmatprep.subr.mxu0 0.0
  %908 = vmatpush1.xpose.msra.mxu0 0.0
  %909 = vmatprep.subr.mxu0 0.0
  %910 = vmatpush1.xpose.msra.mxu0 0.0
  %911 = vmatprep.subr.mxu0 0.0
  %912 = vmatpush1.xpose.msra.mxu0 0.0
  %913 = vmatprep.subr.mxu0 0.0
  %914 = vmatpush1.xpose.msra.mxu0 0.0
  %915 = vmatprep.subr.mxu0 0.0
  %916 = vmatpush1.xpose.msra.mxu0 0.0
  %917 = vmatprep.subr.mxu0 0.0
  %918 = vmatpush1.xpose.msra.mxu0 0.0
  %919 = vmatprep.subr.mxu0 0.0
  %920 = vmatpush1.xpose.msra.mxu0 0.0
  %921 = vmatprep.subr.mxu0 0.0
  %922 = vmatpush1.xpose.msra.mxu0 0.0
  %923 = vmatprep.mubr.f32.mxu0 0.0
  %924 = vmatmul.mubr.f32.gmra.mrb[0].mxu0 %v855
  %v925 = vpop.f32.mrb[0].mxu0
  %v926 = vadd.f32 0.0, %v925
  %v927 = vpop.f32.mrb[0].mxu0
  %928 = vmatprep.mubr.f32.mxu0 0.0
  %929 = vmatmul.mubr.f32.gmra.mrb[0].mxu0 %v857
  %v930 = vpop.f32.mrb[0].mxu0
  %v931 = vadd.f32 0.0, %v930
  %v932 = vpop.f32.mrb[0].mxu0
  %933 = vdwg.mxu0
  %v934 = vmul.f32 %v926, 0.5
  %v935 = vmul.f32 %v931, 0.5
  %v936 = vtanh.pop %v934
  %v937 = vtanh.pop %v935
  %v938 = vmul.f32 %v936, 0.5
  %v939 = vmul.f32 %v937, 0.5
  %v940 = vadd.f32 %v938, 0.5
  %v941 = vadd.f32 %v939, 0.5
  %942 = vset.pattern.permute.xlu0 67
  %943 = vperm.xlu0 %942, %v112
  %v944 = vpop.permute.xlu0 %943
  %946 = vset.pattern.permute.xlu0 67
  %947 = vperm.xlu0 %946, %v117
  %v948 = vpop.permute.xlu0 %947
  %v950 = vlaneseq
  %v951 = vshrl.u32 %v950, 7
  %v952 = vsub.s32 3, %v951
  %v953 = vrot.slane %v191, %v952
  %v954 = vadd.f32 %v944, %v953
  %v955 = vadd.f32 %v948, %v953
  %v956 = vmul.f32 %v954, %v940
  %v957 = vmul.f32 %v955, %v941
  %vm958 = vcmp.ge.f32.partialorder %v956, 0.0
  %vm959 = vcmp.ge.f32.partialorder %v957, 0.0
  %v960 = vmul.f32 %v956, 0.2
  %v961 = vmul.f32 %v957, 0.2
  %v962 = vsel %vm958, %v956, %v960
  %v963 = vsel %vm959, %v957, %v961
  %v964 = vadd.f32 %v962, %v32
  %v965 = vadd.f32 %v963, %v33
  %v966 = vmul.f32 %v964, 1.442695
  %v967 = vpow.pop %v966
  %v968 = vmul.f32 %v965, 1.442695
  %v969 = vpow.pop %v968
  %v970 = vsel %vm38, %v967, 0.0
  %971 = vadd.xlane.f32.xlu0 %v970
  %v972 = vpop.xlane.xlu0 %971
  %v973 = vsel %vm38, %v969, 0.0
  %974 = vadd.xlane.f32.xlu0 %v973
  %v975 = vpop.xlane.xlu0 %974
  %v976 = vrcp.pop %v972
  %v977 = vmul.f32 %v967, %v976
  %v978 = vrcp.pop %v975
  %v979 = vmul.f32 %v969, %v978
  %v983 = vsel %vm38, %v977, 0
  %v986 = vsel %vm38, %v979, 0
  %988 = vmatprep.subr.mxu0 0.0
  %989 = vmatpush1.msra.mxu0 %v852
  %990 = vmatprep.subr.mxu0 0.0
  %991 = vmatpush1.msra.mxu0 %v854
  %992 = vmatprep.subr.mxu0 0.0
  %993 = vmatpush1.msra.mxu0 0.0
  %994 = vmatprep.subr.mxu0 0.0
  %995 = vmatpush1.msra.mxu0 0.0
  %996 = vmatprep.subr.mxu0 0.0
  %997 = vmatpush1.msra.mxu0 0.0
  %998 = vmatprep.subr.mxu0 0.0
  %999 = vmatpush1.msra.mxu0 0.0
  %1000 = vmatprep.subr.mxu0 0.0
  %1001 = vmatpush1.msra.mxu0 0.0
  %1002 = vmatprep.subr.mxu0 0.0
  %1003 = vmatpush1.msra.mxu0 0.0
  %1004 = vmatprep.subr.mxu0 0.0
  %1005 = vmatpush1.msra.mxu0 0.0
  %1006 = vmatprep.subr.mxu0 0.0
  %1007 = vmatpush1.msra.mxu0 0.0
  %1008 = vmatprep.subr.mxu0 0.0
  %1009 = vmatpush1.msra.mxu0 0.0
  %1010 = vmatprep.subr.mxu0 0.0
  %1011 = vmatpush1.msra.mxu0 0.0
  %1012 = vmatprep.subr.mxu0 0.0
  %1013 = vmatpush1.msra.mxu0 0.0
  %1014 = vmatprep.subr.mxu0 0.0
  %1015 = vmatpush1.msra.mxu0 0.0
  %1016 = vmatprep.subr.mxu0 0.0
  %1017 = vmatpush1.msra.mxu0 0.0
  %1018 = vmatprep.subr.mxu0 0.0
  %1019 = vmatpush1.msra.mxu0 0.0
  %1020 = vmatprep.subr.mxu0 0.0
  %1021 = vmatpush1.msra.mxu0 0.0
  %1022 = vmatprep.subr.mxu0 0.0
  %1023 = vmatpush1.msra.mxu0 0.0
  %1024 = vmatprep.subr.mxu0 0.0
  %1025 = vmatpush1.msra.mxu0 0.0
  %1026 = vmatprep.subr.mxu0 0.0
  %1027 = vmatpush1.msra.mxu0 0.0
  %1028 = vmatprep.subr.mxu0 0.0
  %1029 = vmatpush1.msra.mxu0 0.0
  %1030 = vmatprep.subr.mxu0 0.0
  %1031 = vmatpush1.msra.mxu0 0.0
  %1032 = vmatprep.subr.mxu0 0.0
  %1033 = vmatpush1.msra.mxu0 0.0
  %1034 = vmatprep.subr.mxu0 0.0
  %1035 = vmatpush1.msra.mxu0 0.0
  %1036 = vmatprep.subr.mxu0 0.0
  %1037 = vmatpush1.msra.mxu0 0.0
  %1038 = vmatprep.subr.mxu0 0.0
  %1039 = vmatpush1.msra.mxu0 0.0
  %1040 = vmatprep.subr.mxu0 0.0
  %1041 = vmatpush1.msra.mxu0 0.0
  %1042 = vmatprep.subr.mxu0 0.0
  %1043 = vmatpush1.msra.mxu0 0.0
  %1044 = vmatprep.subr.mxu0 0.0
  %1045 = vmatpush1.msra.mxu0 0.0
  %1046 = vmatprep.subr.mxu0 0.0
  %1047 = vmatpush1.msra.mxu0 0.0
  %1048 = vmatprep.subr.mxu0 0.0
  %1049 = vmatpush1.msra.mxu0 0.0
  %1050 = vmatprep.subr.mxu0 0.0
  %1051 = vmatpush1.msra.mxu0 0.0
  %1052 = vmatprep.mubr.f32.mxu0 0.0
  %1053 = vmatmul.mubr.f32.gmra.mrb[0].mxu0 %v983
  %v1054 = vpop.f32.mrb[0].mxu0
  %v1055 = vadd.f32 0.0, %v1054
  %v1056 = vpop.f32.mrb[0].mxu0
  %1057 = vmatprep.mubr.f32.mxu0 0.0
  %1058 = vmatmul.mubr.f32.gmra.mrb[0].mxu0 %v986
  %v1059 = vpop.f32.mrb[0].mxu0
  %v1060 = vadd.f32 0.0, %v1059
  %v1061 = vpop.f32.mrb[0].mxu0
  %1062 = vdwg.mxu0
  %1065 = vrot.lane.b32.xlu0 %v1055, 24
  %v1066 = vpop.permute.xlu0 %1065
  %1067 = vrot.lane.b32.xlu0 %v1060, 24
  %v1068 = vpop.permute.xlu0 %1067
  %vm1071 = vcmask 261312
  %1072 = vst.msk [vmem:[#allocation2] sm:$0xff] %vm1071, %v1066
  %1073 = vst.msk [vmem:[#allocation2 + $0x8] sm:$0xff] %vm1071, %v1068
  %1074 = vrot.lane.b32.xlu0 %v112, 96
  %v1075 = vpop.permute.xlu0 %1074
  %1076 = vrot.lane.b32.xlu0 %v117, 96
  %v1077 = vpop.permute.xlu0 %1076
  %v1078 = vsel %vm194, %v1075, 0
  %v1080 = vsel %vm194, %v1077, 0
  %1082 = vmatprep.subr.mxu0 0.0
  %1083 = vmatpush1.xpose.msra.mxu0 %v1078
  %1084 = vmatprep.subr.mxu0 0.0
  %1085 = vmatpush1.xpose.msra.mxu0 %v1080
  %1086 = vmatprep.subr.mxu0 0.0
  %1087 = vmatpush1.xpose.msra.mxu0 0.0
  %1088 = vmatprep.subr.mxu0 0.0
  %1089 = vmatpush1.xpose.msra.mxu0 0.0
  %1090 = vmatprep.subr.mxu0 0.0
  %1091 = vmatpush1.xpose.msra.mxu0 0.0
  %1092 = vmatprep.subr.mxu0 0.0
  %1093 = vmatpush1.xpose.msra.mxu0 0.0
  %1094 = vmatprep.subr.mxu0 0.0
  %1095 = vmatpush1.xpose.msra.mxu0 0.0
  %1096 = vmatprep.subr.mxu0 0.0
  %1097 = vmatpush1.xpose.msra.mxu0 0.0
  %1098 = vmatprep.subr.mxu0 0.0
  %1099 = vmatpush1.xpose.msra.mxu0 0.0
  %1100 = vmatprep.subr.mxu0 0.0
  %1101 = vmatpush1.xpose.msra.mxu0 0.0
  %1102 = vmatprep.subr.mxu0 0.0
  %1103 = vmatpush1.xpose.msra.mxu0 0.0
  %1104 = vmatprep.subr.mxu0 0.0
  %1105 = vmatpush1.xpose.msra.mxu0 0.0
  %1106 = vmatprep.subr.mxu0 0.0
  %1107 = vmatpush1.xpose.msra.mxu0 0.0
  %1108 = vmatprep.subr.mxu0 0.0
  %1109 = vmatpush1.xpose.msra.mxu0 0.0
  %1110 = vmatprep.subr.mxu0 0.0
  %1111 = vmatpush1.xpose.msra.mxu0 0.0
  %1112 = vmatprep.subr.mxu0 0.0
  %1113 = vmatpush1.xpose.msra.mxu0 0.0
  %1114 = vmatprep.subr.mxu0 0.0
  %1115 = vmatpush1.xpose.msra.mxu0 0.0
  %1116 = vmatprep.subr.mxu0 0.0
  %1117 = vmatpush1.xpose.msra.mxu0 0.0
  %1118 = vmatprep.subr.mxu0 0.0
  %1119 = vmatpush1.xpose.msra.mxu0 0.0
  %1120 = vmatprep.subr.mxu0 0.0
  %1121 = vmatpush1.xpose.msra.mxu0 0.0
  %1122 = vmatprep.subr.mxu0 0.0
  %1123 = vmatpush1.xpose.msra.mxu0 0.0
  %1124 = vmatprep.subr.mxu0 0.0
  %1125 = vmatpush1.xpose.msra.mxu0 0.0
  %1126 = vmatprep.subr.mxu0 0.0
  %1127 = vmatpush1.xpose.msra.mxu0 0.0
  %1128 = vmatprep.subr.mxu0 0.0
  %1129 = vmatpush1.xpose.msra.mxu0 0.0
  %1130 = vmatprep.subr.mxu0 0.0
  %1131 = vmatpush1.xpose.msra.mxu0 0.0
  %1132 = vmatprep.subr.mxu0 0.0
  %1133 = vmatpush1.xpose.msra.mxu0 0.0
  %1134 = vmatprep.subr.mxu0 0.0
  %1135 = vmatpush1.xpose.msra.mxu0 0.0
  %1136 = vmatprep.subr.mxu0 0.0
  %1137 = vmatpush1.xpose.msra.mxu0 0.0
  %1138 = vmatprep.subr.mxu0 0.0
  %1139 = vmatpush1.xpose.msra.mxu0 0.0
  %1140 = vmatprep.subr.mxu0 0.0
  %1141 = vmatpush1.xpose.msra.mxu0 0.0
  %1142 = vmatprep.subr.mxu0 0.0
  %1143 = vmatpush1.xpose.msra.mxu0 0.0
  %1144 = vmatprep.subr.mxu0 0.0
  %1145 = vmatpush1.xpose.msra.mxu0 0.0
  %1146 = vmatprep.mubr.f32.mxu0 0.0
  %1147 = vmatmul.mubr.f32.gmra.mrb[0].mxu0 %v1078
  %v1148 = vpop.f32.mrb[0].mxu0
  %v1149 = vadd.f32 0.0, %v1148
  %v1150 = vpop.f32.mrb[0].mxu0
  %1151 = vmatprep.mubr.f32.mxu0 0.0
  %1152 = vmatmul.mubr.f32.gmra.mrb[0].mxu0 %v1080
  %v1153 = vpop.f32.mrb[0].mxu0
  %v1154 = vadd.f32 0.0, %v1153
  %v1155 = vpop.f32.mrb[0].mxu0
  %1156 = vdwg.mxu0
  %v1157 = vmul.f32 %v1149, 0.5
  %v1158 = vmul.f32 %v1154, 0.5
  %v1159 = vtanh.pop %v1157
  %v1160 = vtanh.pop %v1158
  %v1161 = vmul.f32 %v1159, 0.5
  %v1162 = vmul.f32 %v1160, 0.5
  %v1163 = vadd.f32 %v1161, 0.5
  %v1164 = vadd.f32 %v1162, 0.5
  %1165 = vset.pattern.permute.xlu0 68
  %1166 = vperm.xlu0 %1165, %v112
  %v1167 = vpop.permute.xlu0 %1166
  %1169 = vset.pattern.permute.xlu0 68
  %1170 = vperm.xlu0 %1169, %v117
  %v1171 = vpop.permute.xlu0 %1170
  %v1173 = vlaneseq
  %v1174 = vshrl.u32 %v1173, 7
  %v1175 = vsub.s32 4, %v1174
  %v1176 = vrot.slane %v191, %v1175
  %v1177 = vadd.f32 %v1167, %v1176
  %v1178 = vadd.f32 %v1171, %v1176
  %v1179 = vmul.f32 %v1177, %v1163
  %v1180 = vmul.f32 %v1178, %v1164
  %vm1181 = vcmp.ge.f32.partialorder %v1179, 0.0
  %vm1182 = vcmp.ge.f32.partialorder %v1180, 0.0
  %v1183 = vmul.f32 %v1179, 0.2
  %v1184 = vmul.f32 %v1180, 0.2
  %v1185 = vsel %vm1181, %v1179, %v1183
  %v1186 = vsel %vm1182, %v1180, %v1184
  %v1187 = vadd.f32 %v1185, %v32
  %v1188 = vadd.f32 %v1186, %v33
  %v1189 = vmul.f32 %v1187, 1.442695
  %v1190 = vpow.pop %v1189
  %v1191 = vmul.f32 %v1188, 1.442695
  %v1192 = vpow.pop %v1191
  %v1193 = vsel %vm38, %v1190, 0.0
  %1194 = vadd.xlane.f32.xlu0 %v1193
  %v1195 = vpop.xlane.xlu0 %1194
  %v1196 = vsel %vm38, %v1192, 0.0
  %1197 = vadd.xlane.f32.xlu0 %v1196
  %v1198 = vpop.xlane.xlu0 %1197
  %v1199 = vrcp.pop %v1195
  %v1200 = vmul.f32 %v1190, %v1199
  %v1201 = vrcp.pop %v1198
  %v1202 = vmul.f32 %v1192, %v1201
  %v1206 = vsel %vm38, %v1200, 0
  %v1209 = vsel %vm38, %v1202, 0
  %1211 = vmatprep.subr.mxu0 0.0
  %1212 = vmatpush1.msra.mxu0 %v1075
  %1213 = vmatprep.subr.mxu0 0.0
  %1214 = vmatpush1.msra.mxu0 %v1077
  %1215 = vmatprep.subr.mxu0 0.0
  %1216 = vmatpush1.msra.mxu0 0.0
  %1217 = vmatprep.subr.mxu0 0.0
  %1218 = vmatpush1.msra.mxu0 0.0
  %1219 = vmatprep.subr.mxu0 0.0
  %1220 = vmatpush1.msra.mxu0 0.0
  %1221 = vmatprep.subr.mxu0 0.0
  %1222 = vmatpush1.msra.mxu0 0.0
  %1223 = vmatprep.subr.mxu0 0.0
  %1224 = vmatpush1.msra.mxu0 0.0
  %1225 = vmatprep.subr.mxu0 0.0
  %1226 = vmatpush1.msra.mxu0 0.0
  %1227 = vmatprep.subr.mxu0 0.0
  %1228 = vmatpush1.msra.mxu0 0.0
  %1229 = vmatprep.subr.mxu0 0.0
  %1230 = vmatpush1.msra.mxu0 0.0
  %1231 = vmatprep.subr.mxu0 0.0
  %1232 = vmatpush1.msra.mxu0 0.0
  %1233 = vmatprep.subr.mxu0 0.0
  %1234 = vmatpush1.msra.mxu0 0.0
  %1235 = vmatprep.subr.mxu0 0.0
  %1236 = vmatpush1.msra.mxu0 0.0
  %1237 = vmatprep.subr.mxu0 0.0
  %1238 = vmatpush1.msra.mxu0 0.0
  %1239 = vmatprep.subr.mxu0 0.0
  %1240 = vmatpush1.msra.mxu0 0.0
  %1241 = vmatprep.subr.mxu0 0.0
  %1242 = vmatpush1.msra.mxu0 0.0
  %1243 = vmatprep.subr.mxu0 0.0
  %1244 = vmatpush1.msra.mxu0 0.0
  %1245 = vmatprep.subr.mxu0 0.0
  %1246 = vmatpush1.msra.mxu0 0.0
  %1247 = vmatprep.subr.mxu0 0.0
  %1248 = vmatpush1.msra.mxu0 0.0
  %1249 = vmatprep.subr.mxu0 0.0
  %1250 = vmatpush1.msra.mxu0 0.0
  %1251 = vmatprep.subr.mxu0 0.0
  %1252 = vmatpush1.msra.mxu0 0.0
  %1253 = vmatprep.subr.mxu0 0.0
  %1254 = vmatpush1.msra.mxu0 0.0
  %1255 = vmatprep.subr.mxu0 0.0
  %1256 = vmatpush1.msra.mxu0 0.0
  %1257 = vmatprep.subr.mxu0 0.0
  %1258 = vmatpush1.msra.mxu0 0.0
  %1259 = vmatprep.subr.mxu0 0.0
  %1260 = vmatpush1.msra.mxu0 0.0
  %1261 = vmatprep.subr.mxu0 0.0
  %1262 = vmatpush1.msra.mxu0 0.0
  %1263 = vmatprep.subr.mxu0 0.0
  %1264 = vmatpush1.msra.mxu0 0.0
  %1265 = vmatprep.subr.mxu0 0.0
  %1266 = vmatpush1.msra.mxu0 0.0
  %1267 = vmatprep.subr.mxu0 0.0
  %1268 = vmatpush1.msra.mxu0 0.0
  %1269 = vmatprep.subr.mxu0 0.0
  %1270 = vmatpush1.msra.mxu0 0.0
  %1271 = vmatprep.subr.mxu0 0.0
  %1272 = vmatpush1.msra.mxu0 0.0
  %1273 = vmatprep.subr.mxu0 0.0
  %1274 = vmatpush1.msra.mxu0 0.0
  %1275 = vmatprep.mubr.f32.mxu0 0.0
  %1276 = vmatmul.mubr.f32.gmra.mrb[0].mxu0 %v1206
  %v1277 = vpop.f32.mrb[0].mxu0
  %v1278 = vadd.f32 0.0, %v1277
  %v1279 = vpop.f32.mrb[0].mxu0
  %1280 = vmatprep.mubr.f32.mxu0 0.0
  %1281 = vmatmul.mubr.f32.gmra.mrb[0].mxu0 %v1209
  %v1282 = vpop.f32.mrb[0].mxu0
  %v1283 = vadd.f32 0.0, %v1282
  %v1284 = vpop.f32.mrb[0].mxu0
  %1285 = vdwg.mxu0
  %1288 = vrot.lane.b32.xlu0 %v1278, 32
  %v1289 = vpop.permute.xlu0 %1288
  %1290 = vrot.lane.b32.xlu0 %v1283, 32
  %v1291 = vpop.permute.xlu0 %1290
  %vm1294 = vcmask 326912
  %1295 = vst.msk [vmem:[#allocation2] sm:$0xff] %vm1294, %v1289
  %1296 = vst.msk [vmem:[#allocation2 + $0x8] sm:$0xff] %vm1294, %v1291
  %1297 = vrot.lane.b32.xlu0 %v112, 88
  %v1298 = vpop.permute.xlu0 %1297
  %1299 = vrot.lane.b32.xlu0 %v117, 88
  %v1300 = vpop.permute.xlu0 %1299
  %v1301 = vsel %vm194, %v1298, 0
  %v1303 = vsel %vm194, %v1300, 0
  %1305 = vmatprep.subr.mxu0 0.0
  %1306 = vmatpush1.xpose.msra.mxu0 %v1301
  %1307 = vmatprep.subr.mxu0 0.0
  %1308 = vmatpush1.xpose.msra.mxu0 %v1303
  %1309 = vmatprep.subr.mxu0 0.0
  %1310 = vmatpush1.xpose.msra.mxu0 0.0
  %1311 = vmatprep.subr.mxu0 0.0
  %1312 = vmatpush1.xpose.msra.mxu0 0.0
  %1313 = vmatprep.subr.mxu0 0.0
  %1314 = vmatpush1.xpose.msra.mxu0 0.0
  %1315 = vmatprep.subr.mxu0 0.0
  %1316 = vmatpush1.xpose.msra.mxu0 0.0
  %1317 = vmatprep.subr.mxu0 0.0
  %1318 = vmatpush1.xpose.msra.mxu0 0.0
  %1319 = vmatprep.subr.mxu0 0.0
  %1320 = vmatpush1.xpose.msra.mxu0 0.0
  %1321 = vmatprep.subr.mxu0 0.0
  %1322 = vmatpush1.xpose.msra.mxu0 0.0
  %1323 = vmatprep.subr.mxu0 0.0
  %1324 = vmatpush1.xpose.msra.mxu0 0.0
  %1325 = vmatprep.subr.mxu0 0.0
  %1326 = vmatpush1.xpose.msra.mxu0 0.0
  %1327 = vmatprep.subr.mxu0 0.0
  %1328 = vmatpush1.xpose.msra.mxu0 0.0
  %1329 = vmatprep.subr.mxu0 0.0
  %1330 = vmatpush1.xpose.msra.mxu0 0.0
  %1331 = vmatprep.subr.mxu0 0.0
  %1332 = vmatpush1.xpose.msra.mxu0 0.0
  %1333 = vmatprep.subr.mxu0 0.0
  %1334 = vmatpush1.xpose.msra.mxu0 0.0
  %1335 = vmatprep.subr.mxu0 0.0
  %1336 = vmatpush1.xpose.msra.mxu0 0.0
  %1337 = vmatprep.subr.mxu0 0.0
  %1338 = vmatpush1.xpose.msra.mxu0 0.0
  %1339 = vmatprep.subr.mxu0 0.0
  %1340 = vmatpush1.xpose.msra.mxu0 0.0
  %1341 = vmatprep.subr.mxu0 0.0
  %1342 = vmatpush1.xpose.msra.mxu0 0.0
  %1343 = vmatprep.subr.mxu0 0.0
  %1344 = vmatpush1.xpose.msra.mxu0 0.0
  %1345 = vmatprep.subr.mxu0 0.0
  %1346 = vmatpush1.xpose.msra.mxu0 0.0
  %1347 = vmatprep.subr.mxu0 0.0
  %1348 = vmatpush1.xpose.msra.mxu0 0.0
  %1349 = vmatprep.subr.mxu0 0.0
  %1350 = vmatpush1.xpose.msra.mxu0 0.0
  %1351 = vmatprep.subr.mxu0 0.0
  %1352 = vmatpush1.xpose.msra.mxu0 0.0
  %1353 = vmatprep.subr.mxu0 0.0
  %1354 = vmatpush1.xpose.msra.mxu0 0.0
  %1355 = vmatprep.subr.mxu0 0.0
  %1356 = vmatpush1.xpose.msra.mxu0 0.0
  %1357 = vmatprep.subr.mxu0 0.0
  %1358 = vmatpush1.xpose.msra.mxu0 0.0
  %1359 = vmatprep.subr.mxu0 0.0
  %1360 = vmatpush1.xpose.msra.mxu0 0.0
  %1361 = vmatprep.subr.mxu0 0.0
  %1362 = vmatpush1.xpose.msra.mxu0 0.0
  %1363 = vmatprep.subr.mxu0 0.0
  %1364 = vmatpush1.xpose.msra.mxu0 0.0
  %1365 = vmatprep.subr.mxu0 0.0
  %1366 = vmatpush1.xpose.msra.mxu0 0.0
  %1367 = vmatprep.subr.mxu0 0.0
  %1368 = vmatpush1.xpose.msra.mxu0 0.0
  %1369 = vmatprep.mubr.f32.mxu0 0.0
  %1370 = vmatmul.mubr.f32.gmra.mrb[0].mxu0 %v1301
  %v1371 = vpop.f32.mrb[0].mxu0
  %v1372 = vadd.f32 0.0, %v1371
  %v1373 = vpop.f32.mrb[0].mxu0
  %1374 = vmatprep.mubr.f32.mxu0 0.0
  %1375 = vmatmul.mubr.f32.gmra.mrb[0].mxu0 %v1303
  %v1376 = vpop.f32.mrb[0].mxu0
  %v1377 = vadd.f32 0.0, %v1376
  %v1378 = vpop.f32.mrb[0].mxu0
  %1379 = vdwg.mxu0
  %v1380 = vmul.f32 %v1372, 0.5
  %v1381 = vmul.f32 %v1377, 0.5
  %v1382 = vtanh.pop %v1380
  %v1383 = vtanh.pop %v1381
  %v1384 = vmul.f32 %v1382, 0.5
  %v1385 = vmul.f32 %v1383, 0.5
  %v1386 = vadd.f32 %v1384, 0.5
  %v1387 = vadd.f32 %v1385, 0.5
  %1388 = vset.pattern.permute.xlu0 69
  %1389 = vperm.xlu0 %1388, %v112
  %v1390 = vpop.permute.xlu0 %1389
  %1392 = vset.pattern.permute.xlu0 69
  %1393 = vperm.xlu0 %1392, %v117
  %v1394 = vpop.permute.xlu0 %1393
  %v1396 = vlaneseq
  %v1397 = vshrl.u32 %v1396, 7
  %v1398 = vsub.s32 5, %v1397
  %v1399 = vrot.slane %v191, %v1398
  %v1400 = vadd.f32 %v1390, %v1399
  %v1401 = vadd.f32 %v1394, %v1399
  %v1402 = vmul.f32 %v1400, %v1386
  %v1403 = vmul.f32 %v1401, %v1387
  %vm1404 = vcmp.ge.f32.partialorder %v1402, 0.0
  %vm1405 = vcmp.ge.f32.partialorder %v1403, 0.0
  %v1406 = vmul.f32 %v1402, 0.2
  %v1407 = vmul.f32 %v1403, 0.2
  %v1408 = vsel %vm1404, %v1402, %v1406
  %v1409 = vsel %vm1405, %v1403, %v1407
  %v1410 = vadd.f32 %v1408, %v32
  %v1411 = vadd.f32 %v1409, %v33
  %v1412 = vmul.f32 %v1410, 1.442695
  %v1413 = vpow.pop %v1412
  %v1414 = vmul.f32 %v1411, 1.442695
  %v1415 = vpow.pop %v1414
  %v1416 = vsel %vm38, %v1413, 0.0
  %1417 = vadd.xlane.f32.xlu0 %v1416
  %v1418 = vpop.xlane.xlu0 %1417
  %v1419 = vsel %vm38, %v1415, 0.0
  %1420 = vadd.xlane.f32.xlu0 %v1419
  %v1421 = vpop.xlane.xlu0 %1420
  %v1422 = vrcp.pop %v1418
  %v1423 = vmul.f32 %v1413, %v1422
  %v1424 = vrcp.pop %v1421
  %v1425 = vmul.f32 %v1415, %v1424
  %v1429 = vsel %vm38, %v1423, 0
  %v1432 = vsel %vm38, %v1425, 0
  %1434 = vmatprep.subr.mxu0 0.0
  %1435 = vmatpush1.msra.mxu0 %v1298
  %1436 = vmatprep.subr.mxu0 0.0
  %1437 = vmatpush1.msra.mxu0 %v1300
  %1438 = vmatprep.subr.mxu0 0.0
  %1439 = vmatpush1.msra.mxu0 0.0
  %1440 = vmatprep.subr.mxu0 0.0
  %1441 = vmatpush1.msra.mxu0 0.0
  %1442 = vmatprep.subr.mxu0 0.0
  %1443 = vmatpush1.msra.mxu0 0.0
  %1444 = vmatprep.subr.mxu0 0.0
  %1445 = vmatpush1.msra.mxu0 0.0
  %1446 = vmatprep.subr.mxu0 0.0
  %1447 = vmatpush1.msra.mxu0 0.0
  %1448 = vmatprep.subr.mxu0 0.0
  %1449 = vmatpush1.msra.mxu0 0.0
  %1450 = vmatprep.subr.mxu0 0.0
  %1451 = vmatpush1.msra.mxu0 0.0
  %1452 = vmatprep.subr.mxu0 0.0
  %1453 = vmatpush1.msra.mxu0 0.0
  %1454 = vmatprep.subr.mxu0 0.0
  %1455 = vmatpush1.msra.mxu0 0.0
  %1456 = vmatprep.subr.mxu0 0.0
  %1457 = vmatpush1.msra.mxu0 0.0
  %1458 = vmatprep.subr.mxu0 0.0
  %1459 = vmatpush1.msra.mxu0 0.0
  %1460 = vmatprep.subr.mxu0 0.0
  %1461 = vmatpush1.msra.mxu0 0.0
  %1462 = vmatprep.subr.mxu0 0.0
  %1463 = vmatpush1.msra.mxu0 0.0
  %1464 = vmatprep.subr.mxu0 0.0
  %1465 = vmatpush1.msra.mxu0 0.0
  %1466 = vmatprep.subr.mxu0 0.0
  %1467 = vmatpush1.msra.mxu0 0.0
  %1468 = vmatprep.subr.mxu0 0.0
  %1469 = vmatpush1.msra.mxu0 0.0
  %1470 = vmatprep.subr.mxu0 0.0
  %1471 = vmatpush1.msra.mxu0 0.0
  %1472 = vmatprep.subr.mxu0 0.0
  %1473 = vmatpush1.msra.mxu0 0.0
  %1474 = vmatprep.subr.mxu0 0.0
  %1475 = vmatpush1.msra.mxu0 0.0
  %1476 = vmatprep.subr.mxu0 0.0
  %1477 = vmatpush1.msra.mxu0 0.0
  %1478 = vmatprep.subr.mxu0 0.0
  %1479 = vmatpush1.msra.mxu0 0.0
  %1480 = vmatprep.subr.mxu0 0.0
  %1481 = vmatpush1.msra.mxu0 0.0
  %1482 = vmatprep.subr.mxu0 0.0
  %1483 = vmatpush1.msra.mxu0 0.0
  %1484 = vmatprep.subr.mxu0 0.0
  %1485 = vmatpush1.msra.mxu0 0.0
  %1486 = vmatprep.subr.mxu0 0.0
  %1487 = vmatpush1.msra.mxu0 0.0
  %1488 = vmatprep.subr.mxu0 0.0
  %1489 = vmatpush1.msra.mxu0 0.0
  %1490 = vmatprep.subr.mxu0 0.0
  %1491 = vmatpush1.msra.mxu0 0.0
  %1492 = vmatprep.subr.mxu0 0.0
  %1493 = vmatpush1.msra.mxu0 0.0
  %1494 = vmatprep.subr.mxu0 0.0
  %1495 = vmatpush1.msra.mxu0 0.0
  %1496 = vmatprep.subr.mxu0 0.0
  %1497 = vmatpush1.msra.mxu0 0.0
  %1498 = vmatprep.mubr.f32.mxu0 0.0
  %1499 = vmatmul.mubr.f32.gmra.mrb[0].mxu0 %v1429
  %v1500 = vpop.f32.mrb[0].mxu0
  %v1501 = vadd.f32 0.0, %v1500
  %v1502 = vpop.f32.mrb[0].mxu0
  %1503 = vmatprep.mubr.f32.mxu0 0.0
  %1504 = vmatmul.mubr.f32.gmra.mrb[0].mxu0 %v1432
  %v1505 = vpop.f32.mrb[0].mxu0
  %v1506 = vadd.f32 0.0, %v1505
  %v1507 = vpop.f32.mrb[0].mxu0
  %1508 = vdwg.mxu0
  %1511 = vrot.lane.b32.xlu0 %v1501, 40
  %v1512 = vpop.permute.xlu0 %1511
  %1513 = vrot.lane.b32.xlu0 %v1506, 40
  %v1514 = vpop.permute.xlu0 %1513
  %vm1517 = vcmask 392512
  %1518 = vst.msk [vmem:[#allocation2] sm:$0xff] %vm1517, %v1512
  %1519 = vst.msk [vmem:[#allocation2 + $0x8] sm:$0xff] %vm1517, %v1514
  %1520 = vrot.lane.b32.xlu0 %v112, 80
  %v1521 = vpop.permute.xlu0 %1520
  %1522 = vrot.lane.b32.xlu0 %v117, 80
  %v1523 = vpop.permute.xlu0 %1522
  %v1524 = vsel %vm194, %v1521, 0
  %v1526 = vsel %vm194, %v1523, 0
  %1528 = vmatprep.subr.mxu0 0.0
  %1529 = vmatpush1.xpose.msra.mxu0 %v1524
  %1530 = vmatprep.subr.mxu0 0.0
  %1531 = vmatpush1.xpose.msra.mxu0 %v1526
  %1532 = vmatprep.subr.mxu0 0.0
  %1533 = vmatpush1.xpose.msra.mxu0 0.0
  %1534 = vmatprep.subr.mxu0 0.0
  %1535 = vmatpush1.xpose.msra.mxu0 0.0
  %1536 = vmatprep.subr.mxu0 0.0
  %1537 = vmatpush1.xpose.msra.mxu0 0.0
  %1538 = vmatprep.subr.mxu0 0.0
  %1539 = vmatpush1.xpose.msra.mxu0 0.0
  %1540 = vmatprep.subr.mxu0 0.0
  %1541 = vmatpush1.xpose.msra.mxu0 0.0
  %1542 = vmatprep.subr.mxu0 0.0
  %1543 = vmatpush1.xpose.msra.mxu0 0.0
  %1544 = vmatprep.subr.mxu0 0.0
  %1545 = vmatpush1.xpose.msra.mxu0 0.0
  %1546 = vmatprep.subr.mxu0 0.0
  %1547 = vmatpush1.xpose.msra.mxu0 0.0
  %1548 = vmatprep.subr.mxu0 0.0
  %1549 = vmatpush1.xpose.msra.mxu0 0.0
  %1550 = vmatprep.subr.mxu0 0.0
  %1551 = vmatpush1.xpose.msra.mxu0 0.0
  %1552 = vmatprep.subr.mxu0 0.0
  %1553 = vmatpush1.xpose.msra.mxu0 0.0
  %1554 = vmatprep.subr.mxu0 0.0
  %1555 = vmatpush1.xpose.msra.mxu0 0.0
  %1556 = vmatprep.subr.mxu0 0.0
  %1557 = vmatpush1.xpose.msra.mxu0 0.0
  %1558 = vmatprep.subr.mxu0 0.0
  %1559 = vmatpush1.xpose.msra.mxu0 0.0
  %1560 = vmatprep.subr.mxu0 0.0
  %1561 = vmatpush1.xpose.msra.mxu0 0.0
  %1562 = vmatprep.subr.mxu0 0.0
  %1563 = vmatpush1.xpose.msra.mxu0 0.0
  %1564 = vmatprep.subr.mxu0 0.0
  %1565 = vmatpush1.xpose.msra.mxu0 0.0
  %1566 = vmatprep.subr.mxu0 0.0
  %1567 = vmatpush1.xpose.msra.mxu0 0.0
  %1568 = vmatprep.subr.mxu0 0.0
  %1569 = vmatpush1.xpose.msra.mxu0 0.0
  %1570 = vmatprep.subr.mxu0 0.0
  %1571 = vmatpush1.xpose.msra.mxu0 0.0
  %1572 = vmatprep.subr.mxu0 0.0
  %1573 = vmatpush1.xpose.msra.mxu0 0.0
  %1574 = vmatprep.subr.mxu0 0.0
  %1575 = vmatpush1.xpose.msra.mxu0 0.0
  %1576 = vmatprep.subr.mxu0 0.0
  %1577 = vmatpush1.xpose.msra.mxu0 0.0
  %1578 = vmatprep.subr.mxu0 0.0
  %1579 = vmatpush1.xpose.msra.mxu0 0.0
  %1580 = vmatprep.subr.mxu0 0.0
  %1581 = vmatpush1.xpose.msra.mxu0 0.0
  %1582 = vmatprep.subr.mxu0 0.0
  %1583 = vmatpush1.xpose.msra.mxu0 0.0
  %1584 = vmatprep.subr.mxu0 0.0
  %1585 = vmatpush1.xpose.msra.mxu0 0.0
  %1586 = vmatprep.subr.mxu0 0.0
  %1587 = vmatpush1.xpose.msra.mxu0 0.0
  %1588 = vmatprep.subr.mxu0 0.0
  %1589 = vmatpush1.xpose.msra.mxu0 0.0
  %1590 = vmatprep.subr.mxu0 0.0
  %1591 = vmatpush1.xpose.msra.mxu0 0.0
  %1592 = vmatprep.mubr.f32.mxu0 0.0
  %1593 = vmatmul.mubr.f32.gmra.mrb[0].mxu0 %v1524
  %v1594 = vpop.f32.mrb[0].mxu0
  %v1595 = vadd.f32 0.0, %v1594
  %v1596 = vpop.f32.mrb[0].mxu0
  %1597 = vmatprep.mubr.f32.mxu0 0.0
  %1598 = vmatmul.mubr.f32.gmra.mrb[0].mxu0 %v1526
  %v1599 = vpop.f32.mrb[0].mxu0
  %v1600 = vadd.f32 0.0, %v1599
  %v1601 = vpop.f32.mrb[0].mxu0
  %1602 = vdwg.mxu0
  %v1603 = vmul.f32 %v1595, 0.5
  %v1604 = vmul.f32 %v1600, 0.5
  %v1605 = vtanh.pop %v1603
  %v1606 = vtanh.pop %v1604
  %v1607 = vmul.f32 %v1605, 0.5
  %v1608 = vmul.f32 %v1606, 0.5
  %v1609 = vadd.f32 %v1607, 0.5
  %v1610 = vadd.f32 %v1608, 0.5
  %1611 = vset.pattern.permute.xlu0 70
  %1612 = vperm.xlu0 %1611, %v112
  %v1613 = vpop.permute.xlu0 %1612
  %1615 = vset.pattern.permute.xlu0 70
  %1616 = vperm.xlu0 %1615, %v117
  %v1617 = vpop.permute.xlu0 %1616
  %v1619 = vlaneseq
  %v1620 = vshrl.u32 %v1619, 7
  %v1621 = vsub.s32 6, %v1620
  %v1622 = vrot.slane %v191, %v1621
  %v1623 = vadd.f32 %v1613, %v1622
  %v1624 = vadd.f32 %v1617, %v1622
  %v1625 = vmul.f32 %v1623, %v1609
  %v1626 = vmul.f32 %v1624, %v1610
  %vm1627 = vcmp.ge.f32.partialorder %v1625, 0.0
  %vm1628 = vcmp.ge.f32.partialorder %v1626, 0.0
  %v1629 = vmul.f32 %v1625, 0.2
  %v1630 = vmul.f32 %v1626, 0.2
  %v1631 = vsel %vm1627, %v1625, %v1629
  %v1632 = vsel %vm1628, %v1626, %v1630
  %v1633 = vadd.f32 %v1631, %v32
  %v1634 = vadd.f32 %v1632, %v33
  %v1635 = vmul.f32 %v1633, 1.442695
  %v1636 = vpow.pop %v1635
  %v1637 = vmul.f32 %v1634, 1.442695
  %v1638 = vpow.pop %v1637
  %v1639 = vsel %vm38, %v1636, 0.0
  %1640 = vadd.xlane.f32.xlu0 %v1639
  %v1641 = vpop.xlane.xlu0 %1640
  %v1642 = vsel %vm38, %v1638, 0.0
  %1643 = vadd.xlane.f32.xlu0 %v1642
  %v1644 = vpop.xlane.xlu0 %1643
  %v1645 = vrcp.pop %v1641
  %v1646 = vmul.f32 %v1636, %v1645
  %v1647 = vrcp.pop %v1644
  %v1648 = vmul.f32 %v1638, %v1647
  %v1652 = vsel %vm38, %v1646, 0
  %v1655 = vsel %vm38, %v1648, 0
  %1657 = vmatprep.subr.mxu0 0.0
  %1658 = vmatpush1.msra.mxu0 %v1521
  %1659 = vmatprep.subr.mxu0 0.0
  %1660 = vmatpush1.msra.mxu0 %v1523
  %1661 = vmatprep.subr.mxu0 0.0
  %1662 = vmatpush1.msra.mxu0 0.0
  %1663 = vmatprep.subr.mxu0 0.0
  %1664 = vmatpush1.msra.mxu0 0.0
  %1665 = vmatprep.subr.mxu0 0.0
  %1666 = vmatpush1.msra.mxu0 0.0
  %1667 = vmatprep.subr.mxu0 0.0
  %1668 = vmatpush1.msra.mxu0 0.0
  %1669 = vmatprep.subr.mxu0 0.0
  %1670 = vmatpush1.msra.mxu0 0.0
  %1671 = vmatprep.subr.mxu0 0.0
  %1672 = vmatpush1.msra.mxu0 0.0
  %1673 = vmatprep.subr.mxu0 0.0
  %1674 = vmatpush1.msra.mxu0 0.0
  %1675 = vmatprep.subr.mxu0 0.0
  %1676 = vmatpush1.msra.mxu0 0.0
  %1677 = vmatprep.subr.mxu0 0.0
  %1678 = vmatpush1.msra.mxu0 0.0
  %1679 = vmatprep.subr.mxu0 0.0
  %1680 = vmatpush1.msra.mxu0 0.0
  %1681 = vmatprep.subr.mxu0 0.0
  %1682 = vmatpush1.msra.mxu0 0.0
  %1683 = vmatprep.subr.mxu0 0.0
  %1684 = vmatpush1.msra.mxu0 0.0
  %1685 = vmatprep.subr.mxu0 0.0
  %1686 = vmatpush1.msra.mxu0 0.0
  %1687 = vmatprep.subr.mxu0 0.0
  %1688 = vmatpush1.msra.mxu0 0.0
  %1689 = vmatprep.subr.mxu0 0.0
  %1690 = vmatpush1.msra.mxu0 0.0
  %1691 = vmatprep.subr.mxu0 0.0
  %1692 = vmatpush1.msra.mxu0 0.0
  %1693 = vmatprep.subr.mxu0 0.0
  %1694 = vmatpush1.msra.mxu0 0.0
  %1695 = vmatprep.subr.mxu0 0.0
  %1696 = vmatpush1.msra.mxu0 0.0
  %1697 = vmatprep.subr.mxu0 0.0
  %1698 = vmatpush1.msra.mxu0 0.0
  %1699 = vmatprep.subr.mxu0 0.0
  %1700 = vmatpush1.msra.mxu0 0.0
  %1701 = vmatprep.subr.mxu0 0.0
  %1702 = vmatpush1.msra.mxu0 0.0
  %1703 = vmatprep.subr.mxu0 0.0
  %1704 = vmatpush1.msra.mxu0 0.0
  %1705 = vmatprep.subr.mxu0 0.0
  %1706 = vmatpush1.msra.mxu0 0.0
  %1707 = vmatprep.subr.mxu0 0.0
  %1708 = vmatpush1.msra.mxu0 0.0
  %1709 = vmatprep.subr.mxu0 0.0
  %1710 = vmatpush1.msra.mxu0 0.0
  %1711 = vmatprep.subr.mxu0 0.0
  %1712 = vmatpush1.msra.mxu0 0.0
  %1713 = vmatprep.subr.mxu0 0.0
  %1714 = vmatpush1.msra.mxu0 0.0
  %1715 = vmatprep.subr.mxu0 0.0
  %1716 = vmatpush1.msra.mxu0 0.0
  %1717 = vmatprep.subr.mxu0 0.0
  %1718 = vmatpush1.msra.mxu0 0.0
  %1719 = vmatprep.subr.mxu0 0.0
  %1720 = vmatpush1.msra.mxu0 0.0
  %1721 = vmatprep.mubr.f32.mxu0 0.0
  %1722 = vmatmul.mubr.f32.gmra.mrb[0].mxu0 %v1652
  %v1723 = vpop.f32.mrb[0].mxu0
  %v1724 = vadd.f32 0.0, %v1723
  %v1725 = vpop.f32.mrb[0].mxu0
  %1726 = vmatprep.mubr.f32.mxu0 0.0
  %1727 = vmatmul.mubr.f32.gmra.mrb[0].mxu0 %v1655
  %v1728 = vpop.f32.mrb[0].mxu0
  %v1729 = vadd.f32 0.0, %v1728
  %v1730 = vpop.f32.mrb[0].mxu0
  %1731 = vdwg.mxu0
  %1734 = vrot.lane.b32.xlu0 %v1724, 48
  %v1735 = vpop.permute.xlu0 %1734
  %1736 = vrot.lane.b32.xlu0 %v1729, 48
  %v1737 = vpop.permute.xlu0 %1736
  %vm1740 = vcmask 458112
  %1741 = vst.msk [vmem:[#allocation2] sm:$0xff] %vm1740, %v1735
  %1742 = vst.msk [vmem:[#allocation2 + $0x8] sm:$0xff] %vm1740, %v1737
  %1743 = vrot.lane.b32.xlu0 %v112, 72
  %v1744 = vpop.permute.xlu0 %1743
  %1745 = vrot.lane.b32.xlu0 %v117, 72
  %v1746 = vpop.permute.xlu0 %1745
  %v1747 = vsel %vm194, %v1744, 0
  %v1749 = vsel %vm194, %v1746, 0
  %1751 = vmatprep.subr.mxu0 0.0
  %1752 = vmatpush1.xpose.msra.mxu0 %v1747
  %1753 = vmatprep.subr.mxu0 0.0
  %1754 = vmatpush1.xpose.msra.mxu0 %v1749
  %1755 = vmatprep.subr.mxu0 0.0
  %1756 = vmatpush1.xpose.msra.mxu0 0.0
  %1757 = vmatprep.subr.mxu0 0.0
  %1758 = vmatpush1.xpose.msra.mxu0 0.0
  %1759 = vmatprep.subr.mxu0 0.0
  %1760 = vmatpush1.xpose.msra.mxu0 0.0
  %1761 = vmatprep.subr.mxu0 0.0
  %1762 = vmatpush1.xpose.msra.mxu0 0.0
  %1763 = vmatprep.subr.mxu0 0.0
  %1764 = vmatpush1.xpose.msra.mxu0 0.0
  %1765 = vmatprep.subr.mxu0 0.0
  %1766 = vmatpush1.xpose.msra.mxu0 0.0
  %1767 = vmatprep.subr.mxu0 0.0
  %1768 = vmatpush1.xpose.msra.mxu0 0.0
  %1769 = vmatprep.subr.mxu0 0.0
  %1770 = vmatpush1.xpose.msra.mxu0 0.0
  %1771 = vmatprep.subr.mxu0 0.0
  %1772 = vmatpush1.xpose.msra.mxu0 0.0
  %1773 = vmatprep.subr.mxu0 0.0
  %1774 = vmatpush1.xpose.msra.mxu0 0.0
  %1775 = vmatprep.subr.mxu0 0.0
  %1776 = vmatpush1.xpose.msra.mxu0 0.0
  %1777 = vmatprep.subr.mxu0 0.0
  %1778 = vmatpush1.xpose.msra.mxu0 0.0
  %1779 = vmatprep.subr.mxu0 0.0
  %1780 = vmatpush1.xpose.msra.mxu0 0.0
  %1781 = vmatprep.subr.mxu0 0.0
  %1782 = vmatpush1.xpose.msra.mxu0 0.0
  %1783 = vmatprep.subr.mxu0 0.0
  %1784 = vmatpush1.xpose.msra.mxu0 0.0
  %1785 = vmatprep.subr.mxu0 0.0
  %1786 = vmatpush1.xpose.msra.mxu0 0.0
  %1787 = vmatprep.subr.mxu0 0.0
  %1788 = vmatpush1.xpose.msra.mxu0 0.0
  %1789 = vmatprep.subr.mxu0 0.0
  %1790 = vmatpush1.xpose.msra.mxu0 0.0
  %1791 = vmatprep.subr.mxu0 0.0
  %1792 = vmatpush1.xpose.msra.mxu0 0.0
  %1793 = vmatprep.subr.mxu0 0.0
  %1794 = vmatpush1.xpose.msra.mxu0 0.0
  %1795 = vmatprep.subr.mxu0 0.0
  %1796 = vmatpush1.xpose.msra.mxu0 0.0
  %1797 = vmatprep.subr.mxu0 0.0
  %1798 = vmatpush1.xpose.msra.mxu0 0.0
  %1799 = vmatprep.subr.mxu0 0.0
  %1800 = vmatpush1.xpose.msra.mxu0 0.0
  %1801 = vmatprep.subr.mxu0 0.0
  %1802 = vmatpush1.xpose.msra.mxu0 0.0
  %1803 = vmatprep.subr.mxu0 0.0
  %1804 = vmatpush1.xpose.msra.mxu0 0.0
  %1805 = vmatprep.subr.mxu0 0.0
  %1806 = vmatpush1.xpose.msra.mxu0 0.0
  %1807 = vmatprep.subr.mxu0 0.0
  %1808 = vmatpush1.xpose.msra.mxu0 0.0
  %1809 = vmatprep.subr.mxu0 0.0
  %1810 = vmatpush1.xpose.msra.mxu0 0.0
  %1811 = vmatprep.subr.mxu0 0.0
  %1812 = vmatpush1.xpose.msra.mxu0 0.0
  %1813 = vmatprep.subr.mxu0 0.0
  %1814 = vmatpush1.xpose.msra.mxu0 0.0
  %1815 = vmatprep.mubr.f32.mxu0 0.0
  %1816 = vmatmul.mubr.f32.gmra.mrb[0].mxu0 %v1747
  %v1817 = vpop.f32.mrb[0].mxu0
  %v1818 = vadd.f32 0.0, %v1817
  %v1819 = vpop.f32.mrb[0].mxu0
  %1820 = vmatprep.mubr.f32.mxu0 0.0
  %1821 = vmatmul.mubr.f32.gmra.mrb[0].mxu0 %v1749
  %v1822 = vpop.f32.mrb[0].mxu0
  %v1823 = vadd.f32 0.0, %v1822
  %v1824 = vpop.f32.mrb[0].mxu0
  %1825 = vdwg.mxu0
  %v1826 = vmul.f32 %v1818, 0.5
  %v1827 = vmul.f32 %v1823, 0.5
  %v1828 = vtanh.pop %v1826
  %v1829 = vtanh.pop %v1827
  %v1830 = vmul.f32 %v1828, 0.5
  %v1831 = vmul.f32 %v1829, 0.5
  %v1832 = vadd.f32 %v1830, 0.5
  %v1833 = vadd.f32 %v1831, 0.5
  %1834 = vset.pattern.permute.xlu0 71
  %1835 = vperm.xlu0 %1834, %v112
  %v1836 = vpop.permute.xlu0 %1835
  %1838 = vset.pattern.permute.xlu0 71
  %1839 = vperm.xlu0 %1838, %v117
  %v1840 = vpop.permute.xlu0 %1839
  %v1842 = vlaneseq
  %v1843 = vshrl.u32 %v1842, 7
  %v1844 = vsub.s32 7, %v1843
  %v1845 = vrot.slane %v191, %v1844
  %v1846 = vadd.f32 %v1836, %v1845
  %v1847 = vadd.f32 %v1840, %v1845
  %v1848 = vmul.f32 %v1846, %v1832
  %v1849 = vmul.f32 %v1847, %v1833
  %vm1850 = vcmp.ge.f32.partialorder %v1848, 0.0
  %vm1851 = vcmp.ge.f32.partialorder %v1849, 0.0
  %v1852 = vmul.f32 %v1848, 0.2
  %v1853 = vmul.f32 %v1849, 0.2
  %v1854 = vsel %vm1850, %v1848, %v1852
  %v1855 = vsel %vm1851, %v1849, %v1853
  %v1856 = vadd.f32 %v1854, %v32
  %v1857 = vadd.f32 %v1855, %v33
  %v1858 = vmul.f32 %v1856, 1.442695
  %v1859 = vpow.pop %v1858
  %v1860 = vmul.f32 %v1857, 1.442695
  %v1861 = vpow.pop %v1860
  %v1862 = vsel %vm38, %v1859, 0.0
  %1863 = vadd.xlane.f32.xlu0 %v1862
  %v1864 = vpop.xlane.xlu0 %1863
  %v1865 = vsel %vm38, %v1861, 0.0
  %1866 = vadd.xlane.f32.xlu0 %v1865
  %v1867 = vpop.xlane.xlu0 %1866
  %v1868 = vrcp.pop %v1864
  %v1869 = vmul.f32 %v1859, %v1868
  %v1870 = vrcp.pop %v1867
  %v1871 = vmul.f32 %v1861, %v1870
  %v1875 = vsel %vm38, %v1869, 0
  %v1878 = vsel %vm38, %v1871, 0
  %1880 = vmatprep.subr.mxu0 0.0
  %1881 = vmatpush1.msra.mxu0 %v1744
  %1882 = vmatprep.subr.mxu0 0.0
  %1883 = vmatpush1.msra.mxu0 %v1746
  %1884 = vmatprep.subr.mxu0 0.0
  %1885 = vmatpush1.msra.mxu0 0.0
  %1886 = vmatprep.subr.mxu0 0.0
  %1887 = vmatpush1.msra.mxu0 0.0
  %1888 = vmatprep.subr.mxu0 0.0
  %1889 = vmatpush1.msra.mxu0 0.0
  %1890 = vmatprep.subr.mxu0 0.0
  %1891 = vmatpush1.msra.mxu0 0.0
  %1892 = vmatprep.subr.mxu0 0.0
  %1893 = vmatpush1.msra.mxu0 0.0
  %1894 = vmatprep.subr.mxu0 0.0
  %1895 = vmatpush1.msra.mxu0 0.0
  %1896 = vmatprep.subr.mxu0 0.0
  %1897 = vmatpush1.msra.mxu0 0.0
  %1898 = vmatprep.subr.mxu0 0.0
  %1899 = vmatpush1.msra.mxu0 0.0
  %1900 = vmatprep.subr.mxu0 0.0
  %1901 = vmatpush1.msra.mxu0 0.0
  %1902 = vmatprep.subr.mxu0 0.0
  %1903 = vmatpush1.msra.mxu0 0.0
  %1904 = vmatprep.subr.mxu0 0.0
  %1905 = vmatpush1.msra.mxu0 0.0
  %1906 = vmatprep.subr.mxu0 0.0
  %1907 = vmatpush1.msra.mxu0 0.0
  %1908 = vmatprep.subr.mxu0 0.0
  %1909 = vmatpush1.msra.mxu0 0.0
  %1910 = vmatprep.subr.mxu0 0.0
  %1911 = vmatpush1.msra.mxu0 0.0
  %1912 = vmatprep.subr.mxu0 0.0
  %1913 = vmatpush1.msra.mxu0 0.0
  %1914 = vmatprep.subr.mxu0 0.0
  %1915 = vmatpush1.msra.mxu0 0.0
  %1916 = vmatprep.subr.mxu0 0.0
  %1917 = vmatpush1.msra.mxu0 0.0
  %1918 = vmatprep.subr.mxu0 0.0
  %1919 = vmatpush1.msra.mxu0 0.0
  %1920 = vmatprep.subr.mxu0 0.0
  %1921 = vmatpush1.msra.mxu0 0.0
  %1922 = vmatprep.subr.mxu0 0.0
  %1923 = vmatpush1.msra.mxu0 0.0
  %1924 = vmatprep.subr.mxu0 0.0
  %1925 = vmatpush1.msra.mxu0 0.0
  %1926 = vmatprep.subr.mxu0 0.0
  %1927 = vmatpush1.msra.mxu0 0.0
  %1928 = vmatprep.subr.mxu0 0.0
  %1929 = vmatpush1.msra.mxu0 0.0
  %1930 = vmatprep.subr.mxu0 0.0
  %1931 = vmatpush1.msra.mxu0 0.0
  %1932 = vmatprep.subr.mxu0 0.0
  %1933 = vmatpush1.msra.mxu0 0.0
  %1934 = vmatprep.subr.mxu0 0.0
  %1935 = vmatpush1.msra.mxu0 0.0
  %1936 = vmatprep.subr.mxu0 0.0
  %1937 = vmatpush1.msra.mxu0 0.0
  %1938 = vmatprep.subr.mxu0 0.0
  %1939 = vmatpush1.msra.mxu0 0.0
  %1940 = vmatprep.subr.mxu0 0.0
  %1941 = vmatpush1.msra.mxu0 0.0
  %1942 = vmatprep.subr.mxu0 0.0
  %1943 = vmatpush1.msra.mxu0 0.0
  %1944 = vmatprep.mubr.f32.mxu0 0.0
  %1945 = vmatmul.mubr.f32.gmra.mrb[0].mxu0 %v1875
  %v1946 = vpop.f32.mrb[0].mxu0
  %v1947 = vadd.f32 0.0, %v1946
  %v1948 = vpop.f32.mrb[0].mxu0
  %1949 = vmatprep.mubr.f32.mxu0 0.0
  %1950 = vmatmul.mubr.f32.gmra.mrb[0].mxu0 %v1878
  %v1951 = vpop.f32.mrb[0].mxu0
  %v1952 = vadd.f32 0.0, %v1951
  %v1953 = vpop.f32.mrb[0].mxu0
  %1954 = vdwg.mxu0
  %1957 = vrot.lane.b32.xlu0 %v1947, 56
  %v1958 = vpop.permute.xlu0 %1957
  %1959 = vrot.lane.b32.xlu0 %v1952, 56
  %v1960 = vpop.permute.xlu0 %1959
  %vm1963 = vcmask 523712
  %1964 = vst.msk [vmem:[#allocation2] sm:$0xff] %vm1963, %v1958
  %1965 = vst.msk [vmem:[#allocation2 + $0x8] sm:$0xff] %vm1963, %v1960
  %v1966 = vld [vmem:[#allocation2] sm:$0xff]
  %v1967 = vld [vmem:[#allocation2 + $0x8] sm:$0xff]
  %v1968 = vld [vmem:[%s4] sm:$0x1]
  %v1970 = vlaneseq
  %v1971 = vshrl.u32 %v1970, 7
  %v1972 = vsub.s32 0, %v1971
  %v1973 = vrot.slane %v1968, %v1972
  %v1975 = vadd.f32 %v1966, %v1973
  %v1976 = vadd.f32 %v1967, %v1973
  %vm1977 = vcmp.gt.f32.partialorder %v1975, 0.0
  %vm1978 = vcmp.gt.f32.partialorder %v1976, 0.0
  %v1979 = vmin.f32 %v1975, 0.0
  %v1980 = vmin.f32 %v1976, 0.0
  %v1981 = vmul.f32 %v1979, 1.442695
  %v1982 = vpow.pop %v1981
  %v1983 = vmul.f32 %v1980, 1.442695
  %v1984 = vpow.pop %v1983
  %v1985 = vsub.f32 %v1982, 1.0
  %v1986 = vsub.f32 %v1984, 1.0
  %v1987 = vsel %vm1977, %v1975, %v1985
  %v1988 = vsel %vm1978, %v1976, %v1986
  %v1989 = vld [vmem:[%s5] sm:$0xff]
  %v1990 = vld [vmem:[%s5 + $0x8] sm:$0xff]
  %v1991 = vld [vmem:[%s5 + $0x10] sm:$0xff]
  %v1992 = vld [vmem:[%s5 + $0x18] sm:$0xff]
  %v1993 = vld [vmem:[%s5 + $0x20] sm:$0xff]
  %v1994 = vld [vmem:[%s5 + $0x28] sm:$0xff]
  %v1995 = vld [vmem:[%s5 + $0x30] sm:$0xff]
  %v1996 = vld [vmem:[%s5 + $0x38] sm:$0xff]
  %vm1997 = vcmask 523264
  %v1999 = vsel %vm1997, %v1987, 0
  %v2002 = vsel %vm1997, %v1988, 0
  %2004 = vmatprep.subr.mxu0 0.0
  %2005 = vmatpush1.msra.mxu0 %v1989
  %2006 = vmatprep.subr.mxu0 0.0
  %2007 = vmatpush1.msra.mxu0 %v1990
  %2008 = vmatprep.subr.mxu0 0.0
  %2009 = vmatpush1.msra.mxu0 %v1991
  %2010 = vmatprep.subr.mxu0 0.0
  %2011 = vmatpush1.msra.mxu0 %v1992
  %2012 = vmatprep.subr.mxu0 0.0
  %2013 = vmatpush1.msra.mxu0 %v1993
  %2014 = vmatprep.subr.mxu0 0.0
  %2015 = vmatpush1.msra.mxu0 %v1994
  %2016 = vmatprep.subr.mxu0 0.0
  %2017 = vmatpush1.msra.mxu0 %v1995
  %2018 = vmatprep.subr.mxu0 0.0
  %2019 = vmatpush1.msra.mxu0 %v1996
  %2020 = vmatprep.subr.mxu0 0.0
  %2021 = vmatpush1.msra.mxu0 0.0
  %2022 = vmatprep.subr.mxu0 0.0
  %2023 = vmatpush1.msra.mxu0 0.0
  %2024 = vmatprep.subr.mxu0 0.0
  %2025 = vmatpush1.msra.mxu0 0.0
  %2026 = vmatprep.subr.mxu0 0.0
  %2027 = vmatpush1.msra.mxu0 0.0
  %2028 = vmatprep.subr.mxu0 0.0
  %2029 = vmatpush1.msra.mxu0 0.0
  %2030 = vmatprep.subr.mxu0 0.0
  %2031 = vmatpush1.msra.mxu0 0.0
  %2032 = vmatprep.subr.mxu0 0.0
  %2033 = vmatpush1.msra.mxu0 0.0
  %2034 = vmatprep.subr.mxu0 0.0
  %2035 = vmatpush1.msra.mxu0 0.0
  %2036 = vmatprep.subr.mxu0 0.0
  %2037 = vmatpush1.msra.mxu0 0.0
  %2038 = vmatprep.subr.mxu0 0.0
  %2039 = vmatpush1.msra.mxu0 0.0
  %2040 = vmatprep.subr.mxu0 0.0
  %2041 = vmatpush1.msra.mxu0 0.0
  %2042 = vmatprep.subr.mxu0 0.0
  %2043 = vmatpush1.msra.mxu0 0.0
  %2044 = vmatprep.subr.mxu0 0.0
  %2045 = vmatpush1.msra.mxu0 0.0
  %2046 = vmatprep.subr.mxu0 0.0
  %2047 = vmatpush1.msra.mxu0 0.0
  %2048 = vmatprep.subr.mxu0 0.0
  %2049 = vmatpush1.msra.mxu0 0.0
  %2050 = vmatprep.subr.mxu0 0.0
  %2051 = vmatpush1.msra.mxu0 0.0
  %2052 = vmatprep.subr.mxu0 0.0
  %2053 = vmatpush1.msra.mxu0 0.0
  %2054 = vmatprep.subr.mxu0 0.0
  %2055 = vmatpush1.msra.mxu0 0.0
  %2056 = vmatprep.subr.mxu0 0.0
  %2057 = vmatpush1.msra.mxu0 0.0
  %2058 = vmatprep.subr.mxu0 0.0
  %2059 = vmatpush1.msra.mxu0 0.0
  %2060 = vmatprep.subr.mxu0 0.0
  %2061 = vmatpush1.msra.mxu0 0.0
  %2062 = vmatprep.subr.mxu0 0.0
  %2063 = vmatpush1.msra.mxu0 0.0
  %2064 = vmatprep.subr.mxu0 0.0
  %2065 = vmatpush1.msra.mxu0 0.0
  %2066 = vmatprep.subr.mxu0 0.0
  %2067 = vmatpush1.msra.mxu0 0.0
  %2068 = vmatprep.mubr.f32.mxu0 0.0
  %2069 = vmatmul.mubr.f32.gmra.mrb[0].mxu0 %v1999
  %v2070 = vpop.f32.mrb[0].mxu0
  %v2071 = vadd.f32 0.0, %v2070
  %v2072 = vpop.f32.mrb[0].mxu0
  %2073 = vmatprep.mubr.f32.mxu0 0.0
  %2074 = vmatmul.mubr.f32.gmra.mrb[0].mxu0 %v2002
  %v2075 = vpop.f32.mrb[0].mxu0
  %v2076 = vadd.f32 0.0, %v2075
  %v2077 = vpop.f32.mrb[0].mxu0
  %2078 = vdwg.mxu0
  %v2079 = vld [vmem:[%s6] sm:$0xff]
  %v2081 = vsel %vm1997, %v2079, 0
  %2083 = vmatprep.subr.mxu0 0.0
  %2084 = vmatpush1.xpose.msra.mxu0 %v1999
  %2085 = vmatprep.subr.mxu0 0.0
  %2086 = vmatpush1.xpose.msra.mxu0 %v2002
  %2087 = vmatprep.subr.mxu0 0.0
  %2088 = vmatpush1.xpose.msra.mxu0 0.0
  %2089 = vmatprep.subr.mxu0 0.0
  %2090 = vmatpush1.xpose.msra.mxu0 0.0
  %2091 = vmatprep.subr.mxu0 0.0
  %2092 = vmatpush1.xpose.msra.mxu0 0.0
  %2093 = vmatprep.subr.mxu0 0.0
  %2094 = vmatpush1.xpose.msra.mxu0 0.0
  %2095 = vmatprep.subr.mxu0 0.0
  %2096 = vmatpush1.xpose.msra.mxu0 0.0
  %2097 = vmatprep.subr.mxu0 0.0
  %2098 = vmatpush1.xpose.msra.mxu0 0.0
  %2099 = vmatprep.subr.mxu0 0.0
  %2100 = vmatpush1.xpose.msra.mxu0 0.0
  %2101 = vmatprep.subr.mxu0 0.0
  %2102 = vmatpush1.xpose.msra.mxu0 0.0
  %2103 = vmatprep.subr.mxu0 0.0
  %2104 = vmatpush1.xpose.msra.mxu0 0.0
  %2105 = vmatprep.subr.mxu0 0.0
  %2106 = vmatpush1.xpose.msra.mxu0 0.0
  %2107 = vmatprep.subr.mxu0 0.0
  %2108 = vmatpush1.xpose.msra.mxu0 0.0
  %2109 = vmatprep.subr.mxu0 0.0
  %2110 = vmatpush1.xpose.msra.mxu0 0.0
  %2111 = vmatprep.subr.mxu0 0.0
  %2112 = vmatpush1.xpose.msra.mxu0 0.0
  %2113 = vmatprep.subr.mxu0 0.0
  %2114 = vmatpush1.xpose.msra.mxu0 0.0
  %2115 = vmatprep.subr.mxu0 0.0
  %2116 = vmatpush1.xpose.msra.mxu0 0.0
  %2117 = vmatprep.subr.mxu0 0.0
  %2118 = vmatpush1.xpose.msra.mxu0 0.0
  %2119 = vmatprep.subr.mxu0 0.0
  %2120 = vmatpush1.xpose.msra.mxu0 0.0
  %2121 = vmatprep.subr.mxu0 0.0
  %2122 = vmatpush1.xpose.msra.mxu0 0.0
  %2123 = vmatprep.subr.mxu0 0.0
  %2124 = vmatpush1.xpose.msra.mxu0 0.0
  %2125 = vmatprep.subr.mxu0 0.0
  %2126 = vmatpush1.xpose.msra.mxu0 0.0
  %2127 = vmatprep.subr.mxu0 0.0
  %2128 = vmatpush1.xpose.msra.mxu0 0.0
  %2129 = vmatprep.subr.mxu0 0.0
  %2130 = vmatpush1.xpose.msra.mxu0 0.0
  %2131 = vmatprep.subr.mxu0 0.0
  %2132 = vmatpush1.xpose.msra.mxu0 0.0
  %2133 = vmatprep.subr.mxu0 0.0
  %2134 = vmatpush1.xpose.msra.mxu0 0.0
  %2135 = vmatprep.subr.mxu0 0.0
  %2136 = vmatpush1.xpose.msra.mxu0 0.0
  %2137 = vmatprep.subr.mxu0 0.0
  %2138 = vmatpush1.xpose.msra.mxu0 0.0
  %2139 = vmatprep.subr.mxu0 0.0
  %2140 = vmatpush1.xpose.msra.mxu0 0.0
  %2141 = vmatprep.subr.mxu0 0.0
  %2142 = vmatpush1.xpose.msra.mxu0 0.0
  %2143 = vmatprep.subr.mxu0 0.0
  %2144 = vmatpush1.xpose.msra.mxu0 0.0
  %2145 = vmatprep.subr.mxu0 0.0
  %2146 = vmatpush1.xpose.msra.mxu0 0.0
  %2147 = vmatprep.mubr.f32.mxu0 0.0
  %2148 = vmatmul.mubr.f32.gmra.mrb[0].mxu0 %v2081
  %v2149 = vpop.f32.mrb[0].mxu0
  %v2150 = vadd.f32 0.0, %v2149
  %v2151 = vpop.f32.mrb[0].mxu0
  %2152 = vdwg.mxu0
  %vm2153 = vcmask 31744
  %v2155 = vsel %vm2153, %v2071, 0
  %v2158 = vsel %vm2153, %v2076, 0
  %2160 = vmatprep.subr.mxu0 0.0
  %2161 = vmatpush1.xpose.msra.mxu0 %v2155
  %2162 = vmatprep.subr.mxu0 0.0
  %2163 = vmatpush1.xpose.msra.mxu0 %v2158
  %2164 = vmatprep.subr.mxu0 0.0
  %2165 = vmatpush1.xpose.msra.mxu0 0.0
  %2166 = vmatprep.subr.mxu0 0.0
  %2167 = vmatpush1.xpose.msra.mxu0 0.0
  %2168 = vmatprep.subr.mxu0 0.0
  %2169 = vmatpush1.xpose.msra.mxu0 0.0
  %2170 = vmatprep.subr.mxu0 0.0
  %2171 = vmatpush1.xpose.msra.mxu0 0.0
  %2172 = vmatprep.subr.mxu0 0.0
  %2173 = vmatpush1.xpose.msra.mxu0 0.0
  %2174 = vmatprep.subr.mxu0 0.0
  %2175 = vmatpush1.xpose.msra.mxu0 0.0
  %2176 = vmatprep.subr.mxu0 0.0
  %2177 = vmatpush1.xpose.msra.mxu0 0.0
  %2178 = vmatprep.subr.mxu0 0.0
  %2179 = vmatpush1.xpose.msra.mxu0 0.0
  %2180 = vmatprep.subr.mxu0 0.0
  %2181 = vmatpush1.xpose.msra.mxu0 0.0
  %2182 = vmatprep.subr.mxu0 0.0
  %2183 = vmatpush1.xpose.msra.mxu0 0.0
  %2184 = vmatprep.subr.mxu0 0.0
  %2185 = vmatpush1.xpose.msra.mxu0 0.0
  %2186 = vmatprep.subr.mxu0 0.0
  %2187 = vmatpush1.xpose.msra.mxu0 0.0
  %2188 = vmatprep.subr.mxu0 0.0
  %2189 = vmatpush1.xpose.msra.mxu0 0.0
  %2190 = vmatprep.subr.mxu0 0.0
  %2191 = vmatpush1.xpose.msra.mxu0 0.0
  %2192 = vmatprep.subr.mxu0 0.0
  %2193 = vmatpush1.xpose.msra.mxu0 0.0
  %2194 = vmatprep.subr.mxu0 0.0
  %2195 = vmatpush1.xpose.msra.mxu0 0.0
  %2196 = vmatprep.subr.mxu0 0.0
  %2197 = vmatpush1.xpose.msra.mxu0 0.0
  %2198 = vmatprep.subr.mxu0 0.0
  %2199 = vmatpush1.xpose.msra.mxu0 0.0
  %2200 = vmatprep.subr.mxu0 0.0
  %2201 = vmatpush1.xpose.msra.mxu0 0.0
  %2202 = vmatprep.subr.mxu0 0.0
  %2203 = vmatpush1.xpose.msra.mxu0 0.0
  %2204 = vmatprep.subr.mxu0 0.0
  %2205 = vmatpush1.xpose.msra.mxu0 0.0
  %2206 = vmatprep.subr.mxu0 0.0
  %2207 = vmatpush1.xpose.msra.mxu0 0.0
  %2208 = vmatprep.subr.mxu0 0.0
  %2209 = vmatpush1.xpose.msra.mxu0 0.0
  %2210 = vmatprep.subr.mxu0 0.0
  %2211 = vmatpush1.xpose.msra.mxu0 0.0
  %2212 = vmatprep.subr.mxu0 0.0
  %2213 = vmatpush1.xpose.msra.mxu0 0.0
  %2214 = vmatprep.subr.mxu0 0.0
  %2215 = vmatpush1.xpose.msra.mxu0 0.0
  %2216 = vmatprep.subr.mxu0 0.0
  %2217 = vmatpush1.xpose.msra.mxu0 0.0
  %2218 = vmatprep.subr.mxu0 0.0
  %2219 = vmatpush1.xpose.msra.mxu0 0.0
  %2220 = vmatprep.subr.mxu0 0.0
  %2221 = vmatpush1.xpose.msra.mxu0 0.0
  %2222 = vmatprep.subr.mxu0 0.0
  %2223 = vmatpush1.xpose.msra.mxu0 0.0
  %2224 = vmatprep.mubr.f32.mxu0 0.0
  %2225 = vmatmul.mubr.f32.gmra.mrb[0].mxu0 %v2155
  %v2226 = vpop.f32.mrb[0].mxu0
  %v2227 = vadd.f32 0.0, %v2226
  %v2228 = vpop.f32.mrb[0].mxu0
  %2229 = vmatprep.mubr.f32.mxu0 0.0
  %2230 = vmatmul.mubr.f32.gmra.mrb[0].mxu0 %v2158
  %v2231 = vpop.f32.mrb[0].mxu0
  %v2232 = vadd.f32 0.0, %v2231
  %v2233 = vpop.f32.mrb[0].mxu0
  %2234 = vdwg.mxu0
  %v2235 = vmul.f32 %v2227, 0.5
  %v2236 = vmul.f32 %v2232, 0.5
  %v2237 = vtanh.pop %v2235
  %v2238 = vtanh.pop %v2236
  %v2239 = vmul.f32 %v2237, 0.5
  %v2240 = vmul.f32 %v2238, 0.5
  %v2241 = vadd.f32 %v2239, 0.5
  %v2242 = vadd.f32 %v2240, 0.5
  %2243 = vset.pattern.permute.xlu0 32
  %2244 = vperm.xlu0 %2243, %v2071
  %v2245 = vpop.permute.xlu0 %2244
  %2247 = vset.pattern.permute.xlu0 32
  %2248 = vperm.xlu0 %2247, %v2076
  %v2249 = vpop.permute.xlu0 %2248
  %v2251 = vlaneseq
  %v2252 = vshrl.u32 %v2251, 7
  %v2253 = vsub.s32 0, %v2252
  %v2254 = vrot.slane %v2150, %v2253
  %v2255 = vadd.f32 %v2245, %v2254
  %v2256 = vadd.f32 %v2249, %v2254
  %v2257 = vmul.f32 %v2255, %v2241
  %v2258 = vmul.f32 %v2256, %v2242
  %vm2259 = vcmp.ge.f32.partialorder %v2257, 0.0
  %vm2260 = vcmp.ge.f32.partialorder %v2258, 0.0
  %v2261 = vmul.f32 %v2257, 0.2
  %v2262 = vmul.f32 %v2258, 0.2
  %v2263 = vsel %vm2259, %v2257, %v2261
  %v2264 = vsel %vm2260, %v2258, %v2262
  %v2265 = vadd.f32 %v2263, %v32
  %v2266 = vadd.f32 %v2264, %v33
  %v2267 = vmul.f32 %v2265, 1.442695
  %v2268 = vpow.pop %v2267
  %v2269 = vmul.f32 %v2266, 1.442695
  %v2270 = vpow.pop %v2269
  %v2271 = vsel %vm38, %v2268, 0.0
  %2272 = vadd.xlane.f32.xlu0 %v2271
  %v2273 = vpop.xlane.xlu0 %2272
  %v2274 = vsel %vm38, %v2270, 0.0
  %2275 = vadd.xlane.f32.xlu0 %v2274
  %v2276 = vpop.xlane.xlu0 %2275
  %v2277 = vrcp.pop %v2273
  %v2278 = vmul.f32 %v2268, %v2277
  %v2279 = vrcp.pop %v2276
  %v2280 = vmul.f32 %v2270, %v2279
  %v2282 = vsel %vm38, %v2278, 0
  %v2285 = vsel %vm38, %v2280, 0
  %2287 = vmatprep.subr.mxu0 0.0
  %2288 = vmatpush1.msra.mxu0 %v2071
  %2289 = vmatprep.subr.mxu0 0.0
  %2290 = vmatpush1.msra.mxu0 %v2076
  %2291 = vmatprep.subr.mxu0 0.0
  %2292 = vmatpush1.msra.mxu0 0.0
  %2293 = vmatprep.subr.mxu0 0.0
  %2294 = vmatpush1.msra.mxu0 0.0
  %2295 = vmatprep.subr.mxu0 0.0
  %2296 = vmatpush1.msra.mxu0 0.0
  %2297 = vmatprep.subr.mxu0 0.0
  %2298 = vmatpush1.msra.mxu0 0.0
  %2299 = vmatprep.subr.mxu0 0.0
  %2300 = vmatpush1.msra.mxu0 0.0
  %2301 = vmatprep.subr.mxu0 0.0
  %2302 = vmatpush1.msra.mxu0 0.0
  %2303 = vmatprep.subr.mxu0 0.0
  %2304 = vmatpush1.msra.mxu0 0.0
  %2305 = vmatprep.subr.mxu0 0.0
  %2306 = vmatpush1.msra.mxu0 0.0
  %2307 = vmatprep.subr.mxu0 0.0
  %2308 = vmatpush1.msra.mxu0 0.0
  %2309 = vmatprep.subr.mxu0 0.0
  %2310 = vmatpush1.msra.mxu0 0.0
  %2311 = vmatprep.subr.mxu0 0.0
  %2312 = vmatpush1.msra.mxu0 0.0
  %2313 = vmatprep.subr.mxu0 0.0
  %2314 = vmatpush1.msra.mxu0 0.0
  %2315 = vmatprep.subr.mxu0 0.0
  %2316 = vmatpush1.msra.mxu0 0.0
  %2317 = vmatprep.subr.mxu0 0.0
  %2318 = vmatpush1.msra.mxu0 0.0
  %2319 = vmatprep.subr.mxu0 0.0
  %2320 = vmatpush1.msra.mxu0 0.0
  %2321 = vmatprep.subr.mxu0 0.0
  %2322 = vmatpush1.msra.mxu0 0.0
  %2323 = vmatprep.subr.mxu0 0.0
  %2324 = vmatpush1.msra.mxu0 0.0
  %2325 = vmatprep.subr.mxu0 0.0
  %2326 = vmatpush1.msra.mxu0 0.0
  %2327 = vmatprep.subr.mxu0 0.0
  %2328 = vmatpush1.msra.mxu0 0.0
  %2329 = vmatprep.subr.mxu0 0.0
  %2330 = vmatpush1.msra.mxu0 0.0
  %2331 = vmatprep.subr.mxu0 0.0
  %2332 = vmatpush1.msra.mxu0 0.0
  %2333 = vmatprep.subr.mxu0 0.0
  %2334 = vmatpush1.msra.mxu0 0.0
  %2335 = vmatprep.subr.mxu0 0.0
  %2336 = vmatpush1.msra.mxu0 0.0
  %2337 = vmatprep.subr.mxu0 0.0
  %2338 = vmatpush1.msra.mxu0 0.0
  %2339 = vmatprep.subr.mxu0 0.0
  %2340 = vmatpush1.msra.mxu0 0.0
  %2341 = vmatprep.subr.mxu0 0.0
  %2342 = vmatpush1.msra.mxu0 0.0
  %2343 = vmatprep.subr.mxu0 0.0
  %2344 = vmatpush1.msra.mxu0 0.0
  %2345 = vmatprep.subr.mxu0 0.0
  %2346 = vmatpush1.msra.mxu0 0.0
  %2347 = vmatprep.subr.mxu0 0.0
  %2348 = vmatpush1.msra.mxu0 0.0
  %2349 = vmatprep.subr.mxu0 0.0
  %2350 = vmatpush1.msra.mxu0 0.0
  %2351 = vmatprep.mubr.f32.mxu0 0.0
  %2352 = vmatmul.mubr.f32.gmra.mrb[0].mxu0 %v2282
  %v2353 = vpop.f32.mrb[0].mxu0
  %v2354 = vadd.f32 0.0, %v2353
  %v2355 = vpop.f32.mrb[0].mxu0
  %2356 = vmatprep.mubr.f32.mxu0 0.0
  %2357 = vmatmul.mubr.f32.gmra.mrb[0].mxu0 %v2285
  %v2358 = vpop.f32.mrb[0].mxu0
  %v2359 = vadd.f32 0.0, %v2358
  %v2360 = vpop.f32.mrb[0].mxu0
  %2361 = vdwg.mxu0
  %2362 = vst.msk [vmem:[#allocation3] sm:$0xff] %vm2153, %v2354
  %2363 = vst.msk [vmem:[#allocation3 + $0x8] sm:$0xff] %vm2153, %v2359
  %2364 = vrot.lane.b32.xlu0 %v2071, 124
  %v2365 = vpop.permute.xlu0 %2364
  %2366 = vrot.lane.b32.xlu0 %v2076, 124
  %v2367 = vpop.permute.xlu0 %2366
  %v2368 = vsel %vm2153, %v2365, 0
  %v2370 = vsel %vm2153, %v2367, 0
  %2372 = vmatprep.subr.mxu0 0.0
  %2373 = vmatpush1.xpose.msra.mxu0 %v2368
  %2374 = vmatprep.subr.mxu0 0.0
  %2375 = vmatpush1.xpose.msra.mxu0 %v2370
  %2376 = vmatprep.subr.mxu0 0.0
  %2377 = vmatpush1.xpose.msra.mxu0 0.0
  %2378 = vmatprep.subr.mxu0 0.0
  %2379 = vmatpush1.xpose.msra.mxu0 0.0
  %2380 = vmatprep.subr.mxu0 0.0
  %2381 = vmatpush1.xpose.msra.mxu0 0.0
  %2382 = vmatprep.subr.mxu0 0.0
  %2383 = vmatpush1.xpose.msra.mxu0 0.0
  %2384 = vmatprep.subr.mxu0 0.0
  %2385 = vmatpush1.xpose.msra.mxu0 0.0
  %2386 = vmatprep.subr.mxu0 0.0
  %2387 = vmatpush1.xpose.msra.mxu0 0.0
  %2388 = vmatprep.subr.mxu0 0.0
  %2389 = vmatpush1.xpose.msra.mxu0 0.0
  %2390 = vmatprep.subr.mxu0 0.0
  %2391 = vmatpush1.xpose.msra.mxu0 0.0
  %2392 = vmatprep.subr.mxu0 0.0
  %2393 = vmatpush1.xpose.msra.mxu0 0.0
  %2394 = vmatprep.subr.mxu0 0.0
  %2395 = vmatpush1.xpose.msra.mxu0 0.0
  %2396 = vmatprep.subr.mxu0 0.0
  %2397 = vmatpush1.xpose.msra.mxu0 0.0
  %2398 = vmatprep.subr.mxu0 0.0
  %2399 = vmatpush1.xpose.msra.mxu0 0.0
  %2400 = vmatprep.subr.mxu0 0.0
  %2401 = vmatpush1.xpose.msra.mxu0 0.0
  %2402 = vmatprep.subr.mxu0 0.0
  %2403 = vmatpush1.xpose.msra.mxu0 0.0
  %2404 = vmatprep.subr.mxu0 0.0
  %2405 = vmatpush1.xpose.msra.mxu0 0.0
  %2406 = vmatprep.subr.mxu0 0.0
  %2407 = vmatpush1.xpose.msra.mxu0 0.0
  %2408 = vmatprep.subr.mxu0 0.0
  %2409 = vmatpush1.xpose.msra.mxu0 0.0
  %2410 = vmatprep.subr.mxu0 0.0
  %2411 = vmatpush1.xpose.msra.mxu0 0.0
  %2412 = vmatprep.subr.mxu0 0.0
  %2413 = vmatpush1.xpose.msra.mxu0 0.0
  %2414 = vmatprep.subr.mxu0 0.0
  %2415 = vmatpush1.xpose.msra.mxu0 0.0
  %2416 = vmatprep.subr.mxu0 0.0
  %2417 = vmatpush1.xpose.msra.mxu0 0.0
  %2418 = vmatprep.subr.mxu0 0.0
  %2419 = vmatpush1.xpose.msra.mxu0 0.0
  %2420 = vmatprep.subr.mxu0 0.0
  %2421 = vmatpush1.xpose.msra.mxu0 0.0
  %2422 = vmatprep.subr.mxu0 0.0
  %2423 = vmatpush1.xpose.msra.mxu0 0.0
  %2424 = vmatprep.subr.mxu0 0.0
  %2425 = vmatpush1.xpose.msra.mxu0 0.0
  %2426 = vmatprep.subr.mxu0 0.0
  %2427 = vmatpush1.xpose.msra.mxu0 0.0
  %2428 = vmatprep.subr.mxu0 0.0
  %2429 = vmatpush1.xpose.msra.mxu0 0.0
  %2430 = vmatprep.subr.mxu0 0.0
  %2431 = vmatpush1.xpose.msra.mxu0 0.0
  %2432 = vmatprep.subr.mxu0 0.0
  %2433 = vmatpush1.xpose.msra.mxu0 0.0
  %2434 = vmatprep.subr.mxu0 0.0
  %2435 = vmatpush1.xpose.msra.mxu0 0.0
  %2436 = vmatprep.mubr.f32.mxu0 0.0
  %2437 = vmatmul.mubr.f32.gmra.mrb[0].mxu0 %v2368
  %v2438 = vpop.f32.mrb[0].mxu0
  %v2439 = vadd.f32 0.0, %v2438
  %v2440 = vpop.f32.mrb[0].mxu0
  %2441 = vmatprep.mubr.f32.mxu0 0.0
  %2442 = vmatmul.mubr.f32.gmra.mrb[0].mxu0 %v2370
  %v2443 = vpop.f32.mrb[0].mxu0
  %v2444 = vadd.f32 0.0, %v2443
  %v2445 = vpop.f32.mrb[0].mxu0
  %2446 = vdwg.mxu0
  %v2447 = vmul.f32 %v2439, 0.5
  %v2448 = vmul.f32 %v2444, 0.5
  %v2449 = vtanh.pop %v2447
  %v2450 = vtanh.pop %v2448
  %v2451 = vmul.f32 %v2449, 0.5
  %v2452 = vmul.f32 %v2450, 0.5
  %v2453 = vadd.f32 %v2451, 0.5
  %v2454 = vadd.f32 %v2452, 0.5
  %2455 = vset.pattern.permute.xlu0 33
  %2456 = vperm.xlu0 %2455, %v2071
  %v2457 = vpop.permute.xlu0 %2456
  %2459 = vset.pattern.permute.xlu0 33
  %2460 = vperm.xlu0 %2459, %v2076
  %v2461 = vpop.permute.xlu0 %2460
  %v2463 = vlaneseq
  %v2464 = vshrl.u32 %v2463, 7
  %v2465 = vsub.s32 1, %v2464
  %v2466 = vrot.slane %v2150, %v2465
  %v2467 = vadd.f32 %v2457, %v2466
  %v2468 = vadd.f32 %v2461, %v2466
  %v2469 = vmul.f32 %v2467, %v2453
  %v2470 = vmul.f32 %v2468, %v2454
  %vm2471 = vcmp.ge.f32.partialorder %v2469, 0.0
  %vm2472 = vcmp.ge.f32.partialorder %v2470, 0.0
  %v2473 = vmul.f32 %v2469, 0.2
  %v2474 = vmul.f32 %v2470, 0.2
  %v2475 = vsel %vm2471, %v2469, %v2473
  %v2476 = vsel %vm2472, %v2470, %v2474
  %v2477 = vadd.f32 %v2475, %v32
  %v2478 = vadd.f32 %v2476, %v33
  %v2479 = vmul.f32 %v2477, 1.442695
  %v2480 = vpow.pop %v2479
  %v2481 = vmul.f32 %v2478, 1.442695
  %v2482 = vpow.pop %v2481
  %v2483 = vsel %vm38, %v2480, 0.0
  %2484 = vadd.xlane.f32.xlu0 %v2483
  %v2485 = vpop.xlane.xlu0 %2484
  %v2486 = vsel %vm38, %v2482, 0.0
  %2487 = vadd.xlane.f32.xlu0 %v2486
  %v2488 = vpop.xlane.xlu0 %2487
  %v2489 = vrcp.pop %v2485
  %v2490 = vmul.f32 %v2480, %v2489
  %v2491 = vrcp.pop %v2488
  %v2492 = vmul.f32 %v2482, %v2491
  %v2496 = vsel %vm38, %v2490, 0
  %v2499 = vsel %vm38, %v2492, 0
  %2501 = vmatprep.subr.mxu0 0.0
  %2502 = vmatpush1.msra.mxu0 %v2365
  %2503 = vmatprep.subr.mxu0 0.0
  %2504 = vmatpush1.msra.mxu0 %v2367
  %2505 = vmatprep.subr.mxu0 0.0
  %2506 = vmatpush1.msra.mxu0 0.0
  %2507 = vmatprep.subr.mxu0 0.0
  %2508 = vmatpush1.msra.mxu0 0.0
  %2509 = vmatprep.subr.mxu0 0.0
  %2510 = vmatpush1.msra.mxu0 0.0
  %2511 = vmatprep.subr.mxu0 0.0
  %2512 = vmatpush1.msra.mxu0 0.0
  %2513 = vmatprep.subr.mxu0 0.0
  %2514 = vmatpush1.msra.mxu0 0.0
  %2515 = vmatprep.subr.mxu0 0.0
  %2516 = vmatpush1.msra.mxu0 0.0
  %2517 = vmatprep.subr.mxu0 0.0
  %2518 = vmatpush1.msra.mxu0 0.0
  %2519 = vmatprep.subr.mxu0 0.0
  %2520 = vmatpush1.msra.mxu0 0.0
  %2521 = vmatprep.subr.mxu0 0.0
  %2522 = vmatpush1.msra.mxu0 0.0
  %2523 = vmatprep.subr.mxu0 0.0
  %2524 = vmatpush1.msra.mxu0 0.0
  %2525 = vmatprep.subr.mxu0 0.0
  %2526 = vmatpush1.msra.mxu0 0.0
  %2527 = vmatprep.subr.mxu0 0.0
  %2528 = vmatpush1.msra.mxu0 0.0
  %2529 = vmatprep.subr.mxu0 0.0
  %2530 = vmatpush1.msra.mxu0 0.0
  %2531 = vmatprep.subr.mxu0 0.0
  %2532 = vmatpush1.msra.mxu0 0.0
  %2533 = vmatprep.subr.mxu0 0.0
  %2534 = vmatpush1.msra.mxu0 0.0
  %2535 = vmatprep.subr.mxu0 0.0
  %2536 = vmatpush1.msra.mxu0 0.0
  %2537 = vmatprep.subr.mxu0 0.0
  %2538 = vmatpush1.msra.mxu0 0.0
  %2539 = vmatprep.subr.mxu0 0.0
  %2540 = vmatpush1.msra.mxu0 0.0
  %2541 = vmatprep.subr.mxu0 0.0
  %2542 = vmatpush1.msra.mxu0 0.0
  %2543 = vmatprep.subr.mxu0 0.0
  %2544 = vmatpush1.msra.mxu0 0.0
  %2545 = vmatprep.subr.mxu0 0.0
  %2546 = vmatpush1.msra.mxu0 0.0
  %2547 = vmatprep.subr.mxu0 0.0
  %2548 = vmatpush1.msra.mxu0 0.0
  %2549 = vmatprep.subr.mxu0 0.0
  %2550 = vmatpush1.msra.mxu0 0.0
  %2551 = vmatprep.subr.mxu0 0.0
  %2552 = vmatpush1.msra.mxu0 0.0
  %2553 = vmatprep.subr.mxu0 0.0
  %2554 = vmatpush1.msra.mxu0 0.0
  %2555 = vmatprep.subr.mxu0 0.0
  %2556 = vmatpush1.msra.mxu0 0.0
  %2557 = vmatprep.subr.mxu0 0.0
  %2558 = vmatpush1.msra.mxu0 0.0
  %2559 = vmatprep.subr.mxu0 0.0
  %2560 = vmatpush1.msra.mxu0 0.0
  %2561 = vmatprep.subr.mxu0 0.0
  %2562 = vmatpush1.msra.mxu0 0.0
  %2563 = vmatprep.subr.mxu0 0.0
  %2564 = vmatpush1.msra.mxu0 0.0
  %2565 = vmatprep.mubr.f32.mxu0 0.0
  %2566 = vmatmul.mubr.f32.gmra.mrb[0].mxu0 %v2496
  %v2567 = vpop.f32.mrb[0].mxu0
  %v2568 = vadd.f32 0.0, %v2567
  %v2569 = vpop.f32.mrb[0].mxu0
  %2570 = vmatprep.mubr.f32.mxu0 0.0
  %2571 = vmatmul.mubr.f32.gmra.mrb[0].mxu0 %v2499
  %v2572 = vpop.f32.mrb[0].mxu0
  %v2573 = vadd.f32 0.0, %v2572
  %v2574 = vpop.f32.mrb[0].mxu0
  %2575 = vdwg.mxu0
  %2578 = vrot.lane.b32.xlu0 %v2568, 4
  %v2579 = vpop.permute.xlu0 %2578
  %2580 = vrot.lane.b32.xlu0 %v2573, 4
  %v2581 = vpop.permute.xlu0 %2580
  %vm2584 = vcmask 64544
  %2585 = vst.msk [vmem:[#allocation3] sm:$0xff] %vm2584, %v2579
  %2586 = vst.msk [vmem:[#allocation3 + $0x8] sm:$0xff] %vm2584, %v2581
  %2587 = vrot.lane.b32.xlu0 %v2071, 120
  %v2588 = vpop.permute.xlu0 %2587
  %2589 = vrot.lane.b32.xlu0 %v2076, 120
  %v2590 = vpop.permute.xlu0 %2589
  %v2591 = vsel %vm2153, %v2588, 0
  %v2593 = vsel %vm2153, %v2590, 0
  %2595 = vmatprep.subr.mxu0 0.0
  %2596 = vmatpush1.xpose.msra.mxu0 %v2591
  %2597 = vmatprep.subr.mxu0 0.0
  %2598 = vmatpush1.xpose.msra.mxu0 %v2593
  %2599 = vmatprep.subr.mxu0 0.0
  %2600 = vmatpush1.xpose.msra.mxu0 0.0
  %2601 = vmatprep.subr.mxu0 0.0
  %2602 = vmatpush1.xpose.msra.mxu0 0.0
  %2603 = vmatprep.subr.mxu0 0.0
  %2604 = vmatpush1.xpose.msra.mxu0 0.0
  %2605 = vmatprep.subr.mxu0 0.0
  %2606 = vmatpush1.xpose.msra.mxu0 0.0
  %2607 = vmatprep.subr.mxu0 0.0
  %2608 = vmatpush1.xpose.msra.mxu0 0.0
  %2609 = vmatprep.subr.mxu0 0.0
  %2610 = vmatpush1.xpose.msra.mxu0 0.0
  %2611 = vmatprep.subr.mxu0 0.0
  %2612 = vmatpush1.xpose.msra.mxu0 0.0
  %2613 = vmatprep.subr.mxu0 0.0
  %2614 = vmatpush1.xpose.msra.mxu0 0.0
  %2615 = vmatprep.subr.mxu0 0.0
  %2616 = vmatpush1.xpose.msra.mxu0 0.0
  %2617 = vmatprep.subr.mxu0 0.0
  %2618 = vmatpush1.xpose.msra.mxu0 0.0
  %2619 = vmatprep.subr.mxu0 0.0
  %2620 = vmatpush1.xpose.msra.mxu0 0.0
  %2621 = vmatprep.subr.mxu0 0.0
  %2622 = vmatpush1.xpose.msra.mxu0 0.0
  %2623 = vmatprep.subr.mxu0 0.0
  %2624 = vmatpush1.xpose.msra.mxu0 0.0
  %2625 = vmatprep.subr.mxu0 0.0
  %2626 = vmatpush1.xpose.msra.mxu0 0.0
  %2627 = vmatprep.subr.mxu0 0.0
  %2628 = vmatpush1.xpose.msra.mxu0 0.0
  %2629 = vmatprep.subr.mxu0 0.0
  %2630 = vmatpush1.xpose.msra.mxu0 0.0
  %2631 = vmatprep.subr.mxu0 0.0
  %2632 = vmatpush1.xpose.msra.mxu0 0.0
  %2633 = vmatprep.subr.mxu0 0.0
  %2634 = vmatpush1.xpose.msra.mxu0 0.0
  %2635 = vmatprep.subr.mxu0 0.0
  %2636 = vmatpush1.xpose.msra.mxu0 0.0
  %2637 = vmatprep.subr.mxu0 0.0
  %2638 = vmatpush1.xpose.msra.mxu0 0.0
  %2639 = vmatprep.subr.mxu0 0.0
  %2640 = vmatpush1.xpose.msra.mxu0 0.0
  %2641 = vmatprep.subr.mxu0 0.0
  %2642 = vmatpush1.xpose.msra.mxu0 0.0
  %2643 = vmatprep.subr.mxu0 0.0
  %2644 = vmatpush1.xpose.msra.mxu0 0.0
  %2645 = vmatprep.subr.mxu0 0.0
  %2646 = vmatpush1.xpose.msra.mxu0 0.0
  %2647 = vmatprep.subr.mxu0 0.0
  %2648 = vmatpush1.xpose.msra.mxu0 0.0
  %2649 = vmatprep.subr.mxu0 0.0
  %2650 = vmatpush1.xpose.msra.mxu0 0.0
  %2651 = vmatprep.subr.mxu0 0.0
  %2652 = vmatpush1.xpose.msra.mxu0 0.0
  %2653 = vmatprep.subr.mxu0 0.0
  %2654 = vmatpush1.xpose.msra.mxu0 0.0
  %2655 = vmatprep.subr.mxu0 0.0
  %2656 = vmatpush1.xpose.msra.mxu0 0.0
  %2657 = vmatprep.subr.mxu0 0.0
  %2658 = vmatpush1.xpose.msra.mxu0 0.0
  %2659 = vmatprep.mubr.f32.mxu0 0.0
  %2660 = vmatmul.mubr.f32.gmra.mrb[0].mxu0 %v2591
  %v2661 = vpop.f32.mrb[0].mxu0
  %v2662 = vadd.f32 0.0, %v2661
  %v2663 = vpop.f32.mrb[0].mxu0
  %2664 = vmatprep.mubr.f32.mxu0 0.0
  %2665 = vmatmul.mubr.f32.gmra.mrb[0].mxu0 %v2593
  %v2666 = vpop.f32.mrb[0].mxu0
  %v2667 = vadd.f32 0.0, %v2666
  %v2668 = vpop.f32.mrb[0].mxu0
  %2669 = vdwg.mxu0
  %v2670 = vmul.f32 %v2662, 0.5
  %v2671 = vmul.f32 %v2667, 0.5
  %v2672 = vtanh.pop %v2670
  %v2673 = vtanh.pop %v2671
  %v2674 = vmul.f32 %v2672, 0.5
  %v2675 = vmul.f32 %v2673, 0.5
  %v2676 = vadd.f32 %v2674, 0.5
  %v2677 = vadd.f32 %v2675, 0.5
  %2678 = vset.pattern.permute.xlu0 34
  %2679 = vperm.xlu0 %2678, %v2071
  %v2680 = vpop.permute.xlu0 %2679
  %2682 = vset.pattern.permute.xlu0 34
  %2683 = vperm.xlu0 %2682, %v2076
  %v2684 = vpop.permute.xlu0 %2683
  %v2686 = vlaneseq
  %v2687 = vshrl.u32 %v2686, 7
  %v2688 = vsub.s32 2, %v2687
  %v2689 = vrot.slane %v2150, %v2688
  %v2690 = vadd.f32 %v2680, %v2689
  %v2691 = vadd.f32 %v2684, %v2689
  %v2692 = vmul.f32 %v2690, %v2676
  %v2693 = vmul.f32 %v2691, %v2677
  %vm2694 = vcmp.ge.f32.partialorder %v2692, 0.0
  %vm2695 = vcmp.ge.f32.partialorder %v2693, 0.0
  %v2696 = vmul.f32 %v2692, 0.2
  %v2697 = vmul.f32 %v2693, 0.2
  %v2698 = vsel %vm2694, %v2692, %v2696
  %v2699 = vsel %vm2695, %v2693, %v2697
  %v2700 = vadd.f32 %v2698, %v32
  %v2701 = vadd.f32 %v2699, %v33
  %v2702 = vmul.f32 %v2700, 1.442695
  %v2703 = vpow.pop %v2702
  %v2704 = vmul.f32 %v2701, 1.442695
  %v2705 = vpow.pop %v2704
  %v2706 = vsel %vm38, %v2703, 0.0
  %2707 = vadd.xlane.f32.xlu0 %v2706
  %v2708 = vpop.xlane.xlu0 %2707
  %v2709 = vsel %vm38, %v2705, 0.0
  %2710 = vadd.xlane.f32.xlu0 %v2709
  %v2711 = vpop.xlane.xlu0 %2710
  %v2712 = vrcp.pop %v2708
  %v2713 = vmul.f32 %v2703, %v2712
  %v2714 = vrcp.pop %v2711
  %v2715 = vmul.f32 %v2705, %v2714
  %v2719 = vsel %vm38, %v2713, 0
  %v2722 = vsel %vm38, %v2715, 0
  %2724 = vmatprep.subr.mxu0 0.0
  %2725 = vmatpush1.msra.mxu0 %v2588
  %2726 = vmatprep.subr.mxu0 0.0
  %2727 = vmatpush1.msra.mxu0 %v2590
  %2728 = vmatprep.subr.mxu0 0.0
  %2729 = vmatpush1.msra.mxu0 0.0
  %2730 = vmatprep.subr.mxu0 0.0
  %2731 = vmatpush1.msra.mxu0 0.0
  %2732 = vmatprep.subr.mxu0 0.0
  %2733 = vmatpush1.msra.mxu0 0.0
  %2734 = vmatprep.subr.mxu0 0.0
  %2735 = vmatpush1.msra.mxu0 0.0
  %2736 = vmatprep.subr.mxu0 0.0
  %2737 = vmatpush1.msra.mxu0 0.0
  %2738 = vmatprep.subr.mxu0 0.0
  %2739 = vmatpush1.msra.mxu0 0.0
  %2740 = vmatprep.subr.mxu0 0.0
  %2741 = vmatpush1.msra.mxu0 0.0
  %2742 = vmatprep.subr.mxu0 0.0
  %2743 = vmatpush1.msra.mxu0 0.0
  %2744 = vmatprep.subr.mxu0 0.0
  %2745 = vmatpush1.msra.mxu0 0.0
  %2746 = vmatprep.subr.mxu0 0.0
  %2747 = vmatpush1.msra.mxu0 0.0
  %2748 = vmatprep.subr.mxu0 0.0
  %2749 = vmatpush1.msra.mxu0 0.0
  %2750 = vmatprep.subr.mxu0 0.0
  %2751 = vmatpush1.msra.mxu0 0.0
  %2752 = vmatprep.subr.mxu0 0.0
  %2753 = vmatpush1.msra.mxu0 0.0
  %2754 = vmatprep.subr.mxu0 0.0
  %2755 = vmatpush1.msra.mxu0 0.0
  %2756 = vmatprep.subr.mxu0 0.0
  %2757 = vmatpush1.msra.mxu0 0.0
  %2758 = vmatprep.subr.mxu0 0.0
  %2759 = vmatpush1.msra.mxu0 0.0
  %2760 = vmatprep.subr.mxu0 0.0
  %2761 = vmatpush1.msra.mxu0 0.0
  %2762 = vmatprep.subr.mxu0 0.0
  %2763 = vmatpush1.msra.mxu0 0.0
  %2764 = vmatprep.subr.mxu0 0.0
  %2765 = vmatpush1.msra.mxu0 0.0
  %2766 = vmatprep.subr.mxu0 0.0
  %2767 = vmatpush1.msra.mxu0 0.0
  %2768 = vmatprep.subr.mxu0 0.0
  %2769 = vmatpush1.msra.mxu0 0.0
  %2770 = vmatprep.subr.mxu0 0.0
  %2771 = vmatpush1.msra.mxu0 0.0
  %2772 = vmatprep.subr.mxu0 0.0
  %2773 = vmatpush1.msra.mxu0 0.0
  %2774 = vmatprep.subr.mxu0 0.0
  %2775 = vmatpush1.msra.mxu0 0.0
  %2776 = vmatprep.subr.mxu0 0.0
  %2777 = vmatpush1.msra.mxu0 0.0
  %2778 = vmatprep.subr.mxu0 0.0
  %2779 = vmatpush1.msra.mxu0 0.0
  %2780 = vmatprep.subr.mxu0 0.0
  %2781 = vmatpush1.msra.mxu0 0.0
  %2782 = vmatprep.subr.mxu0 0.0
  %2783 = vmatpush1.msra.mxu0 0.0
  %2784 = vmatprep.subr.mxu0 0.0
  %2785 = vmatpush1.msra.mxu0 0.0
  %2786 = vmatprep.subr.mxu0 0.0
  %2787 = vmatpush1.msra.mxu0 0.0
  %2788 = vmatprep.mubr.f32.mxu0 0.0
  %2789 = vmatmul.mubr.f32.gmra.mrb[0].mxu0 %v2719
  %v2790 = vpop.f32.mrb[0].mxu0
  %v2791 = vadd.f32 0.0, %v2790
  %v2792 = vpop.f32.mrb[0].mxu0
  %2793 = vmatprep.mubr.f32.mxu0 0.0
  %2794 = vmatmul.mubr.f32.gmra.mrb[0].mxu0 %v2722
  %v2795 = vpop.f32.mrb[0].mxu0
  %v2796 = vadd.f32 0.0, %v2795
  %v2797 = vpop.f32.mrb[0].mxu0
  %2798 = vdwg.mxu0
  %2801 = vrot.lane.b32.xlu0 %v2791, 8
  %v2802 = vpop.permute.xlu0 %2801
  %2803 = vrot.lane.b32.xlu0 %v2796, 8
  %v2804 = vpop.permute.xlu0 %2803
  %vm2807 = vcmask 97344
  %2808 = vst.msk [vmem:[#allocation3] sm:$0xff] %vm2807, %v2802
  %2809 = vst.msk [vmem:[#allocation3 + $0x8] sm:$0xff] %vm2807, %v2804
  %2810 = vrot.lane.b32.xlu0 %v2071, 116
  %v2811 = vpop.permute.xlu0 %2810
  %2812 = vrot.lane.b32.xlu0 %v2076, 116
  %v2813 = vpop.permute.xlu0 %2812
  %v2814 = vsel %vm2153, %v2811, 0
  %v2816 = vsel %vm2153, %v2813, 0
  %2818 = vmatprep.subr.mxu0 0.0
  %2819 = vmatpush1.xpose.msra.mxu0 %v2814
  %2820 = vmatprep.subr.mxu0 0.0
  %2821 = vmatpush1.xpose.msra.mxu0 %v2816
  %2822 = vmatprep.subr.mxu0 0.0
  %2823 = vmatpush1.xpose.msra.mxu0 0.0
  %2824 = vmatprep.subr.mxu0 0.0
  %2825 = vmatpush1.xpose.msra.mxu0 0.0
  %2826 = vmatprep.subr.mxu0 0.0
  %2827 = vmatpush1.xpose.msra.mxu0 0.0
  %2828 = vmatprep.subr.mxu0 0.0
  %2829 = vmatpush1.xpose.msra.mxu0 0.0
  %2830 = vmatprep.subr.mxu0 0.0
  %2831 = vmatpush1.xpose.msra.mxu0 0.0
  %2832 = vmatprep.subr.mxu0 0.0
  %2833 = vmatpush1.xpose.msra.mxu0 0.0
  %2834 = vmatprep.subr.mxu0 0.0
  %2835 = vmatpush1.xpose.msra.mxu0 0.0
  %2836 = vmatprep.subr.mxu0 0.0
  %2837 = vmatpush1.xpose.msra.mxu0 0.0
  %2838 = vmatprep.subr.mxu0 0.0
  %2839 = vmatpush1.xpose.msra.mxu0 0.0
  %2840 = vmatprep.subr.mxu0 0.0
  %2841 = vmatpush1.xpose.msra.mxu0 0.0
  %2842 = vmatprep.subr.mxu0 0.0
  %2843 = vmatpush1.xpose.msra.mxu0 0.0
  %2844 = vmatprep.subr.mxu0 0.0
  %2845 = vmatpush1.xpose.msra.mxu0 0.0
  %2846 = vmatprep.subr.mxu0 0.0
  %2847 = vmatpush1.xpose.msra.mxu0 0.0
  %2848 = vmatprep.subr.mxu0 0.0
  %2849 = vmatpush1.xpose.msra.mxu0 0.0
  %2850 = vmatprep.subr.mxu0 0.0
  %2851 = vmatpush1.xpose.msra.mxu0 0.0
  %2852 = vmatprep.subr.mxu0 0.0
  %2853 = vmatpush1.xpose.msra.mxu0 0.0
  %2854 = vmatprep.subr.mxu0 0.0
  %2855 = vmatpush1.xpose.msra.mxu0 0.0
  %2856 = vmatprep.subr.mxu0 0.0
  %2857 = vmatpush1.xpose.msra.mxu0 0.0
  %2858 = vmatprep.subr.mxu0 0.0
  %2859 = vmatpush1.xpose.msra.mxu0 0.0
  %2860 = vmatprep.subr.mxu0 0.0
  %2861 = vmatpush1.xpose.msra.mxu0 0.0
  %2862 = vmatprep.subr.mxu0 0.0
  %2863 = vmatpush1.xpose.msra.mxu0 0.0
  %2864 = vmatprep.subr.mxu0 0.0
  %2865 = vmatpush1.xpose.msra.mxu0 0.0
  %2866 = vmatprep.subr.mxu0 0.0
  %2867 = vmatpush1.xpose.msra.mxu0 0.0
  %2868 = vmatprep.subr.mxu0 0.0
  %2869 = vmatpush1.xpose.msra.mxu0 0.0
  %2870 = vmatprep.subr.mxu0 0.0
  %2871 = vmatpush1.xpose.msra.mxu0 0.0
  %2872 = vmatprep.subr.mxu0 0.0
  %2873 = vmatpush1.xpose.msra.mxu0 0.0
  %2874 = vmatprep.subr.mxu0 0.0
  %2875 = vmatpush1.xpose.msra.mxu0 0.0
  %2876 = vmatprep.subr.mxu0 0.0
  %2877 = vmatpush1.xpose.msra.mxu0 0.0
  %2878 = vmatprep.subr.mxu0 0.0
  %2879 = vmatpush1.xpose.msra.mxu0 0.0
  %2880 = vmatprep.subr.mxu0 0.0
  %2881 = vmatpush1.xpose.msra.mxu0 0.0
  %2882 = vmatprep.mubr.f32.mxu0 0.0
  %2883 = vmatmul.mubr.f32.gmra.mrb[0].mxu0 %v2814
  %v2884 = vpop.f32.mrb[0].mxu0
  %v2885 = vadd.f32 0.0, %v2884
  %v2886 = vpop.f32.mrb[0].mxu0
  %2887 = vmatprep.mubr.f32.mxu0 0.0
  %2888 = vmatmul.mubr.f32.gmra.mrb[0].mxu0 %v2816
  %v2889 = vpop.f32.mrb[0].mxu0
  %v2890 = vadd.f32 0.0, %v2889
  %v2891 = vpop.f32.mrb[0].mxu0
  %2892 = vdwg.mxu0
  %v2893 = vmul.f32 %v2885, 0.5
  %v2894 = vmul.f32 %v2890, 0.5
  %v2895 = vtanh.pop %v2893
  %v2896 = vtanh.pop %v2894
  %v2897 = vmul.f32 %v2895, 0.5
  %v2898 = vmul.f32 %v2896, 0.5
  %v2899 = vadd.f32 %v2897, 0.5
  %v2900 = vadd.f32 %v2898, 0.5
  %2901 = vset.pattern.permute.xlu0 35
  %2902 = vperm.xlu0 %2901, %v2071
  %v2903 = vpop.permute.xlu0 %2902
  %2905 = vset.pattern.permute.xlu0 35
  %2906 = vperm.xlu0 %2905, %v2076
  %v2907 = vpop.permute.xlu0 %2906
  %v2909 = vlaneseq
  %v2910 = vshrl.u32 %v2909, 7
  %v2911 = vsub.s32 3, %v2910
  %v2912 = vrot.slane %v2150, %v2911
  %v2913 = vadd.f32 %v2903, %v2912
  %v2914 = vadd.f32 %v2907, %v2912
  %v2915 = vmul.f32 %v2913, %v2899
  %v2916 = vmul.f32 %v2914, %v2900
  %vm2917 = vcmp.ge.f32.partialorder %v2915, 0.0
  %vm2918 = vcmp.ge.f32.partialorder %v2916, 0.0
  %v2919 = vmul.f32 %v2915, 0.2
  %v2920 = vmul.f32 %v2916, 0.2
  %v2921 = vsel %vm2917, %v2915, %v2919
  %v2922 = vsel %vm2918, %v2916, %v2920
  %v2923 = vadd.f32 %v2921, %v32
  %v2924 = vadd.f32 %v2922, %v33
  %v2925 = vmul.f32 %v2923, 1.442695
  %v2926 = vpow.pop %v2925
  %v2927 = vmul.f32 %v2924, 1.442695
  %v2928 = vpow.pop %v2927
  %v2929 = vsel %vm38, %v2926, 0.0
  %2930 = vadd.xlane.f32.xlu0 %v2929
  %v2931 = vpop.xlane.xlu0 %2930
  %v2932 = vsel %vm38, %v2928, 0.0
  %2933 = vadd.xlane.f32.xlu0 %v2932
  %v2934 = vpop.xlane.xlu0 %2933
  %v2935 = vrcp.pop %v2931
  %v2936 = vmul.f32 %v2926, %v2935
  %v2937 = vrcp.pop %v2934
  %v2938 = vmul.f32 %v2928, %v2937
  %v2942 = vsel %vm38, %v2936, 0
  %v2945 = vsel %vm38, %v2938, 0
  %2947 = vmatprep.subr.mxu0 0.0
  %2948 = vmatpush1.msra.mxu0 %v2811
  %2949 = vmatprep.subr.mxu0 0.0
  %2950 = vmatpush1.msra.mxu0 %v2813
  %2951 = vmatprep.subr.mxu0 0.0
  %2952 = vmatpush1.msra.mxu0 0.0
  %2953 = vmatprep.subr.mxu0 0.0
  %2954 = vmatpush1.msra.mxu0 0.0
  %2955 = vmatprep.subr.mxu0 0.0
  %2956 = vmatpush1.msra.mxu0 0.0
  %2957 = vmatprep.subr.mxu0 0.0
  %2958 = vmatpush1.msra.mxu0 0.0
  %2959 = vmatprep.subr.mxu0 0.0
  %2960 = vmatpush1.msra.mxu0 0.0
  %2961 = vmatprep.subr.mxu0 0.0
  %2962 = vmatpush1.msra.mxu0 0.0
  %2963 = vmatprep.subr.mxu0 0.0
  %2964 = vmatpush1.msra.mxu0 0.0
  %2965 = vmatprep.subr.mxu0 0.0
  %2966 = vmatpush1.msra.mxu0 0.0
  %2967 = vmatprep.subr.mxu0 0.0
  %2968 = vmatpush1.msra.mxu0 0.0
  %2969 = vmatprep.subr.mxu0 0.0
  %2970 = vmatpush1.msra.mxu0 0.0
  %2971 = vmatprep.subr.mxu0 0.0
  %2972 = vmatpush1.msra.mxu0 0.0
  %2973 = vmatprep.subr.mxu0 0.0
  %2974 = vmatpush1.msra.mxu0 0.0
  %2975 = vmatprep.subr.mxu0 0.0
  %2976 = vmatpush1.msra.mxu0 0.0
  %2977 = vmatprep.subr.mxu0 0.0
  %2978 = vmatpush1.msra.mxu0 0.0
  %2979 = vmatprep.subr.mxu0 0.0
  %2980 = vmatpush1.msra.mxu0 0.0
  %2981 = vmatprep.subr.mxu0 0.0
  %2982 = vmatpush1.msra.mxu0 0.0
  %2983 = vmatprep.subr.mxu0 0.0
  %2984 = vmatpush1.msra.mxu0 0.0
  %2985 = vmatprep.subr.mxu0 0.0
  %2986 = vmatpush1.msra.mxu0 0.0
  %2987 = vmatprep.subr.mxu0 0.0
  %2988 = vmatpush1.msra.mxu0 0.0
  %2989 = vmatprep.subr.mxu0 0.0
  %2990 = vmatpush1.msra.mxu0 0.0
  %2991 = vmatprep.subr.mxu0 0.0
  %2992 = vmatpush1.msra.mxu0 0.0
  %2993 = vmatprep.subr.mxu0 0.0
  %2994 = vmatpush1.msra.mxu0 0.0
  %2995 = vmatprep.subr.mxu0 0.0
  %2996 = vmatpush1.msra.mxu0 0.0
  %2997 = vmatprep.subr.mxu0 0.0
  %2998 = vmatpush1.msra.mxu0 0.0
  %2999 = vmatprep.subr.mxu0 0.0
  %3000 = vmatpush1.msra.mxu0 0.0
  %3001 = vmatprep.subr.mxu0 0.0
  %3002 = vmatpush1.msra.mxu0 0.0
  %3003 = vmatprep.subr.mxu0 0.0
  %3004 = vmatpush1.msra.mxu0 0.0
  %3005 = vmatprep.subr.mxu0 0.0
  %3006 = vmatpush1.msra.mxu0 0.0
  %3007 = vmatprep.subr.mxu0 0.0
  %3008 = vmatpush1.msra.mxu0 0.0
  %3009 = vmatprep.subr.mxu0 0.0
  %3010 = vmatpush1.msra.mxu0 0.0
  %3011 = vmatprep.mubr.f32.mxu0 0.0
  %3012 = vmatmul.mubr.f32.gmra.mrb[0].mxu0 %v2942
  %v3013 = vpop.f32.mrb[0].mxu0
  %v3014 = vadd.f32 0.0, %v3013
  %v3015 = vpop.f32.mrb[0].mxu0
  %3016 = vmatprep.mubr.f32.mxu0 0.0
  %3017 = vmatmul.mubr.f32.gmra.mrb[0].mxu0 %v2945
  %v3018 = vpop.f32.mrb[0].mxu0
  %v3019 = vadd.f32 0.0, %v3018
  %v3020 = vpop.f32.mrb[0].mxu0
  %3021 = vdwg.mxu0
  %3024 = vrot.lane.b32.xlu0 %v3014, 12
  %v3025 = vpop.permute.xlu0 %3024
  %3026 = vrot.lane.b32.xlu0 %v3019, 12
  %v3027 = vpop.permute.xlu0 %3026
  %vm3030 = vcmask 130144
  %3031 = vst.msk [vmem:[#allocation3] sm:$0xff] %vm3030, %v3025
  %3032 = vst.msk [vmem:[#allocation3 + $0x8] sm:$0xff] %vm3030, %v3027
  %3033 = vrot.lane.b32.xlu0 %v2071, 112
  %v3034 = vpop.permute.xlu0 %3033
  %3035 = vrot.lane.b32.xlu0 %v2076, 112
  %v3036 = vpop.permute.xlu0 %3035
  %v3037 = vsel %vm2153, %v3034, 0
  %v3039 = vsel %vm2153, %v3036, 0
  %3041 = vmatprep.subr.mxu0 0.0
  %3042 = vmatpush1.xpose.msra.mxu0 %v3037
  %3043 = vmatprep.subr.mxu0 0.0
  %3044 = vmatpush1.xpose.msra.mxu0 %v3039
  %3045 = vmatprep.subr.mxu0 0.0
  %3046 = vmatpush1.xpose.msra.mxu0 0.0
  %3047 = vmatprep.subr.mxu0 0.0
  %3048 = vmatpush1.xpose.msra.mxu0 0.0
  %3049 = vmatprep.subr.mxu0 0.0
  %3050 = vmatpush1.xpose.msra.mxu0 0.0
  %3051 = vmatprep.subr.mxu0 0.0
  %3052 = vmatpush1.xpose.msra.mxu0 0.0
  %3053 = vmatprep.subr.mxu0 0.0
  %3054 = vmatpush1.xpose.msra.mxu0 0.0
  %3055 = vmatprep.subr.mxu0 0.0
  %3056 = vmatpush1.xpose.msra.mxu0 0.0
  %3057 = vmatprep.subr.mxu0 0.0
  %3058 = vmatpush1.xpose.msra.mxu0 0.0
  %3059 = vmatprep.subr.mxu0 0.0
  %3060 = vmatpush1.xpose.msra.mxu0 0.0
  %3061 = vmatprep.subr.mxu0 0.0
  %3062 = vmatpush1.xpose.msra.mxu0 0.0
  %3063 = vmatprep.subr.mxu0 0.0
  %3064 = vmatpush1.xpose.msra.mxu0 0.0
  %3065 = vmatprep.subr.mxu0 0.0
  %3066 = vmatpush1.xpose.msra.mxu0 0.0
  %3067 = vmatprep.subr.mxu0 0.0
  %3068 = vmatpush1.xpose.msra.mxu0 0.0
  %3069 = vmatprep.subr.mxu0 0.0
  %3070 = vmatpush1.xpose.msra.mxu0 0.0
  %3071 = vmatprep.subr.mxu0 0.0
  %3072 = vmatpush1.xpose.msra.mxu0 0.0
  %3073 = vmatprep.subr.mxu0 0.0
  %3074 = vmatpush1.xpose.msra.mxu0 0.0
  %3075 = vmatprep.subr.mxu0 0.0
  %3076 = vmatpush1.xpose.msra.mxu0 0.0
  %3077 = vmatprep.subr.mxu0 0.0
  %3078 = vmatpush1.xpose.msra.mxu0 0.0
  %3079 = vmatprep.subr.mxu0 0.0
  %3080 = vmatpush1.xpose.msra.mxu0 0.0
  %3081 = vmatprep.subr.mxu0 0.0
  %3082 = vmatpush1.xpose.msra.mxu0 0.0
  %3083 = vmatprep.subr.mxu0 0.0
  %3084 = vmatpush1.xpose.msra.mxu0 0.0
  %3085 = vmatprep.subr.mxu0 0.0
  %3086 = vmatpush1.xpose.msra.mxu0 0.0
  %3087 = vmatprep.subr.mxu0 0.0
  %3088 = vmatpush1.xpose.msra.mxu0 0.0
  %3089 = vmatprep.subr.mxu0 0.0
  %3090 = vmatpush1.xpose.msra.mxu0 0.0
  %3091 = vmatprep.subr.mxu0 0.0
  %3092 = vmatpush1.xpose.msra.mxu0 0.0
  %3093 = vmatprep.subr.mxu0 0.0
  %3094 = vmatpush1.xpose.msra.mxu0 0.0
  %3095 = vmatprep.subr.mxu0 0.0
  %3096 = vmatpush1.xpose.msra.mxu0 0.0
  %3097 = vmatprep.subr.mxu0 0.0
  %3098 = vmatpush1.xpose.msra.mxu0 0.0
  %3099 = vmatprep.subr.mxu0 0.0
  %3100 = vmatpush1.xpose.msra.mxu0 0.0
  %3101 = vmatprep.subr.mxu0 0.0
  %3102 = vmatpush1.xpose.msra.mxu0 0.0
  %3103 = vmatprep.subr.mxu0 0.0
  %3104 = vmatpush1.xpose.msra.mxu0 0.0
  %3105 = vmatprep.mubr.f32.mxu0 0.0
  %3106 = vmatmul.mubr.f32.gmra.mrb[0].mxu0 %v3037
  %v3107 = vpop.f32.mrb[0].mxu0
  %v3108 = vadd.f32 0.0, %v3107
  %v3109 = vpop.f32.mrb[0].mxu0
  %3110 = vmatprep.mubr.f32.mxu0 0.0
  %3111 = vmatmul.mubr.f32.gmra.mrb[0].mxu0 %v3039
  %v3112 = vpop.f32.mrb[0].mxu0
  %v3113 = vadd.f32 0.0, %v3112
  %v3114 = vpop.f32.mrb[0].mxu0
  %3115 = vdwg.mxu0
  %v3116 = vmul.f32 %v3108, 0.5
  %v3117 = vmul.f32 %v3113, 0.5
  %v3118 = vtanh.pop %v3116
  %v3119 = vtanh.pop %v3117
  %v3120 = vmul.f32 %v3118, 0.5
  %v3121 = vmul.f32 %v3119, 0.5
  %v3122 = vadd.f32 %v3120, 0.5
  %v3123 = vadd.f32 %v3121, 0.5
  %3124 = vset.pattern.permute.xlu0 36
  %3125 = vperm.xlu0 %3124, %v2071
  %v3126 = vpop.permute.xlu0 %3125
  %3128 = vset.pattern.permute.xlu0 36
  %3129 = vperm.xlu0 %3128, %v2076
  %v3130 = vpop.permute.xlu0 %3129
  %v3132 = vlaneseq
  %v3133 = vshrl.u32 %v3132, 7
  %v3134 = vsub.s32 4, %v3133
  %v3135 = vrot.slane %v2150, %v3134
  %v3136 = vadd.f32 %v3126, %v3135
  %v3137 = vadd.f32 %v3130, %v3135
  %v3138 = vmul.f32 %v3136, %v3122
  %v3139 = vmul.f32 %v3137, %v3123
  %vm3140 = vcmp.ge.f32.partialorder %v3138, 0.0
  %vm3141 = vcmp.ge.f32.partialorder %v3139, 0.0
  %v3142 = vmul.f32 %v3138, 0.2
  %v3143 = vmul.f32 %v3139, 0.2
  %v3144 = vsel %vm3140, %v3138, %v3142
  %v3145 = vsel %vm3141, %v3139, %v3143
  %v3146 = vadd.f32 %v3144, %v32
  %v3147 = vadd.f32 %v3145, %v33
  %v3148 = vmul.f32 %v3146, 1.442695
  %v3149 = vpow.pop %v3148
  %v3150 = vmul.f32 %v3147, 1.442695
  %v3151 = vpow.pop %v3150
  %v3152 = vsel %vm38, %v3149, 0.0
  %3153 = vadd.xlane.f32.xlu0 %v3152
  %v3154 = vpop.xlane.xlu0 %3153
  %v3155 = vsel %vm38, %v3151, 0.0
  %3156 = vadd.xlane.f32.xlu0 %v3155
  %v3157 = vpop.xlane.xlu0 %3156
  %v3158 = vrcp.pop %v3154
  %v3159 = vmul.f32 %v3149, %v3158
  %v3160 = vrcp.pop %v3157
  %v3161 = vmul.f32 %v3151, %v3160
  %v3165 = vsel %vm38, %v3159, 0
  %v3168 = vsel %vm38, %v3161, 0
  %3170 = vmatprep.subr.mxu0 0.0
  %3171 = vmatpush1.msra.mxu0 %v3034
  %3172 = vmatprep.subr.mxu0 0.0
  %3173 = vmatpush1.msra.mxu0 %v3036
  %3174 = vmatprep.subr.mxu0 0.0
  %3175 = vmatpush1.msra.mxu0 0.0
  %3176 = vmatprep.subr.mxu0 0.0
  %3177 = vmatpush1.msra.mxu0 0.0
  %3178 = vmatprep.subr.mxu0 0.0
  %3179 = vmatpush1.msra.mxu0 0.0
  %3180 = vmatprep.subr.mxu0 0.0
  %3181 = vmatpush1.msra.mxu0 0.0
  %3182 = vmatprep.subr.mxu0 0.0
  %3183 = vmatpush1.msra.mxu0 0.0
  %3184 = vmatprep.subr.mxu0 0.0
  %3185 = vmatpush1.msra.mxu0 0.0
  %3186 = vmatprep.subr.mxu0 0.0
  %3187 = vmatpush1.msra.mxu0 0.0
  %3188 = vmatprep.subr.mxu0 0.0
  %3189 = vmatpush1.msra.mxu0 0.0
  %3190 = vmatprep.subr.mxu0 0.0
  %3191 = vmatpush1.msra.mxu0 0.0
  %3192 = vmatprep.subr.mxu0 0.0
  %3193 = vmatpush1.msra.mxu0 0.0
  %3194 = vmatprep.subr.mxu0 0.0
  %3195 = vmatpush1.msra.mxu0 0.0
  %3196 = vmatprep.subr.mxu0 0.0
  %3197 = vmatpush1.msra.mxu0 0.0
  %3198 = vmatprep.subr.mxu0 0.0
  %3199 = vmatpush1.msra.mxu0 0.0
  %3200 = vmatprep.subr.mxu0 0.0
  %3201 = vmatpush1.msra.mxu0 0.0
  %3202 = vmatprep.subr.mxu0 0.0
  %3203 = vmatpush1.msra.mxu0 0.0
  %3204 = vmatprep.subr.mxu0 0.0
  %3205 = vmatpush1.msra.mxu0 0.0
  %3206 = vmatprep.subr.mxu0 0.0
  %3207 = vmatpush1.msra.mxu0 0.0
  %3208 = vmatprep.subr.mxu0 0.0
  %3209 = vmatpush1.msra.mxu0 0.0
  %3210 = vmatprep.subr.mxu0 0.0
  %3211 = vmatpush1.msra.mxu0 0.0
  %3212 = vmatprep.subr.mxu0 0.0
  %3213 = vmatpush1.msra.mxu0 0.0
  %3214 = vmatprep.subr.mxu0 0.0
  %3215 = vmatpush1.msra.mxu0 0.0
  %3216 = vmatprep.subr.mxu0 0.0
  %3217 = vmatpush1.msra.mxu0 0.0
  %3218 = vmatprep.subr.mxu0 0.0
  %3219 = vmatpush1.msra.mxu0 0.0
  %3220 = vmatprep.subr.mxu0 0.0
  %3221 = vmatpush1.msra.mxu0 0.0
  %3222 = vmatprep.subr.mxu0 0.0
  %3223 = vmatpush1.msra.mxu0 0.0
  %3224 = vmatprep.subr.mxu0 0.0
  %3225 = vmatpush1.msra.mxu0 0.0
  %3226 = vmatprep.subr.mxu0 0.0
  %3227 = vmatpush1.msra.mxu0 0.0
  %3228 = vmatprep.subr.mxu0 0.0
  %3229 = vmatpush1.msra.mxu0 0.0
  %3230 = vmatprep.subr.mxu0 0.0
  %3231 = vmatpush1.msra.mxu0 0.0
  %3232 = vmatprep.subr.mxu0 0.0
  %3233 = vmatpush1.msra.mxu0 0.0
  %3234 = vmatprep.mubr.f32.mxu0 0.0
  %3235 = vmatmul.mubr.f32.gmra.mrb[0].mxu0 %v3165
  %v3236 = vpop.f32.mrb[0].mxu0
  %v3237 = vadd.f32 0.0, %v3236
  %v3238 = vpop.f32.mrb[0].mxu0
  %3239 = vmatprep.mubr.f32.mxu0 0.0
  %3240 = vmatmul.mubr.f32.gmra.mrb[0].mxu0 %v3168
  %v3241 = vpop.f32.mrb[0].mxu0
  %v3242 = vadd.f32 0.0, %v3241
  %v3243 = vpop.f32.mrb[0].mxu0
  %3244 = vdwg.mxu0
  %3247 = vrot.lane.b32.xlu0 %v3237, 16
  %v3248 = vpop.permute.xlu0 %3247
  %3249 = vrot.lane.b32.xlu0 %v3242, 16
  %v3250 = vpop.permute.xlu0 %3249
  %vm3253 = vcmask 162944
  %3254 = vst.msk [vmem:[#allocation3] sm:$0xff] %vm3253, %v3248
  %3255 = vst.msk [vmem:[#allocation3 + $0x8] sm:$0xff] %vm3253, %v3250
  %3256 = vrot.lane.b32.xlu0 %v2071, 108
  %v3257 = vpop.permute.xlu0 %3256
  %3258 = vrot.lane.b32.xlu0 %v2076, 108
  %v3259 = vpop.permute.xlu0 %3258
  %v3260 = vsel %vm2153, %v3257, 0
  %v3262 = vsel %vm2153, %v3259, 0
  %3264 = vmatprep.subr.mxu0 0.0
  %3265 = vmatpush1.xpose.msra.mxu0 %v3260
  %3266 = vmatprep.subr.mxu0 0.0
  %3267 = vmatpush1.xpose.msra.mxu0 %v3262
  %3268 = vmatprep.subr.mxu0 0.0
  %3269 = vmatpush1.xpose.msra.mxu0 0.0
  %3270 = vmatprep.subr.mxu0 0.0
  %3271 = vmatpush1.xpose.msra.mxu0 0.0
  %3272 = vmatprep.subr.mxu0 0.0
  %3273 = vmatpush1.xpose.msra.mxu0 0.0
  %3274 = vmatprep.subr.mxu0 0.0
  %3275 = vmatpush1.xpose.msra.mxu0 0.0
  %3276 = vmatprep.subr.mxu0 0.0
  %3277 = vmatpush1.xpose.msra.mxu0 0.0
  %3278 = vmatprep.subr.mxu0 0.0
  %3279 = vmatpush1.xpose.msra.mxu0 0.0
  %3280 = vmatprep.subr.mxu0 0.0
  %3281 = vmatpush1.xpose.msra.mxu0 0.0
  %3282 = vmatprep.subr.mxu0 0.0
  %3283 = vmatpush1.xpose.msra.mxu0 0.0
  %3284 = vmatprep.subr.mxu0 0.0
  %3285 = vmatpush1.xpose.msra.mxu0 0.0
  %3286 = vmatprep.subr.mxu0 0.0
  %3287 = vmatpush1.xpose.msra.mxu0 0.0
  %3288 = vmatprep.subr.mxu0 0.0
  %3289 = vmatpush1.xpose.msra.mxu0 0.0
  %3290 = vmatprep.subr.mxu0 0.0
  %3291 = vmatpush1.xpose.msra.mxu0 0.0
  %3292 = vmatprep.subr.mxu0 0.0
  %3293 = vmatpush1.xpose.msra.mxu0 0.0
  %3294 = vmatprep.subr.mxu0 0.0
  %3295 = vmatpush1.xpose.msra.mxu0 0.0
  %3296 = vmatprep.subr.mxu0 0.0
  %3297 = vmatpush1.xpose.msra.mxu0 0.0
  %3298 = vmatprep.subr.mxu0 0.0
  %3299 = vmatpush1.xpose.msra.mxu0 0.0
  %3300 = vmatprep.subr.mxu0 0.0
  %3301 = vmatpush1.xpose.msra.mxu0 0.0
  %3302 = vmatprep.subr.mxu0 0.0
  %3303 = vmatpush1.xpose.msra.mxu0 0.0
  %3304 = vmatprep.subr.mxu0 0.0
  %3305 = vmatpush1.xpose.msra.mxu0 0.0
  %3306 = vmatprep.subr.mxu0 0.0
  %3307 = vmatpush1.xpose.msra.mxu0 0.0
  %3308 = vmatprep.subr.mxu0 0.0
  %3309 = vmatpush1.xpose.msra.mxu0 0.0
  %3310 = vmatprep.subr.mxu0 0.0
  %3311 = vmatpush1.xpose.msra.mxu0 0.0
  %3312 = vmatprep.subr.mxu0 0.0
  %3313 = vmatpush1.xpose.msra.mxu0 0.0
  %3314 = vmatprep.subr.mxu0 0.0
  %3315 = vmatpush1.xpose.msra.mxu0 0.0
  %3316 = vmatprep.subr.mxu0 0.0
  %3317 = vmatpush1.xpose.msra.mxu0 0.0
  %3318 = vmatprep.subr.mxu0 0.0
  %3319 = vmatpush1.xpose.msra.mxu0 0.0
  %3320 = vmatprep.subr.mxu0 0.0
  %3321 = vmatpush1.xpose.msra.mxu0 0.0
  %3322 = vmatprep.subr.mxu0 0.0
  %3323 = vmatpush1.xpose.msra.mxu0 0.0
  %3324 = vmatprep.subr.mxu0 0.0
  %3325 = vmatpush1.xpose.msra.mxu0 0.0
  %3326 = vmatprep.subr.mxu0 0.0
  %3327 = vmatpush1.xpose.msra.mxu0 0.0
  %3328 = vmatprep.mubr.f32.mxu0 0.0
  %3329 = vmatmul.mubr.f32.gmra.mrb[0].mxu0 %v3260
  %v3330 = vpop.f32.mrb[0].mxu0
  %v3331 = vadd.f32 0.0, %v3330
  %v3332 = vpop.f32.mrb[0].mxu0
  %3333 = vmatprep.mubr.f32.mxu0 0.0
  %3334 = vmatmul.mubr.f32.gmra.mrb[0].mxu0 %v3262
  %v3335 = vpop.f32.mrb[0].mxu0
  %v3336 = vadd.f32 0.0, %v3335
  %v3337 = vpop.f32.mrb[0].mxu0
  %3338 = vdwg.mxu0
  %v3339 = vmul.f32 %v3331, 0.5
  %v3340 = vmul.f32 %v3336, 0.5
  %v3341 = vtanh.pop %v3339
  %v3342 = vtanh.pop %v3340
  %v3343 = vmul.f32 %v3341, 0.5
  %v3344 = vmul.f32 %v3342, 0.5
  %v3345 = vadd.f32 %v3343, 0.5
  %v3346 = vadd.f32 %v3344, 0.5
  %3347 = vset.pattern.permute.xlu0 37
  %3348 = vperm.xlu0 %3347, %v2071
  %v3349 = vpop.permute.xlu0 %3348
  %3351 = vset.pattern.permute.xlu0 37
  %3352 = vperm.xlu0 %3351, %v2076
  %v3353 = vpop.permute.xlu0 %3352
  %v3355 = vlaneseq
  %v3356 = vshrl.u32 %v3355, 7
  %v3357 = vsub.s32 5, %v3356
  %v3358 = vrot.slane %v2150, %v3357
  %v3359 = vadd.f32 %v3349, %v3358
  %v3360 = vadd.f32 %v3353, %v3358
  %v3361 = vmul.f32 %v3359, %v3345
  %v3362 = vmul.f32 %v3360, %v3346
  %vm3363 = vcmp.ge.f32.partialorder %v3361, 0.0
  %vm3364 = vcmp.ge.f32.partialorder %v3362, 0.0
  %v3365 = vmul.f32 %v3361, 0.2
  %v3366 = vmul.f32 %v3362, 0.2
  %v3367 = vsel %vm3363, %v3361, %v3365
  %v3368 = vsel %vm3364, %v3362, %v3366
  %v3369 = vadd.f32 %v3367, %v32
  %v3370 = vadd.f32 %v3368, %v33
  %v3371 = vmul.f32 %v3369, 1.442695
  %v3372 = vpow.pop %v3371
  %v3373 = vmul.f32 %v3370, 1.442695
  %v3374 = vpow.pop %v3373
  %v3375 = vsel %vm38, %v3372, 0.0
  %3376 = vadd.xlane.f32.xlu0 %v3375
  %v3377 = vpop.xlane.xlu0 %3376
  %v3378 = vsel %vm38, %v3374, 0.0
  %3379 = vadd.xlane.f32.xlu0 %v3378
  %v3380 = vpop.xlane.xlu0 %3379
  %v3381 = vrcp.pop %v3377
  %v3382 = vmul.f32 %v3372, %v3381
  %v3383 = vrcp.pop %v3380
  %v3384 = vmul.f32 %v3374, %v3383
  %v3388 = vsel %vm38, %v3382, 0
  %v3391 = vsel %vm38, %v3384, 0
  %3393 = vmatprep.subr.mxu0 0.0
  %3394 = vmatpush1.msra.mxu0 %v3257
  %3395 = vmatprep.subr.mxu0 0.0
  %3396 = vmatpush1.msra.mxu0 %v3259
  %3397 = vmatprep.subr.mxu0 0.0
  %3398 = vmatpush1.msra.mxu0 0.0
  %3399 = vmatprep.subr.mxu0 0.0
  %3400 = vmatpush1.msra.mxu0 0.0
  %3401 = vmatprep.subr.mxu0 0.0
  %3402 = vmatpush1.msra.mxu0 0.0
  %3403 = vmatprep.subr.mxu0 0.0
  %3404 = vmatpush1.msra.mxu0 0.0
  %3405 = vmatprep.subr.mxu0 0.0
  %3406 = vmatpush1.msra.mxu0 0.0
  %3407 = vmatprep.subr.mxu0 0.0
  %3408 = vmatpush1.msra.mxu0 0.0
  %3409 = vmatprep.subr.mxu0 0.0
  %3410 = vmatpush1.msra.mxu0 0.0
  %3411 = vmatprep.subr.mxu0 0.0
  %3412 = vmatpush1.msra.mxu0 0.0
  %3413 = vmatprep.subr.mxu0 0.0
  %3414 = vmatpush1.msra.mxu0 0.0
  %3415 = vmatprep.subr.mxu0 0.0
  %3416 = vmatpush1.msra.mxu0 0.0
  %3417 = vmatprep.subr.mxu0 0.0
  %3418 = vmatpush1.msra.mxu0 0.0
  %3419 = vmatprep.subr.mxu0 0.0
  %3420 = vmatpush1.msra.mxu0 0.0
  %3421 = vmatprep.subr.mxu0 0.0
  %3422 = vmatpush1.msra.mxu0 0.0
  %3423 = vmatprep.subr.mxu0 0.0
  %3424 = vmatpush1.msra.mxu0 0.0
  %3425 = vmatprep.subr.mxu0 0.0
  %3426 = vmatpush1.msra.mxu0 0.0
  %3427 = vmatprep.subr.mxu0 0.0
  %3428 = vmatpush1.msra.mxu0 0.0
  %3429 = vmatprep.subr.mxu0 0.0
  %3430 = vmatpush1.msra.mxu0 0.0
  %3431 = vmatprep.subr.mxu0 0.0
  %3432 = vmatpush1.msra.mxu0 0.0
  %3433 = vmatprep.subr.mxu0 0.0
  %3434 = vmatpush1.msra.mxu0 0.0
  %3435 = vmatprep.subr.mxu0 0.0
  %3436 = vmatpush1.msra.mxu0 0.0
  %3437 = vmatprep.subr.mxu0 0.0
  %3438 = vmatpush1.msra.mxu0 0.0
  %3439 = vmatprep.subr.mxu0 0.0
  %3440 = vmatpush1.msra.mxu0 0.0
  %3441 = vmatprep.subr.mxu0 0.0
  %3442 = vmatpush1.msra.mxu0 0.0
  %3443 = vmatprep.subr.mxu0 0.0
  %3444 = vmatpush1.msra.mxu0 0.0
  %3445 = vmatprep.subr.mxu0 0.0
  %3446 = vmatpush1.msra.mxu0 0.0
  %3447 = vmatprep.subr.mxu0 0.0
  %3448 = vmatpush1.msra.mxu0 0.0
  %3449 = vmatprep.subr.mxu0 0.0
  %3450 = vmatpush1.msra.mxu0 0.0
  %3451 = vmatprep.subr.mxu0 0.0
  %3452 = vmatpush1.msra.mxu0 0.0
  %3453 = vmatprep.subr.mxu0 0.0
  %3454 = vmatpush1.msra.mxu0 0.0
  %3455 = vmatprep.subr.mxu0 0.0
  %3456 = vmatpush1.msra.mxu0 0.0
  %3457 = vmatprep.mubr.f32.mxu0 0.0
  %3458 = vmatmul.mubr.f32.gmra.mrb[0].mxu0 %v3388
  %v3459 = vpop.f32.mrb[0].mxu0
  %v3460 = vadd.f32 0.0, %v3459
  %v3461 = vpop.f32.mrb[0].mxu0
  %3462 = vmatprep.mubr.f32.mxu0 0.0
  %3463 = vmatmul.mubr.f32.gmra.mrb[0].mxu0 %v3391
  %v3464 = vpop.f32.mrb[0].mxu0
  %v3465 = vadd.f32 0.0, %v3464
  %v3466 = vpop.f32.mrb[0].mxu0
  %3467 = vdwg.mxu0
  %3470 = vrot.lane.b32.xlu0 %v3460, 20
  %v3471 = vpop.permute.xlu0 %3470
  %3472 = vrot.lane.b32.xlu0 %v3465, 20
  %v3473 = vpop.permute.xlu0 %3472
  %vm3476 = vcmask 195744
  %3477 = vst.msk [vmem:[#allocation3] sm:$0xff] %vm3476, %v3471
  %3478 = vst.msk [vmem:[#allocation3 + $0x8] sm:$0xff] %vm3476, %v3473
  %3479 = vrot.lane.b32.xlu0 %v2071, 104
  %v3480 = vpop.permute.xlu0 %3479
  %3481 = vrot.lane.b32.xlu0 %v2076, 104
  %v3482 = vpop.permute.xlu0 %3481
  %v3483 = vsel %vm2153, %v3480, 0
  %v3485 = vsel %vm2153, %v3482, 0
  %3487 = vmatprep.subr.mxu0 0.0
  %3488 = vmatpush1.xpose.msra.mxu0 %v3483
  %3489 = vmatprep.subr.mxu0 0.0
  %3490 = vmatpush1.xpose.msra.mxu0 %v3485
  %3491 = vmatprep.subr.mxu0 0.0
  %3492 = vmatpush1.xpose.msra.mxu0 0.0
  %3493 = vmatprep.subr.mxu0 0.0
  %3494 = vmatpush1.xpose.msra.mxu0 0.0
  %3495 = vmatprep.subr.mxu0 0.0
  %3496 = vmatpush1.xpose.msra.mxu0 0.0
  %3497 = vmatprep.subr.mxu0 0.0
  %3498 = vmatpush1.xpose.msra.mxu0 0.0
  %3499 = vmatprep.subr.mxu0 0.0
  %3500 = vmatpush1.xpose.msra.mxu0 0.0
  %3501 = vmatprep.subr.mxu0 0.0
  %3502 = vmatpush1.xpose.msra.mxu0 0.0
  %3503 = vmatprep.subr.mxu0 0.0
  %3504 = vmatpush1.xpose.msra.mxu0 0.0
  %3505 = vmatprep.subr.mxu0 0.0
  %3506 = vmatpush1.xpose.msra.mxu0 0.0
  %3507 = vmatprep.subr.mxu0 0.0
  %3508 = vmatpush1.xpose.msra.mxu0 0.0
  %3509 = vmatprep.subr.mxu0 0.0
  %3510 = vmatpush1.xpose.msra.mxu0 0.0
  %3511 = vmatprep.subr.mxu0 0.0
  %3512 = vmatpush1.xpose.msra.mxu0 0.0
  %3513 = vmatprep.subr.mxu0 0.0
  %3514 = vmatpush1.xpose.msra.mxu0 0.0
  %3515 = vmatprep.subr.mxu0 0.0
  %3516 = vmatpush1.xpose.msra.mxu0 0.0
  %3517 = vmatprep.subr.mxu0 0.0
  %3518 = vmatpush1.xpose.msra.mxu0 0.0
  %3519 = vmatprep.subr.mxu0 0.0
  %3520 = vmatpush1.xpose.msra.mxu0 0.0
  %3521 = vmatprep.subr.mxu0 0.0
  %3522 = vmatpush1.xpose.msra.mxu0 0.0
  %3523 = vmatprep.subr.mxu0 0.0
  %3524 = vmatpush1.xpose.msra.mxu0 0.0
  %3525 = vmatprep.subr.mxu0 0.0
  %3526 = vmatpush1.xpose.msra.mxu0 0.0
  %3527 = vmatprep.subr.mxu0 0.0
  %3528 = vmatpush1.xpose.msra.mxu0 0.0
  %3529 = vmatprep.subr.mxu0 0.0
  %3530 = vmatpush1.xpose.msra.mxu0 0.0
  %3531 = vmatprep.subr.mxu0 0.0
  %3532 = vmatpush1.xpose.msra.mxu0 0.0
  %3533 = vmatprep.subr.mxu0 0.0
  %3534 = vmatpush1.xpose.msra.mxu0 0.0
  %3535 = vmatprep.subr.mxu0 0.0
  %3536 = vmatpush1.xpose.msra.mxu0 0.0
  %3537 = vmatprep.subr.mxu0 0.0
  %3538 = vmatpush1.xpose.msra.mxu0 0.0
  %3539 = vmatprep.subr.mxu0 0.0
  %3540 = vmatpush1.xpose.msra.mxu0 0.0
  %3541 = vmatprep.subr.mxu0 0.0
  %3542 = vmatpush1.xpose.msra.mxu0 0.0
  %3543 = vmatprep.subr.mxu0 0.0
  %3544 = vmatpush1.xpose.msra.mxu0 0.0
  %3545 = vmatprep.subr.mxu0 0.0
  %3546 = vmatpush1.xpose.msra.mxu0 0.0
  %3547 = vmatprep.subr.mxu0 0.0
  %3548 = vmatpush1.xpose.msra.mxu0 0.0
  %3549 = vmatprep.subr.mxu0 0.0
  %3550 = vmatpush1.xpose.msra.mxu0 0.0
  %3551 = vmatprep.mubr.f32.mxu0 0.0
  %3552 = vmatmul.mubr.f32.gmra.mrb[0].mxu0 %v3483
  %v3553 = vpop.f32.mrb[0].mxu0
  %v3554 = vadd.f32 0.0, %v3553
  %v3555 = vpop.f32.mrb[0].mxu0
  %3556 = vmatprep.mubr.f32.mxu0 0.0
  %3557 = vmatmul.mubr.f32.gmra.mrb[0].mxu0 %v3485
  %v3558 = vpop.f32.mrb[0].mxu0
  %v3559 = vadd.f32 0.0, %v3558
  %v3560 = vpop.f32.mrb[0].mxu0
  %3561 = vdwg.mxu0
  %v3562 = vmul.f32 %v3554, 0.5
  %v3563 = vmul.f32 %v3559, 0.5
  %v3564 = vtanh.pop %v3562
  %v3565 = vtanh.pop %v3563
  %v3566 = vmul.f32 %v3564, 0.5
  %v3567 = vmul.f32 %v3565, 0.5
  %v3568 = vadd.f32 %v3566, 0.5
  %v3569 = vadd.f32 %v3567, 0.5
  %3570 = vset.pattern.permute.xlu0 38
  %3571 = vperm.xlu0 %3570, %v2071
  %v3572 = vpop.permute.xlu0 %3571
  %3574 = vset.pattern.permute.xlu0 38
  %3575 = vperm.xlu0 %3574, %v2076
  %v3576 = vpop.permute.xlu0 %3575
  %v3578 = vlaneseq
  %v3579 = vshrl.u32 %v3578, 7
  %v3580 = vsub.s32 6, %v3579
  %v3581 = vrot.slane %v2150, %v3580
  %v3582 = vadd.f32 %v3572, %v3581
  %v3583 = vadd.f32 %v3576, %v3581
  %v3584 = vmul.f32 %v3582, %v3568
  %v3585 = vmul.f32 %v3583, %v3569
  %vm3586 = vcmp.ge.f32.partialorder %v3584, 0.0
  %vm3587 = vcmp.ge.f32.partialorder %v3585, 0.0
  %v3588 = vmul.f32 %v3584, 0.2
  %v3589 = vmul.f32 %v3585, 0.2
  %v3590 = vsel %vm3586, %v3584, %v3588
  %v3591 = vsel %vm3587, %v3585, %v3589
  %v3592 = vadd.f32 %v3590, %v32
  %v3593 = vadd.f32 %v3591, %v33
  %v3594 = vmul.f32 %v3592, 1.442695
  %v3595 = vpow.pop %v3594
  %v3596 = vmul.f32 %v3593, 1.442695
  %v3597 = vpow.pop %v3596
  %v3598 = vsel %vm38, %v3595, 0.0
  %3599 = vadd.xlane.f32.xlu0 %v3598
  %v3600 = vpop.xlane.xlu0 %3599
  %v3601 = vsel %vm38, %v3597, 0.0
  %3602 = vadd.xlane.f32.xlu0 %v3601
  %v3603 = vpop.xlane.xlu0 %3602
  %v3604 = vrcp.pop %v3600
  %v3605 = vmul.f32 %v3595, %v3604
  %v3606 = vrcp.pop %v3603
  %v3607 = vmul.f32 %v3597, %v3606
  %v3611 = vsel %vm38, %v3605, 0
  %v3614 = vsel %vm38, %v3607, 0
  %3616 = vmatprep.subr.mxu0 0.0
  %3617 = vmatpush1.msra.mxu0 %v3480
  %3618 = vmatprep.subr.mxu0 0.0
  %3619 = vmatpush1.msra.mxu0 %v3482
  %3620 = vmatprep.subr.mxu0 0.0
  %3621 = vmatpush1.msra.mxu0 0.0
  %3622 = vmatprep.subr.mxu0 0.0
  %3623 = vmatpush1.msra.mxu0 0.0
  %3624 = vmatprep.subr.mxu0 0.0
  %3625 = vmatpush1.msra.mxu0 0.0
  %3626 = vmatprep.subr.mxu0 0.0
  %3627 = vmatpush1.msra.mxu0 0.0
  %3628 = vmatprep.subr.mxu0 0.0
  %3629 = vmatpush1.msra.mxu0 0.0
  %3630 = vmatprep.subr.mxu0 0.0
  %3631 = vmatpush1.msra.mxu0 0.0
  %3632 = vmatprep.subr.mxu0 0.0
  %3633 = vmatpush1.msra.mxu0 0.0
  %3634 = vmatprep.subr.mxu0 0.0
  %3635 = vmatpush1.msra.mxu0 0.0
  %3636 = vmatprep.subr.mxu0 0.0
  %3637 = vmatpush1.msra.mxu0 0.0
  %3638 = vmatprep.subr.mxu0 0.0
  %3639 = vmatpush1.msra.mxu0 0.0
  %3640 = vmatprep.subr.mxu0 0.0
  %3641 = vmatpush1.msra.mxu0 0.0
  %3642 = vmatprep.subr.mxu0 0.0
  %3643 = vmatpush1.msra.mxu0 0.0
  %3644 = vmatprep.subr.mxu0 0.0
  %3645 = vmatpush1.msra.mxu0 0.0
  %3646 = vmatprep.subr.mxu0 0.0
  %3647 = vmatpush1.msra.mxu0 0.0
  %3648 = vmatprep.subr.mxu0 0.0
  %3649 = vmatpush1.msra.mxu0 0.0
  %3650 = vmatprep.subr.mxu0 0.0
  %3651 = vmatpush1.msra.mxu0 0.0
  %3652 = vmatprep.subr.mxu0 0.0
  %3653 = vmatpush1.msra.mxu0 0.0
  %3654 = vmatprep.subr.mxu0 0.0
  %3655 = vmatpush1.msra.mxu0 0.0
  %3656 = vmatprep.subr.mxu0 0.0
  %3657 = vmatpush1.msra.mxu0 0.0
  %3658 = vmatprep.subr.mxu0 0.0
  %3659 = vmatpush1.msra.mxu0 0.0
  %3660 = vmatprep.subr.mxu0 0.0
  %3661 = vmatpush1.msra.mxu0 0.0
  %3662 = vmatprep.subr.mxu0 0.0
  %3663 = vmatpush1.msra.mxu0 0.0
  %3664 = vmatprep.subr.mxu0 0.0
  %3665 = vmatpush1.msra.mxu0 0.0
  %3666 = vmatprep.subr.mxu0 0.0
  %3667 = vmatpush1.msra.mxu0 0.0
  %3668 = vmatprep.subr.mxu0 0.0
  %3669 = vmatpush1.msra.mxu0 0.0
  %3670 = vmatprep.subr.mxu0 0.0
  %3671 = vmatpush1.msra.mxu0 0.0
  %3672 = vmatprep.subr.mxu0 0.0
  %3673 = vmatpush1.msra.mxu0 0.0
  %3674 = vmatprep.subr.mxu0 0.0
  %3675 = vmatpush1.msra.mxu0 0.0
  %3676 = vmatprep.subr.mxu0 0.0
  %3677 = vmatpush1.msra.mxu0 0.0
  %3678 = vmatprep.subr.mxu0 0.0
  %3679 = vmatpush1.msra.mxu0 0.0
  %3680 = vmatprep.mubr.f32.mxu0 0.0
  %3681 = vmatmul.mubr.f32.gmra.mrb[0].mxu0 %v3611
  %v3682 = vpop.f32.mrb[0].mxu0
  %v3683 = vadd.f32 0.0, %v3682
  %v3684 = vpop.f32.mrb[0].mxu0
  %3685 = vmatprep.mubr.f32.mxu0 0.0
  %3686 = vmatmul.mubr.f32.gmra.mrb[0].mxu0 %v3614
  %v3687 = vpop.f32.mrb[0].mxu0
  %v3688 = vadd.f32 0.0, %v3687
  %v3689 = vpop.f32.mrb[0].mxu0
  %3690 = vdwg.mxu0
  %3693 = vrot.lane.b32.xlu0 %v3683, 24
  %v3694 = vpop.permute.xlu0 %3693
  %3695 = vrot.lane.b32.xlu0 %v3688, 24
  %v3696 = vpop.permute.xlu0 %3695
  %vm3699 = vcmask 228544
  %3700 = vst.msk [vmem:[#allocation3] sm:$0xff] %vm3699, %v3694
  %3701 = vst.msk [vmem:[#allocation3 + $0x8] sm:$0xff] %vm3699, %v3696
  %3702 = vrot.lane.b32.xlu0 %v2071, 100
  %v3703 = vpop.permute.xlu0 %3702
  %3704 = vrot.lane.b32.xlu0 %v2076, 100
  %v3705 = vpop.permute.xlu0 %3704
  %v3706 = vsel %vm2153, %v3703, 0
  %v3708 = vsel %vm2153, %v3705, 0
  %3710 = vmatprep.subr.mxu0 0.0
  %3711 = vmatpush1.xpose.msra.mxu0 %v3706
  %3712 = vmatprep.subr.mxu0 0.0
  %3713 = vmatpush1.xpose.msra.mxu0 %v3708
  %3714 = vmatprep.subr.mxu0 0.0
  %3715 = vmatpush1.xpose.msra.mxu0 0.0
  %3716 = vmatprep.subr.mxu0 0.0
  %3717 = vmatpush1.xpose.msra.mxu0 0.0
  %3718 = vmatprep.subr.mxu0 0.0
  %3719 = vmatpush1.xpose.msra.mxu0 0.0
  %3720 = vmatprep.subr.mxu0 0.0
  %3721 = vmatpush1.xpose.msra.mxu0 0.0
  %3722 = vmatprep.subr.mxu0 0.0
  %3723 = vmatpush1.xpose.msra.mxu0 0.0
  %3724 = vmatprep.subr.mxu0 0.0
  %3725 = vmatpush1.xpose.msra.mxu0 0.0
  %3726 = vmatprep.subr.mxu0 0.0
  %3727 = vmatpush1.xpose.msra.mxu0 0.0
  %3728 = vmatprep.subr.mxu0 0.0
  %3729 = vmatpush1.xpose.msra.mxu0 0.0
  %3730 = vmatprep.subr.mxu0 0.0
  %3731 = vmatpush1.xpose.msra.mxu0 0.0
  %3732 = vmatprep.subr.mxu0 0.0
  %3733 = vmatpush1.xpose.msra.mxu0 0.0
  %3734 = vmatprep.subr.mxu0 0.0
  %3735 = vmatpush1.xpose.msra.mxu0 0.0
  %3736 = vmatprep.subr.mxu0 0.0
  %3737 = vmatpush1.xpose.msra.mxu0 0.0
  %3738 = vmatprep.subr.mxu0 0.0
  %3739 = vmatpush1.xpose.msra.mxu0 0.0
  %3740 = vmatprep.subr.mxu0 0.0
  %3741 = vmatpush1.xpose.msra.mxu0 0.0
  %3742 = vmatprep.subr.mxu0 0.0
  %3743 = vmatpush1.xpose.msra.mxu0 0.0
  %3744 = vmatprep.subr.mxu0 0.0
  %3745 = vmatpush1.xpose.msra.mxu0 0.0
  %3746 = vmatprep.subr.mxu0 0.0
  %3747 = vmatpush1.xpose.msra.mxu0 0.0
  %3748 = vmatprep.subr.mxu0 0.0
  %3749 = vmatpush1.xpose.msra.mxu0 0.0
  %3750 = vmatprep.subr.mxu0 0.0
  %3751 = vmatpush1.xpose.msra.mxu0 0.0
  %3752 = vmatprep.subr.mxu0 0.0
  %3753 = vmatpush1.xpose.msra.mxu0 0.0
  %3754 = vmatprep.subr.mxu0 0.0
  %3755 = vmatpush1.xpose.msra.mxu0 0.0
  %3756 = vmatprep.subr.mxu0 0.0
  %3757 = vmatpush1.xpose.msra.mxu0 0.0
  %3758 = vmatprep.subr.mxu0 0.0
  %3759 = vmatpush1.xpose.msra.mxu0 0.0
  %3760 = vmatprep.subr.mxu0 0.0
  %3761 = vmatpush1.xpose.msra.mxu0 0.0
  %3762 = vmatprep.subr.mxu0 0.0
  %3763 = vmatpush1.xpose.msra.mxu0 0.0
  %3764 = vmatprep.subr.mxu0 0.0
  %3765 = vmatpush1.xpose.msra.mxu0 0.0
  %3766 = vmatprep.subr.mxu0 0.0
  %3767 = vmatpush1.xpose.msra.mxu0 0.0
  %3768 = vmatprep.subr.mxu0 0.0
  %3769 = vmatpush1.xpose.msra.mxu0 0.0
  %3770 = vmatprep.subr.mxu0 0.0
  %3771 = vmatpush1.xpose.msra.mxu0 0.0
  %3772 = vmatprep.subr.mxu0 0.0
  %3773 = vmatpush1.xpose.msra.mxu0 0.0
  %3774 = vmatprep.mubr.f32.mxu0 0.0
  %3775 = vmatmul.mubr.f32.gmra.mrb[0].mxu0 %v3706
  %v3776 = vpop.f32.mrb[0].mxu0
  %v3777 = vadd.f32 0.0, %v3776
  %v3778 = vpop.f32.mrb[0].mxu0
  %3779 = vmatprep.mubr.f32.mxu0 0.0
  %3780 = vmatmul.mubr.f32.gmra.mrb[0].mxu0 %v3708
  %v3781 = vpop.f32.mrb[0].mxu0
  %v3782 = vadd.f32 0.0, %v3781
  %v3783 = vpop.f32.mrb[0].mxu0
  %3784 = vdwg.mxu0
  %v3785 = vmul.f32 %v3777, 0.5
  %v3786 = vmul.f32 %v3782, 0.5
  %v3787 = vtanh.pop %v3785
  %v3788 = vtanh.pop %v3786
  %v3789 = vmul.f32 %v3787, 0.5
  %v3790 = vmul.f32 %v3788, 0.5
  %v3791 = vadd.f32 %v3789, 0.5
  %v3792 = vadd.f32 %v3790, 0.5
  %3793 = vset.pattern.permute.xlu0 39
  %3794 = vperm.xlu0 %3793, %v2071
  %v3795 = vpop.permute.xlu0 %3794
  %3797 = vset.pattern.permute.xlu0 39
  %3798 = vperm.xlu0 %3797, %v2076
  %v3799 = vpop.permute.xlu0 %3798
  %v3801 = vlaneseq
  %v3802 = vshrl.u32 %v3801, 7
  %v3803 = vsub.s32 7, %v3802
  %v3804 = vrot.slane %v2150, %v3803
  %v3805 = vadd.f32 %v3795, %v3804
  %v3806 = vadd.f32 %v3799, %v3804
  %v3807 = vmul.f32 %v3805, %v3791
  %v3808 = vmul.f32 %v3806, %v3792
  %vm3809 = vcmp.ge.f32.partialorder %v3807, 0.0
  %vm3810 = vcmp.ge.f32.partialorder %v3808, 0.0
  %v3811 = vmul.f32 %v3807, 0.2
  %v3812 = vmul.f32 %v3808, 0.2
  %v3813 = vsel %vm3809, %v3807, %v3811
  %v3814 = vsel %vm3810, %v3808, %v3812
  %v3815 = vadd.f32 %v3813, %v32
  %v3816 = vadd.f32 %v3814, %v33
  %v3817 = vmul.f32 %v3815, 1.442695
  %v3818 = vpow.pop %v3817
  %v3819 = vmul.f32 %v3816, 1.442695
  %v3820 = vpow.pop %v3819
  %v3821 = vsel %vm38, %v3818, 0.0
  %3822 = vadd.xlane.f32.xlu0 %v3821
  %v3823 = vpop.xlane.xlu0 %3822
  %v3824 = vsel %vm38, %v3820, 0.0
  %3825 = vadd.xlane.f32.xlu0 %v3824
  %v3826 = vpop.xlane.xlu0 %3825
  %v3827 = vrcp.pop %v3823
  %v3828 = vmul.f32 %v3818, %v3827
  %v3829 = vrcp.pop %v3826
  %v3830 = vmul.f32 %v3820, %v3829
  %v3834 = vsel %vm38, %v3828, 0
  %v3837 = vsel %vm38, %v3830, 0
  %3839 = vmatprep.subr.mxu0 0.0
  %3840 = vmatpush1.msra.mxu0 %v3703
  %3841 = vmatprep.subr.mxu0 0.0
  %3842 = vmatpush1.msra.mxu0 %v3705
  %3843 = vmatprep.subr.mxu0 0.0
  %3844 = vmatpush1.msra.mxu0 0.0
  %3845 = vmatprep.subr.mxu0 0.0
  %3846 = vmatpush1.msra.mxu0 0.0
  %3847 = vmatprep.subr.mxu0 0.0
  %3848 = vmatpush1.msra.mxu0 0.0
  %3849 = vmatprep.subr.mxu0 0.0
  %3850 = vmatpush1.msra.mxu0 0.0
  %3851 = vmatprep.subr.mxu0 0.0
  %3852 = vmatpush1.msra.mxu0 0.0
  %3853 = vmatprep.subr.mxu0 0.0
  %3854 = vmatpush1.msra.mxu0 0.0
  %3855 = vmatprep.subr.mxu0 0.0
  %3856 = vmatpush1.msra.mxu0 0.0
  %3857 = vmatprep.subr.mxu0 0.0
  %3858 = vmatpush1.msra.mxu0 0.0
  %3859 = vmatprep.subr.mxu0 0.0
  %3860 = vmatpush1.msra.mxu0 0.0
  %3861 = vmatprep.subr.mxu0 0.0
  %3862 = vmatpush1.msra.mxu0 0.0
  %3863 = vmatprep.subr.mxu0 0.0
  %3864 = vmatpush1.msra.mxu0 0.0
  %3865 = vmatprep.subr.mxu0 0.0
  %3866 = vmatpush1.msra.mxu0 0.0
  %3867 = vmatprep.subr.mxu0 0.0
  %3868 = vmatpush1.msra.mxu0 0.0
  %3869 = vmatprep.subr.mxu0 0.0
  %3870 = vmatpush1.msra.mxu0 0.0
  %3871 = vmatprep.subr.mxu0 0.0
  %3872 = vmatpush1.msra.mxu0 0.0
  %3873 = vmatprep.subr.mxu0 0.0
  %3874 = vmatpush1.msra.mxu0 0.0
  %3875 = vmatprep.subr.mxu0 0.0
  %3876 = vmatpush1.msra.mxu0 0.0
  %3877 = vmatprep.subr.mxu0 0.0
  %3878 = vmatpush1.msra.mxu0 0.0
  %3879 = vmatprep.subr.mxu0 0.0
  %3880 = vmatpush1.msra.mxu0 0.0
  %3881 = vmatprep.subr.mxu0 0.0
  %3882 = vmatpush1.msra.mxu0 0.0
  %3883 = vmatprep.subr.mxu0 0.0
  %3884 = vmatpush1.msra.mxu0 0.0
  %3885 = vmatprep.subr.mxu0 0.0
  %3886 = vmatpush1.msra.mxu0 0.0
  %3887 = vmatprep.subr.mxu0 0.0
  %3888 = vmatpush1.msra.mxu0 0.0
  %3889 = vmatprep.subr.mxu0 0.0
  %3890 = vmatpush1.msra.mxu0 0.0
  %3891 = vmatprep.subr.mxu0 0.0
  %3892 = vmatpush1.msra.mxu0 0.0
  %3893 = vmatprep.subr.mxu0 0.0
  %3894 = vmatpush1.msra.mxu0 0.0
  %3895 = vmatprep.subr.mxu0 0.0
  %3896 = vmatpush1.msra.mxu0 0.0
  %3897 = vmatprep.subr.mxu0 0.0
  %3898 = vmatpush1.msra.mxu0 0.0
  %3899 = vmatprep.subr.mxu0 0.0
  %3900 = vmatpush1.msra.mxu0 0.0
  %3901 = vmatprep.subr.mxu0 0.0
  %3902 = vmatpush1.msra.mxu0 0.0
  %3903 = vmatprep.mubr.f32.mxu0 0.0
  %3904 = vmatmul.mubr.f32.gmra.mrb[0].mxu0 %v3834
  %v3905 = vpop.f32.mrb[0].mxu0
  %v3906 = vadd.f32 0.0, %v3905
  %v3907 = vpop.f32.mrb[0].mxu0
  %3908 = vmatprep.mubr.f32.mxu0 0.0
  %3909 = vmatmul.mubr.f32.gmra.mrb[0].mxu0 %v3837
  %v3910 = vpop.f32.mrb[0].mxu0
  %v3911 = vadd.f32 0.0, %v3910
  %v3912 = vpop.f32.mrb[0].mxu0
  %3913 = vdwg.mxu0
  %3916 = vrot.lane.b32.xlu0 %v3906, 28
  %v3917 = vpop.permute.xlu0 %3916
  %3918 = vrot.lane.b32.xlu0 %v3911, 28
  %v3919 = vpop.permute.xlu0 %3918
  %vm3922 = vcmask 261344
  %3923 = vst.msk [vmem:[#allocation3] sm:$0xff] %vm3922, %v3917
  %3924 = vst.msk [vmem:[#allocation3 + $0x8] sm:$0xff] %vm3922, %v3919
  %v3925 = vld [vmem:[#allocation3] sm:$0xff]
  %v3926 = vld [vmem:[#allocation3 + $0x8] sm:$0xff]
  %v3927 = vld [vmem:[%s8] sm:$0xff]
  %v3928 = vld [vmem:[%s8 + $0x8] sm:$0xff]
  %v3929 = vld [vmem:[%s8 + $0x10] sm:$0xff]
  %v3930 = vld [vmem:[%s8 + $0x18] sm:$0xff]
  %v3931 = vld [vmem:[%s7] sm:$0x1]
  %v3933 = vlaneseq
  %v3934 = vshrl.u32 %v3933, 7
  %v3935 = vsub.s32 0, %v3934
  %v3936 = vrot.slane %v3931, %v3935
  %vm3938 = vcmask 261120
  %v3940 = vsel %vm3938, %v3925, 0
  %v3943 = vsel %vm3938, %v3926, 0
  %3945 = vmatprep.subr.mxu0 0.0
  %3946 = vmatpush1.msra.mxu0 %v3927
  %3947 = vmatprep.subr.mxu0 0.0
  %3948 = vmatpush1.msra.mxu0 %v3928
  %3949 = vmatprep.subr.mxu0 0.0
  %3950 = vmatpush1.msra.mxu0 %v3929
  %3951 = vmatprep.subr.mxu0 0.0
  %3952 = vmatpush1.msra.mxu0 %v3930
  %3953 = vmatprep.subr.mxu0 0.0
  %3954 = vmatpush1.msra.mxu0 0.0
  %3955 = vmatprep.subr.mxu0 0.0
  %3956 = vmatpush1.msra.mxu0 0.0
  %3957 = vmatprep.subr.mxu0 0.0
  %3958 = vmatpush1.msra.mxu0 0.0
  %3959 = vmatprep.subr.mxu0 0.0
  %3960 = vmatpush1.msra.mxu0 0.0
  %3961 = vmatprep.subr.mxu0 0.0
  %3962 = vmatpush1.msra.mxu0 0.0
  %3963 = vmatprep.subr.mxu0 0.0
  %3964 = vmatpush1.msra.mxu0 0.0
  %3965 = vmatprep.subr.mxu0 0.0
  %3966 = vmatpush1.msra.mxu0 0.0
  %3967 = vmatprep.subr.mxu0 0.0
  %3968 = vmatpush1.msra.mxu0 0.0
  %3969 = vmatprep.subr.mxu0 0.0
  %3970 = vmatpush1.msra.mxu0 0.0
  %3971 = vmatprep.subr.mxu0 0.0
  %3972 = vmatpush1.msra.mxu0 0.0
  %3973 = vmatprep.subr.mxu0 0.0
  %3974 = vmatpush1.msra.mxu0 0.0
  %3975 = vmatprep.subr.mxu0 0.0
  %3976 = vmatpush1.msra.mxu0 0.0
  %3977 = vmatprep.subr.mxu0 0.0
  %3978 = vmatpush1.msra.mxu0 0.0
  %3979 = vmatprep.subr.mxu0 0.0
  %3980 = vmatpush1.msra.mxu0 0.0
  %3981 = vmatprep.subr.mxu0 0.0
  %3982 = vmatpush1.msra.mxu0 0.0
  %3983 = vmatprep.subr.mxu0 0.0
  %3984 = vmatpush1.msra.mxu0 0.0
  %3985 = vmatprep.subr.mxu0 0.0
  %3986 = vmatpush1.msra.mxu0 0.0
  %3987 = vmatprep.subr.mxu0 0.0
  %3988 = vmatpush1.msra.mxu0 0.0
  %3989 = vmatprep.subr.mxu0 0.0
  %3990 = vmatpush1.msra.mxu0 0.0
  %3991 = vmatprep.subr.mxu0 0.0
  %3992 = vmatpush1.msra.mxu0 0.0
  %3993 = vmatprep.subr.mxu0 0.0
  %3994 = vmatpush1.msra.mxu0 0.0
  %3995 = vmatprep.subr.mxu0 0.0
  %3996 = vmatpush1.msra.mxu0 0.0
  %3997 = vmatprep.subr.mxu0 0.0
  %3998 = vmatpush1.msra.mxu0 0.0
  %3999 = vmatprep.subr.mxu0 0.0
  %4000 = vmatpush1.msra.mxu0 0.0
  %4001 = vmatprep.subr.mxu0 0.0
  %4002 = vmatpush1.msra.mxu0 0.0
  %4003 = vmatprep.subr.mxu0 0.0
  %4004 = vmatpush1.msra.mxu0 0.0
  %4005 = vmatprep.subr.mxu0 0.0
  %4006 = vmatpush1.msra.mxu0 0.0
  %4007 = vmatprep.subr.mxu0 0.0
  %4008 = vmatpush1.msra.mxu0 0.0
  %4009 = vmatprep.mubr.f32.mxu0 0.0
  %4010 = vmatmul.mubr.f32.gmra.mrb[0].mxu0 %v3940
  %v4011 = vpop.f32.mrb[0].mxu0
  %v4012 = vadd.f32 %v3936, %v4011
  %v4013 = vpop.f32.mrb[0].mxu0
  %4014 = vmatprep.mubr.f32.mxu0 0.0
  %4015 = vmatmul.mubr.f32.gmra.mrb[0].mxu0 %v3943
  %v4016 = vpop.f32.mrb[0].mxu0
  %v4017 = vadd.f32 %v3936, %v4016
  %v4018 = vpop.f32.mrb[0].mxu0
  %4019 = vdwg.mxu0
  %v4020 = vsel %vm2153, %v4012, -inf
  %4021 = vmax.xlane.f32.xlu0 %v4020
  %v4022 = vpop.xlane.xlu0 %4021
  %v4023 = vsel %vm2153, %v4017, -inf
  %4024 = vmax.xlane.f32.xlu0 %v4023
  %v4025 = vpop.xlane.xlu0 %4024
  %v4026 = vsub.f32 %v4012, %v4022
  %v4027 = vsub.f32 %v4017, %v4025
  %v4028 = vmul.f32 %v4026, 1.442695
  %v4029 = vpow.pop %v4028
  %v4030 = vmul.f32 %v4027, 1.442695
  %v4031 = vpow.pop %v4030
  %v4032 = vsel %vm2153, %v4029, 0.0
  %4033 = vadd.xlane.f32.xlu0 %v4032
  %v4034 = vpop.xlane.xlu0 %4033
  %v4035 = vsel %vm2153, %v4031, 0.0
  %4036 = vadd.xlane.f32.xlu0 %v4035
  %v4037 = vpop.xlane.xlu0 %4036
  %v4038 = vlog2.pop %v4034
  %v4039 = vmul.f32 %v4038, 0.6931472
  %v4040 = vlog2.pop %v4037
  %v4041 = vmul.f32 %v4040, 0.6931472
  %v4042 = vsub.f32 %v4026, %v4039
  %v4043 = vsub.f32 %v4027, %v4041
  %4044 = vst.msk [vmem:[%s9] sm:$0xff] %vm2153, %v4042
  %4045 = vst.msk [vmem:[%s9 + $0x8] sm:$0xff] %vm2153, %v4043
  // Predicated region
  $region38: #{tpu_custom_call.1} parent=0 // pred_check
    _
  $region39: #{tpu_custom_call.1} parent=0 // pred_check_branch
    %4047 = sbr.rel (0) target = $region41
  $region40: #{tpu_custom_call.1} parent=0 // pred_region
    _
  $region41: #{tpu_custom_call.1} parent=0 // pred_fallthru
    _
  // Predicated region
  $region42: #{tpu_custom_call.1} parent=0 // pred_check
    _
  $region43: #{tpu_custom_call.1} parent=0 // pred_check_branch
    %4049 = sbr.rel (0) target = $region45
  $region44: #{tpu_custom_call.1} parent=0 // pred_region
    _
  $region45: #{tpu_custom_call.1} parent=0 // pred_fallthru
    _

</llo_original>
